<compile_context>
chip_gen: v7x
topology: tpu7x:2x2x1
jax: 0.10.0
libtpu: 0.0.40
codegen_flags: <defaults>
</compile_context>

<pallas_src>
import functools
import math

import jax
import jax.numpy as jnp
from jax.experimental import pallas as pl
from jax.experimental.pallas import tpu as pltpu


# ---------------------------- Pallas kernel ----------------------------

def trigger_kernel(idx_ref,          # SMEM scalar prefetch: (1,) i32 (index_maps only)
                   emb_ref,          # [1, 1, E]                 f32 (gathered row)
                   w1_ref, b1_ref,   # [E, Hp], [1, Hp]          f32
                   wh_ref, bh_ref,   # [nh, Hp, Hp], [nh, 1, Hp] f32
                   wg_ref, bg_ref,   # [Hp, tile_n] bf16, [1, tile_n] f32
                   out_ref,          # [1, tile_n]               f32
                   *, n_hidden, chunk_n):
    del idx_ref  # consumed only by the BlockSpec index_maps

    e = emb_ref[0]                                             # (1, E)

    # Tiny MLP: Linear(E->H) then n_hidden x (ReLU, Linear(H->H)).
    # Recomputed per tile (see header) -- at grid=2 this is 2x a tiny chain.
    h = jnp.dot(e, w1_ref[...], preferred_element_type=jnp.float32) + b1_ref[...]
    for i in range(n_hidden):                                  # static unroll
        h = jnp.maximum(h, 0.0)
        h = jnp.dot(h, wh_ref[i], preferred_element_type=jnp.float32) + bh_ref[i]
    hb = h.astype(jnp.bfloat16)

    # netG tile: bf16 MXU matmul, f32 accumulate, f32 bias + tanh epilogue,
    # chunked so the (1, chunk_n) f32 live value stays vreg-bounded.
    tile_n = out_ref.shape[-1]
    for c in range(tile_n // chunk_n):                         # static unroll
        lo, hi = c * chunk_n, (c + 1) * chunk_n
        z = jnp.dot(hb, wg_ref[:, lo:hi],
                    preferred_element_type=jnp.float32) + bg_ref[:, lo:hi]
        out_ref[:, lo:hi] = jnp.tanh(z)


# ---------------------------- params / init ----------------------------

def _round_up(x, m):
    return (x + m - 1) // m * m


def kaiming_uniform(key, shape, fan_in):
    # weights_init_uniform -> nn.init.kaiming_uniform_ with defaults
    # (a=0, nonlinearity='leaky_relu'): bound = sqrt(2) * sqrt(3/fan_in)
    #                                          = sqrt(6 / fan_in)
    bound = math.sqrt(6.0 / fan_in)
    return jax.random.uniform(key, shape, jnp.float32, -bound, bound)


def init_params(key, n_nodes, embedding_dim, out_dim=64, hidden_dim=100,
                n_hidden=3):
    E, H = embedding_dim, hidden_dim
    Hp = _round_up(H, 128)                 # lane/contraction alignment
    n_out = out_dim * out_dim * 3          # 12288 for out_dim=64

    keys = jax.random.split(key, 3 + n_hidden)
    k_emb, k_w1, k_g = keys[0], keys[1], keys[2]
    k_h = keys[3:]

    # nn.Embedding default init: N(0, 1)  (not touched by weights_init_uniform)
    emb = jax.random.normal(k_emb, (n_nodes, E), jnp.float32)

    # Linear weights stored pre-transposed as [in, out] (MXU-friendly),
    # zero-padded H -> Hp (exact: zero rows/cols + zero biases + ReLU keep the
    # padded lanes at zero).  Biases are zero per weights_init_uniform.
    w1 = kaiming_uniform(k_w1, (H, E), E)                      # torch [out, in]
    w1p = jnp.zeros((E, Hp), jnp.float32).at[:, :H].set(w1.T)
    b1p = jnp.zeros((1, Hp), jnp.float32)

    wh_list = []
    for i in range(n_hidden):
        wi = kaiming_uniform(k_h[i], (H, H), H)
        wh_list.append(jnp.zeros((Hp, Hp), jnp.float32).at[:H, :H].set(wi.T))
    whp = jnp.stack(wh_list)                                   # [nh, Hp, Hp]
    bhp = jnp.zeros((n_hidden, 1, Hp), jnp.float32)

    wg = kaiming_uniform(k_g, (n_out, H), H)
    wgp = (jnp.zeros((Hp, n_out), jnp.float32)
           .at[:H, :].set(wg.T)).astype(jnp.bfloat16)          # bf16 weight stream
    bgp = jnp.zeros((1, n_out), jnp.float32)

    return dict(emb=emb, w1=w1p, b1=b1p, wh=whp, bh=bhp, wg=wgp, bg=bgp)


# ---------------------------- forward ----------------------------

def _choose_tile_n(n_out, max_lanes=8192):
    """Pick an N tile: prefer exactly 2 tiles (pairs with v7x's 2 TCs), else the
    largest 128-multiple divisor of n_out within the lane budget."""
    half = n_out // 2
    if n_out % 2 == 0 and half % 128 == 0 and half <= max_lanes:
        return half
    best = n_out                           # last-resort single tile
    for t in range(128, min(n_out, max_lanes) + 1, 128):
        if n_out % t == 0:
            best = t
    return best


def trigger_hyper_forward(params, idx):
    emb, w1, b1 = params["emb"], params["w1"], params["b1"]
    wh, bh = params["wh"], params["bh"]
    wg, bg = params["wg"], params["bg"]

    n_hidden = wh.shape[0]
    n_nodes, e_dim = emb.shape
    hp = w1.shape[1]
    n_out = wg.shape[1]
    out_dim = int(round(math.sqrt(n_out // 3)))

    tile_n = _choose_tile_n(n_out)                 # 6144 for out_dim=64
    grid_steps = n_out // tile_n                   # 2
    chunk_n = 3072 if (tile_n > 3072 and tile_n % 3072 == 0) else tile_n

    idx_arr = jnp.asarray(idx, jnp.int32).reshape(1)
    emb3 = emb.reshape(n_nodes, 1, e_dim)          # row gather via index_map

    # Deeper wg buffering only pays off when there are >2 tiles to pipeline.
    wg_spec_kwargs = {}
    if grid_steps > 2:
        wg_spec_kwargs["pipeline_mode"] = pl.Buffered(3)
    wg_spec = pl.BlockSpec((hp, tile_n), lambda n, ix: (0, n), **wg_spec_kwargs)

    cost = pl.CostEstimate(
        flops=2 * (grid_steps * (e_dim * hp + n_hidden * hp * hp) + hp * n_out),
        transcendentals=n_out,
        bytes_accessed=(e_dim * 4 + w1.size * 4 + b1.size * 4
                        + wh.size * 4 + bh.size * 4
                        + wg.size * wg.dtype.itemsize + bg.size * 4
                        + n_out * 4),
    )

    out = pl.pallas_call(
        functools.partial(trigger_kernel, n_hidden=n_hidden, chunk_n=chunk_n),
        grid_spec=pltpu.PrefetchScalarGridSpec(
            num_scalar_prefetch=1,
            grid=(grid_steps,),
            in_specs=[
                # gathered embedding row: block index = prefetched node id
                pl.BlockSpec((1, 1, e_dim), lambda n, ix: (ix[0], 0, 0)),
                pl.BlockSpec((e_dim, hp), lambda n, ix: (0, 0)),
                pl.BlockSpec((1, hp), lambda n, ix: (0, 0)),
                pl.BlockSpec((n_hidden, hp, hp), lambda n, ix: (0, 0, 0)),
                pl.BlockSpec((n_hidden, 1, hp), lambda n, ix: (0, 0, 0)),
                wg_spec,
                pl.BlockSpec((1, tile_n), lambda n, ix: (0, n)),
            ],
            out_specs=pl.BlockSpec((1, tile_n), lambda n, ix: (0, n)),
        ),
        out_shape=jax.ShapeDtypeStruct((1, n_out), jnp.float32),
        compiler_params=pltpu.CompilerParams(
            dimension_semantics=("parallel",)),
        cost_estimate=cost,
    )(idx_arr, emb3, w1, b1, wh, bh, wg, bg)

    # torch: tanh(netG(features)).view(3, 64, 64)  (row-major == reshape)
    return out.reshape(3, out_dim, out_dim)


# ---------------------------- pure-JAX reference ----------------------------

def trigger_hyper_reference(params, idx):
    """f32 reference of the same (padded) math, for a tolerance check."""
    e = params["emb"][jnp.asarray(idx, jnp.int32)][None, :]          # (1, E)
    h = e @ params["w1"] + params["b1"]
    for i in range(params["wh"].shape[0]):
        h = jnp.maximum(h, 0.0)
        h = h @ params["wh"][i] + params["bh"][i]
    z = h @ params["wg"].astype(jnp.float32) + params["bg"]
    n_out = z.shape[-1]
    out_dim = int(round(math.sqrt(n_out // 3)))
    return jnp.tanh(z).reshape(3, out_dim, out_dim)


# ---------------------------- demo ----------------------------

if __name__ == "__main__":
    key = jax.random.PRNGKey(0)
    params = init_params(key, n_nodes=16, embedding_dim=32,
                         out_dim=64, hidden_dim=100, n_hidden=3)

    idx = jnp.array(3, jnp.int32)   # single node id (module's forward takes one idx)

    fwd = jax.jit(trigger_hyper_forward)
    trigger = fwd(params, idx)
    jax.block_until_ready(trigger)

    assert trigger.shape == (3, 64, 64)
    assert bool(jnp.all(jnp.isfinite(trigger)))
    assert bool(jnp.all(jnp.abs(trigger) <= 1.0))   # tanh output range

    ref = trigger_hyper_reference(params, idx)
    max_err = float(jnp.max(jnp.abs(trigger - ref)))
    assert max_err < 3e-2, max_err                  # bf16 wg / bf16 h tolerance

    print("KERNEL_OK")
</pallas_src>

<mosaic_0001>
module attributes {stable_mosaic.version = 11 : i64} {
  func.func @trigger_kernel(%arg0: i32, %arg1: memref<1xi32, #tpu.memory_space<smem>>, %arg2: memref<1x1x32xf32, #tpu.memory_space<vmem>>, %arg3: memref<32x128xf32, #tpu.memory_space<vmem>>, %arg4: memref<1x128xf32, #tpu.memory_space<vmem>>, %arg5: memref<3x128x128xf32, #tpu.memory_space<vmem>>, %arg6: memref<3x1x128xf32, #tpu.memory_space<vmem>>, %arg7: memref<128x6144xbf16, #tpu.memory_space<vmem>>, %arg8: memref<1x6144xf32, #tpu.memory_space<vmem>>, %arg9: memref<1x6144xf32, #tpu.memory_space<vmem>>) attributes {dimension_semantics = [#tpu.dimension_semantics<parallel>], iteration_bounds = array<i64: 2>, scalar_prefetch = 1 : i64, scratch_operands = 0 : i64, tpu.core_type = #tpu.core_type<tc>, window_params = [{transform_indices = @transform_0, window_bounds = array<i64: 1, 1, 32>}, {pipeline_mode = #tpu.pipeline_mode<synchronous>, transform_indices = @transform_1, window_bounds = array<i64: 32, 128>}, {pipeline_mode = #tpu.pipeline_mode<synchronous>, transform_indices = @transform_2, window_bounds = array<i64: 1, 128>}, {pipeline_mode = #tpu.pipeline_mode<synchronous>, transform_indices = @transform_3, window_bounds = array<i64: 3, 128, 128>}, {pipeline_mode = #tpu.pipeline_mode<synchronous>, transform_indices = @transform_4, window_bounds = array<i64: 3, 1, 128>}, {transform_indices = @transform_5, window_bounds = array<i64: 128, 6144>}, {transform_indices = @transform_6, window_bounds = array<i64: 1, 6144>}, {transform_indices = @transform_7, window_bounds = array<i64: 1, 6144>}]} {
    %c0 = arith.constant 0 : index
    %c0_0 = arith.constant 0 : index
    %c0_1 = arith.constant 0 : index
    %0 = vector.load %arg2[%c0, %c0_0, %c0_1] : memref<1x1x32xf32, #tpu.memory_space<vmem>>, vector<1x1x32xf32>
    %1 = vector.shape_cast %0 : vector<1x1x32xf32> to vector<1x32xf32>
    %c0_2 = arith.constant 0 : index
    %c0_3 = arith.constant 0 : index
    %2 = vector.load %arg3[%c0_2, %c0_3] : memref<32x128xf32, #tpu.memory_space<vmem>>, vector<32x128xf32>
    %cst = arith.constant dense<0.000000e+00> : vector<1x128xf32>
    %3 = tpu.matmul %1, %2, %cst {dimension_numbers = #tpu.dot_dimension_numbers<[1], [0], [0], [1], [0, 0, 1, 1], [], []>} : vector<1x32xf32>, vector<32x128xf32>, vector<1x128xf32> -> vector<1x128xf32>
    %c0_4 = arith.constant 0 : index
    %c0_5 = arith.constant 0 : index
    %4 = vector.load %arg4[%c0_4, %c0_5] : memref<1x128xf32, #tpu.memory_space<vmem>>, vector<1x128xf32>
    %5 = arith.addf %3, %4 : vector<1x128xf32>
    %cst_6 = arith.constant 0.000000e+00 : f32
    %6 = vector.broadcast %cst_6 : f32 to vector<1x128xf32>
    %7 = arith.maximumf %5, %6 : vector<1x128xf32>
    %c0_7 = arith.constant 0 : index
    %c0_8 = arith.constant 0 : index
    %c0_9 = arith.constant 0 : index
    %8 = vector.load %arg5[%c0_7, %c0_8, %c0_9] : memref<3x128x128xf32, #tpu.memory_space<vmem>>, vector<1x128x128xf32>
    %9 = vector.shape_cast %8 : vector<1x128x128xf32> to vector<128x128xf32>
    %cst_10 = arith.constant dense<0.000000e+00> : vector<1x128xf32>
    %10 = tpu.matmul %7, %9, %cst_10 {dimension_numbers = #tpu.dot_dimension_numbers<[1], [0], [0], [1], [0, 0, 1, 1], [], []>} : vector<1x128xf32>, vector<128x128xf32>, vector<1x128xf32> -> vector<1x128xf32>
    %c0_11 = arith.constant 0 : index
    %c0_12 = arith.constant 0 : index
    %c0_13 = arith.constant 0 : index
    %11 = vector.load %arg6[%c0_11, %c0_12, %c0_13] : memref<3x1x128xf32, #tpu.memory_space<vmem>>, vector<1x1x128xf32>
    %12 = vector.shape_cast %11 : vector<1x1x128xf32> to vector<1x128xf32>
    %13 = arith.addf %10, %12 : vector<1x128xf32>
    %cst_14 = arith.constant 0.000000e+00 : f32
    %14 = vector.broadcast %cst_14 : f32 to vector<1x128xf32>
    %15 = arith.maximumf %13, %14 : vector<1x128xf32>
    %c1 = arith.constant 1 : index
    %c0_15 = arith.constant 0 : index
    %c0_16 = arith.constant 0 : index
    %16 = vector.load %arg5[%c1, %c0_15, %c0_16] : memref<3x128x128xf32, #tpu.memory_space<vmem>>, vector<1x128x128xf32>
    %17 = vector.shape_cast %16 : vector<1x128x128xf32> to vector<128x128xf32>
    %cst_17 = arith.constant dense<0.000000e+00> : vector<1x128xf32>
    %18 = tpu.matmul %15, %17, %cst_17 {dimension_numbers = #tpu.dot_dimension_numbers<[1], [0], [0], [1], [0, 0, 1, 1], [], []>} : vector<1x128xf32>, vector<128x128xf32>, vector<1x128xf32> -> vector<1x128xf32>
    %c1_18 = arith.constant 1 : index
    %c0_19 = arith.constant 0 : index
    %c0_20 = arith.constant 0 : index
    %19 = vector.load %arg6[%c1_18, %c0_19, %c0_20] : memref<3x1x128xf32, #tpu.memory_space<vmem>>, vector<1x1x128xf32>
    %20 = vector.shape_cast %19 : vector<1x1x128xf32> to vector<1x128xf32>
    %21 = arith.addf %18, %20 : vector<1x128xf32>
    %cst_21 = arith.constant 0.000000e+00 : f32
    %22 = vector.broadcast %cst_21 : f32 to vector<1x128xf32>
    %23 = arith.maximumf %21, %22 : vector<1x128xf32>
    %c2 = arith.constant 2 : index
    %c0_22 = arith.constant 0 : index
    %c0_23 = arith.constant 0 : index
    %24 = vector.load %arg5[%c2, %c0_22, %c0_23] : memref<3x128x128xf32, #tpu.memory_space<vmem>>, vector<1x128x128xf32>
    %25 = vector.shape_cast %24 : vector<1x128x128xf32> to vector<128x128xf32>
    %cst_24 = arith.constant dense<0.000000e+00> : vector<1x128xf32>
    %26 = tpu.matmul %23, %25, %cst_24 {dimension_numbers = #tpu.dot_dimension_numbers<[1], [0], [0], [1], [0, 0, 1, 1], [], []>} : vector<1x128xf32>, vector<128x128xf32>, vector<1x128xf32> -> vector<1x128xf32>
    %c2_25 = arith.constant 2 : index
    %c0_26 = arith.constant 0 : index
    %c0_27 = arith.constant 0 : index
    %27 = vector.load %arg6[%c2_25, %c0_26, %c0_27] : memref<3x1x128xf32, #tpu.memory_space<vmem>>, vector<1x1x128xf32>
    %28 = vector.shape_cast %27 : vector<1x1x128xf32> to vector<1x128xf32>
    %29 = arith.addf %26, %28 : vector<1x128xf32>
    %30 = arith.truncf %29 : vector<1x128xf32> to vector<1x128xbf16>
    %c0_28 = arith.constant 0 : index
    %c0_29 = arith.constant 0 : index
    %31 = vector.load %arg7[%c0_28, %c0_29] : memref<128x6144xbf16, #tpu.memory_space<vmem>>, vector<128x3072xbf16>
    %cst_30 = arith.constant dense<0.000000e+00> : vector<1x3072xf32>
    %32 = tpu.matmul %30, %31, %cst_30 {dimension_numbers = #tpu.dot_dimension_numbers<[1], [0], [0], [1], [0, 0, 1, 1], [], []>} : vector<1x128xbf16>, vector<128x3072xbf16>, vector<1x3072xf32> -> vector<1x3072xf32>
    %c0_31 = arith.constant 0 : index
    %c0_32 = arith.constant 0 : index
    %33 = vector.load %arg8[%c0_31, %c0_32] : memref<1x6144xf32, #tpu.memory_space<vmem>>, vector<1x3072xf32>
    %34 = arith.addf %32, %33 : vector<1x3072xf32>
    %35 = math.tanh %34 : vector<1x3072xf32>
    %c0_33 = arith.constant 0 : index
    %c0_34 = arith.constant 0 : index
    %36 = vector.load %arg9[%c0_33, %c0_34] : memref<1x6144xf32, #tpu.memory_space<vmem>>, vector<1x3072xf32>
    tpu.vector_store %arg9[%c0_33, %c0_34], %35 {strides = array<i32>} : memref<1x6144xf32, #tpu.memory_space<vmem>>, vector<1x3072xf32>,
    %c0_35 = arith.constant 0 : index
    %c3072 = arith.constant 3072 : index
    %37 = vector.load %arg7[%c0_35, %c3072] : memref<128x6144xbf16, #tpu.memory_space<vmem>>, vector<128x3072xbf16>
    %cst_36 = arith.constant dense<0.000000e+00> : vector<1x3072xf32>
    %38 = tpu.matmul %30, %37, %cst_36 {dimension_numbers = #tpu.dot_dimension_numbers<[1], [0], [0], [1], [0, 0, 1, 1], [], []>} : vector<1x128xbf16>, vector<128x3072xbf16>, vector<1x3072xf32> -> vector<1x3072xf32>
    %c0_37 = arith.constant 0 : index
    %c3072_38 = arith.constant 3072 : index
    %39 = vector.load %arg8[%c0_37, %c3072_38] : memref<1x6144xf32, #tpu.memory_space<vmem>>, vector<1x3072xf32>
    %40 = arith.addf %38, %39 : vector<1x3072xf32>
    %41 = math.tanh %40 : vector<1x3072xf32>
    %c0_39 = arith.constant 0 : index
    %c3072_40 = arith.constant 3072 : index
    %42 = vector.load %arg9[%c0_39, %c3072_40] : memref<1x6144xf32, #tpu.memory_space<vmem>>, vector<1x3072xf32>
    tpu.vector_store %arg9[%c0_39, %c3072_40], %41 {strides = array<i32>} : memref<1x6144xf32, #tpu.memory_space<vmem>>, vector<1x3072xf32>,
    return
  }
  func.func @transform_0(%arg0: i32, %arg1: memref<1xi32, #tpu.memory_space<smem>>) -> (i32, i32, i32) {
    %c0 = arith.constant 0 : index
    %0 = memref.load %arg1[%c0] : memref<1xi32, #tpu.memory_space<smem>>
    %c0_i32 = arith.constant 0 : i32
    %c0_i32_0 = arith.constant 0 : i32
    %c0_i32_1 = arith.constant 0 : i32
    return %0, %c0_i32, %c0_i32_0 : i32, i32, i32
  }
  func.func @transform_1(%arg0: i32, %arg1: memref<1xi32, #tpu.memory_space<smem>>) -> (i32, i32) {
    %c0_i32 = arith.constant 0 : i32
    %c0_i32_0 = arith.constant 0 : i32
    %c0_i32_1 = arith.constant 0 : i32
    return %c0_i32, %c0_i32_0 : i32, i32
  }
  func.func @transform_2(%arg0: i32, %arg1: memref<1xi32, #tpu.memory_space<smem>>) -> (i32, i32) {
    %c0_i32 = arith.constant 0 : i32
    %c0_i32_0 = arith.constant 0 : i32
    %c0_i32_1 = arith.constant 0 : i32
    return %c0_i32, %c0_i32_0 : i32, i32
  }
  func.func @transform_3(%arg0: i32, %arg1: memref<1xi32, #tpu.memory_space<smem>>) -> (i32, i32, i32) {
    %c0_i32 = arith.constant 0 : i32
    %c0_i32_0 = arith.constant 0 : i32
    %c0_i32_1 = arith.constant 0 : i32
    %c0_i32_2 = arith.constant 0 : i32
    return %c0_i32, %c0_i32_0, %c0_i32_1 : i32, i32, i32
  }
  func.func @transform_4(%arg0: i32, %arg1: memref<1xi32, #tpu.memory_space<smem>>) -> (i32, i32, i32) {
    %c0_i32 = arith.constant 0 : i32
    %c0_i32_0 = arith.constant 0 : i32
    %c0_i32_1 = arith.constant 0 : i32
    %c0_i32_2 = arith.constant 0 : i32
    return %c0_i32, %c0_i32_0, %c0_i32_1 : i32, i32, i32
  }
  func.func @transform_5(%arg0: i32, %arg1: memref<1xi32, #tpu.memory_space<smem>>) -> (i32, i32) {
    %c0_i32 = arith.constant 0 : i32
    %c0_i32_0 = arith.constant 0 : i32
    return %c0_i32, %arg0 : i32, i32
  }
  func.func @transform_6(%arg0: i32, %arg1: memref<1xi32, #tpu.memory_space<smem>>) -> (i32, i32) {
    %c0_i32 = arith.constant 0 : i32
    %c0_i32_0 = arith.constant 0 : i32
    return %c0_i32, %arg0 : i32, i32
  }
  func.func @transform_7(%arg0: i32, %arg1: memref<1xi32, #tpu.memory_space<smem>>) -> (i32, i32) {
    %c0_i32 = arith.constant 0 : i32
    %c0_i32_0 = arith.constant 0 : i32
    return %c0_i32, %arg0 : i32, i32
  }
}

</mosaic_0001>

<llo_original>
// kernel: trigger_hyper_forward.1
$region0: #{trigger_hyper_forward.1}
  #allocation0 [shape = 'u32[]', space=smem, size = 0x4, offset = 0x4, fixed_abs, tag = 'smem constant byte address 0x4 - core index']
  #allocation1 [shape = 'u32[144,128]{1,0:T(1,128)}', space=vmem, size = 0x12000, scoped, tag = 'internal scratch']
  #allocation2 [shape = 's32[1]{0}', space=sflag, size = 0x4, scoped, tag = 'scoped memory for trigger_hyper_forward.1']
  #allocation3 [shape = 's32[1]{0:T(128)S(6)}', space=smem, size = 0x200, scoped, tag = 'prefetched SMEM operand 0']
  %s0 = inlined_call_operand.<no memory space> [shape: s32[1], index: 0, kind: input, shape index: {}]
  %s1 = inlined_call_operand.hbm [shape: f32[16,1,32], index: 1, kind: input, shape index: {}]
  %s2 = inlined_call_operand.hbm [shape: f32[32,128], index: 2, kind: input, shape index: {}]
  %s3 = inlined_call_operand.hbm [shape: f32[1,128], index: 3, kind: input, shape index: {}]
  %s4 = inlined_call_operand.hbm [shape: f32[3,128,128], index: 4, kind: input, shape index: {}]
  %s5 = inlined_call_operand.hbm [shape: f32[3,1,128], index: 5, kind: input, shape index: {}]
  %s6 = inlined_call_operand.hbm [shape: bf16[128,12288], index: 6, kind: input, shape index: {}]
  %s7 = inlined_call_operand.hbm [shape: f32[1,12288], index: 7, kind: input, shape index: {}]
  %s8 = inlined_call_operand.vmem [shape: f32[1,12288], index: 8, kind: output, shape index: {}]
  %s9 = sld [smem:[#allocation0]]
  $region89: #{trigger_hyper_forward.1} parent=0
    _
  %s11 = ssub.s32 1, %s9
  %s12 = scalar_select 0, %s11, %s9
  %13 = sst [smem:[#allocation3]] %s0
  $region1: #{trigger_hyper_forward.1} parent=0
    #allocation4 [shape = 'u8[512]{0}', space=vmem, size = 0x400, scoped, tag = 'input window, operand 1, single buffered']
    #allocation5 [shape = 's32[2]{0}', space=sflag, size = 0x8, scoped, tag = 'scoped memory for trigger_hyper_forward.1']
    #allocation6 [shape = 'u8[16384]{0}', space=vmem, size = 0x4000, scoped, tag = 'input window, operand 2, single buffered']
    #allocation7 [shape = 's32[1]{0}', space=sflag, size = 0x4, scoped, tag = 'scoped memory for trigger_hyper_forward.1']
    #allocation8 [shape = 'u8[512]{0}', space=vmem, size = 0x400, scoped, tag = 'input window, operand 3, single buffered']
    #allocation9 [shape = 'u8[196608]{0}', space=vmem, size = 0x30000, scoped, tag = 'input window, operand 4, single buffered']
    #allocation10 [shape = 's32[1]{0}', space=sflag, size = 0x4, scoped, tag = 'scoped memory for trigger_hyper_forward.1']
    #allocation11 [shape = 'u8[1536]{0}', space=vmem, size = 0x800, scoped, tag = 'input window, operand 5, single buffered']
    #allocation12 [shape = 'u8[3145728]{0}', space=vmem, size = 0x300000, scoped, tag = 'input window, operand 6']
    #allocation13 [shape = 's32[2]{0}', space=sflag, size = 0x8, scoped, tag = 'scoped memory for trigger_hyper_forward.1']
    #allocation14 [shape = 'u8[49152]{0}', space=vmem, size = 0xc000, scoped, tag = 'input window, operand 7']
    %14 = vsyncpa [#allocation5], 0
    %15 = vsyncpa [#allocation7], 0
    %16 = vsyncpa [#allocation10], 0
    %17 = vsyncpa [#allocation13], 0
    %s18 = scalar_lea.sflag [#allocation13], 1
    %19 = vsyncpa %s18, 0
    loop: start=0, step=1, limit=4
    $region2: #{trigger_hyper_forward.1} parent=1 // loop_pre_header
      _
    $region3: #{trigger_hyper_forward.1} parent=1 // loop_header
      %s21 = sphi 0, %s25
      %p22 = scmp.ge.s32.totalorder %s21, 4
      %s33 = sphi 0, %s35
      %s36 = sphi 0, %s33
      %s37 = sphi 0, %s36
      %s53 = sphi 0, %s37
      %s57 = sphi 0, %s57
      %s59 = sphi 0, %s57
      %s60 = sphi 0, %s59
      %s74 = sphi 0, %s60
      %s78 = sphi 0, %s78
      %s80 = sphi 0, %s78
      %s81 = sphi 0, %s80
      %s95 = sphi 0, %s81
      %s99 = sphi 0, %s99
      %s101 = sphi 0, %s99
      %s102 = sphi 0, %s101
      %s116 = sphi 0, %s102
      %s120 = sphi 0, %s120
      %s122 = sphi 0, %s120
      %s123 = sphi 0, %s122
      %s137 = sphi 0, %s123
      %s143 = sphi 0, %s145
      %s146 = sphi 0, %s143
      %s147 = sphi 0, %s146
      %s163 = sphi 0, %s147
      %s169 = sphi 0, %s171
      %s172 = sphi 0, %s169
      %s173 = sphi 0, %s172
      %s189 = sphi 0, %s173
      %s195 = sphi 0, %s197
      %s198 = sphi 0, %s195
      %s199 = sphi 0, %s198
      %s215 = sphi 0, %s199
    $region4: #{trigger_hyper_forward.1} parent=1 // loop_header_branch
      %24 = sbr.rel (%p22) target = $region8
    $region5: #{trigger_hyper_forward.1} parent=1 // loop_body
      %s26 = ssub.s32 %s21, 1
      %s27 = ssub.s32 %s21, 2
      %s28 = sadd.s32 %s21, 1
      %s29 = sld [smem:[#allocation3]]
      %s30 = sld [smem:[#allocation3]]
      %s31 = ssub.s32 %s29, %s30
      %p32 = scmp.eq.s32.totalorder %s31, 0
      %s34 = sadd.s32 %s33, 1
      %s35 = scalar_select %p32, %s33, %s34
      %p38 = pneg %p32
      %p39 = scmp.eq.s32.totalorder %s21, 1
      %p40 = por %p38, %p39
      %p41 = scmp.ne.s32.totalorder %s33, %s36
      %p42 = scmp.eq.s32.totalorder %s21, 0
      %p43 = por %p41, %p42
      %p44 = scmp.ne.s32.totalorder %s33, %s36
      %p45 = scmp.eq.s32.totalorder %s26, 1
      %p46 = por %p44, %p45
      %p47 = scmp.ne.s32.totalorder %s36, %s37
      %p48 = scmp.eq.s32.totalorder %s26, 0
      %p49 = por %p47, %p48
      %p50 = scmp.ne.s32.totalorder %s36, %s37
      %p51 = scmp.eq.s32.totalorder %s27, 1
      %p52 = por %p50, %p51
      %p54 = scmp.ne.s32.totalorder %s37, %s53
      %p55 = scmp.eq.s32.totalorder %s27, 0
      %p56 = por %p54, %p55
      %s58 = sadd.s32 %s57, 1
      %p61 = scmp.eq.s32.totalorder %s21, 1
      %p62 = scmp.ne.s32.totalorder %s57, %s59
      %p63 = scmp.eq.s32.totalorder %s21, 0
      %p64 = por %p62, %p63
      %p65 = scmp.ne.s32.totalorder %s57, %s59
      %p66 = scmp.eq.s32.totalorder %s26, 1
      %p67 = por %p65, %p66
      %p68 = scmp.ne.s32.totalorder %s59, %s60
      %p69 = scmp.eq.s32.totalorder %s26, 0
      %p70 = por %p68, %p69
      %p71 = scmp.ne.s32.totalorder %s59, %s60
      %p72 = scmp.eq.s32.totalorder %s27, 1
      %p73 = por %p71, %p72
      %p75 = scmp.ne.s32.totalorder %s60, %s74
      %p76 = scmp.eq.s32.totalorder %s27, 0
      %p77 = por %p75, %p76
      %s79 = sadd.s32 %s78, 1
      %p82 = scmp.eq.s32.totalorder %s21, 1
      %p83 = scmp.ne.s32.totalorder %s78, %s80
      %p84 = scmp.eq.s32.totalorder %s21, 0
      %p85 = por %p83, %p84
      %p86 = scmp.ne.s32.totalorder %s78, %s80
      %p87 = scmp.eq.s32.totalorder %s26, 1
      %p88 = por %p86, %p87
      %p89 = scmp.ne.s32.totalorder %s80, %s81
      %p90 = scmp.eq.s32.totalorder %s26, 0
      %p91 = por %p89, %p90
      %p92 = scmp.ne.s32.totalorder %s80, %s81
      %p93 = scmp.eq.s32.totalorder %s27, 1
      %p94 = por %p92, %p93
      %p96 = scmp.ne.s32.totalorder %s81, %s95
      %p97 = scmp.eq.s32.totalorder %s27, 0
      %p98 = por %p96, %p97
      %s100 = sadd.s32 %s99, 1
      %p103 = scmp.eq.s32.totalorder %s21, 1
      %p104 = scmp.ne.s32.totalorder %s99, %s101
      %p105 = scmp.eq.s32.totalorder %s21, 0
      %p106 = por %p104, %p105
      %p107 = scmp.ne.s32.totalorder %s99, %s101
      %p108 = scmp.eq.s32.totalorder %s26, 1
      %p109 = por %p107, %p108
      %p110 = scmp.ne.s32.totalorder %s101, %s102
      %p111 = scmp.eq.s32.totalorder %s26, 0
      %p112 = por %p110, %p111
      %p113 = scmp.ne.s32.totalorder %s101, %s102
      %p114 = scmp.eq.s32.totalorder %s27, 1
      %p115 = por %p113, %p114
      %p117 = scmp.ne.s32.totalorder %s102, %s116
      %p118 = scmp.eq.s32.totalorder %s27, 0
      %p119 = por %p117, %p118
      %s121 = sadd.s32 %s120, 1
      %p124 = scmp.eq.s32.totalorder %s21, 1
      %p125 = scmp.ne.s32.totalorder %s120, %s122
      %p126 = scmp.eq.s32.totalorder %s21, 0
      %p127 = por %p125, %p126
      %p128 = scmp.ne.s32.totalorder %s120, %s122
      %p129 = scmp.eq.s32.totalorder %s26, 1
      %p130 = por %p128, %p129
      %p131 = scmp.ne.s32.totalorder %s122, %s123
      %p132 = scmp.eq.s32.totalorder %s26, 0
      %p133 = por %p131, %p132
      %p134 = scmp.ne.s32.totalorder %s122, %s123
      %p135 = scmp.eq.s32.totalorder %s27, 1
      %p136 = por %p134, %p135
      %p138 = scmp.ne.s32.totalorder %s123, %s137
      %p139 = scmp.eq.s32.totalorder %s27, 0
      %p140 = por %p138, %p139
      %s141 = ssub.s32 %s21, %s28
      %p142 = scmp.eq.s32.totalorder %s141, 0
      %s144 = sadd.s32 %s143, 1
      %s145 = scalar_select %p142, %s143, %s144
      %p148 = pneg %p142
      %p149 = scmp.eq.s32.totalorder %s21, 1
      %p150 = por %p148, %p149
      %p151 = scmp.ne.s32.totalorder %s143, %s146
      %p152 = scmp.eq.s32.totalorder %s21, 0
      %p153 = por %p151, %p152
      %p154 = scmp.ne.s32.totalorder %s143, %s146
      %p155 = scmp.eq.s32.totalorder %s26, 1
      %p156 = por %p154, %p155
      %p157 = scmp.ne.s32.totalorder %s146, %s147
      %p158 = scmp.eq.s32.totalorder %s26, 0
      %p159 = por %p157, %p158
      %p160 = scmp.ne.s32.totalorder %s146, %s147
      %p161 = scmp.eq.s32.totalorder %s27, 1
      %p162 = por %p160, %p161
      %p164 = scmp.ne.s32.totalorder %s147, %s163
      %p165 = scmp.eq.s32.totalorder %s27, 0
      %p166 = por %p164, %p165
      %s167 = ssub.s32 %s21, %s28
      %p168 = scmp.eq.s32.totalorder %s167, 0
      %s170 = sadd.s32 %s169, 1
      %s171 = scalar_select %p168, %s169, %s170
      %p174 = pneg %p168
      %p175 = scmp.eq.s32.totalorder %s21, 1
      %p176 = por %p174, %p175
      %p177 = scmp.ne.s32.totalorder %s169, %s172
      %p178 = scmp.eq.s32.totalorder %s21, 0
      %p179 = por %p177, %p178
      %p180 = scmp.ne.s32.totalorder %s169, %s172
      %p181 = scmp.eq.s32.totalorder %s26, 1
      %p182 = por %p180, %p181
      %p183 = scmp.ne.s32.totalorder %s172, %s173
      %p184 = scmp.eq.s32.totalorder %s26, 0
      %p185 = por %p183, %p184
      %p186 = scmp.ne.s32.totalorder %s172, %s173
      %p187 = scmp.eq.s32.totalorder %s27, 1
      %p188 = por %p186, %p187
      %p190 = scmp.ne.s32.totalorder %s173, %s189
      %p191 = scmp.eq.s32.totalorder %s27, 0
      %p192 = por %p190, %p191
      %s193 = ssub.s32 %s21, %s28
      %p194 = scmp.eq.s32.totalorder %s193, 0
      %s196 = sadd.s32 %s195, 1
      %s197 = scalar_select %p194, %s195, %s196
      %p200 = pneg %p194
      %p201 = scmp.eq.s32.totalorder %s21, 1
      %p202 = por %p200, %p201
      %p203 = scmp.ne.s32.totalorder %s195, %s198
      %p204 = scmp.eq.s32.totalorder %s21, 0
      %p205 = por %p203, %p204
      %p206 = scmp.ne.s32.totalorder %s195, %s198
      %p207 = scmp.eq.s32.totalorder %s26, 1
      %p208 = por %p206, %p207
      %p209 = scmp.ne.s32.totalorder %s198, %s199
      %p210 = scmp.eq.s32.totalorder %s26, 0
      %p211 = por %p209, %p210
      %p212 = scmp.ne.s32.totalorder %s198, %s199
      %p213 = scmp.eq.s32.totalorder %s27, 1
      %p214 = por %p212, %p213
      %p216 = scmp.ne.s32.totalorder %s199, %s215
      %p217 = scmp.eq.s32.totalorder %s27, 0
      %p218 = por %p216, %p217
      %p219 = scmp.le.s32.totalorder 1, %s21
      %p220 = scmp.lt.s32.totalorder %s21, 3
      %p221 = pnand %p219, %p220
      %p222 = pneg %p221
      // Predicated region
      $region9: #{trigger_hyper_forward.1} parent=5 // pred_check
        _
      $region10: #{trigger_hyper_forward.1} parent=5 // pred_check_branch
        %224 = sbr.rel (%p221) target = $region12
      $region11: #{trigger_hyper_forward.1} parent=5 // pred_region
        %s225 = ssub.s32 %s21, 1
        // Predicated region
        $region13: #{trigger_hyper_forward.1} parent=11 // pred_check
          %p226 = pneg %p49
        $region14: #{trigger_hyper_forward.1} parent=11 // pred_check_branch
          %228 = sbr.rel (%p226) target = $region16
        $region15: #{trigger_hyper_forward.1} parent=11 // pred_region
          %s229 = sld [smem:[#allocation3]]
          %s231 = ssub.s32 16, 16
          %232 = vsyncadd [#allocation5], %s231
          %s233 = smul.addr %s229, 16
          %s234 = scalar_lea.hbm %s1, %s233
          %s236 = sshll.u32 [#allocation4], 4
          %s237 = int_to_ptr.vmem [resolvable:$true] %s236
          %239 = dma.hbm_to_vmem [thread:$0]  %s234, 16, %s237, [#allocation5]
        $region16: #{trigger_hyper_forward.1} parent=11 // pred_fallthru
          _
        // Predicated region
        $region17: #{trigger_hyper_forward.1} parent=11 // pred_check
          %p240 = pneg %p70
        $region18: #{trigger_hyper_forward.1} parent=11 // pred_check_branch
          %242 = sbr.rel (%p240) target = $region20
        $region19: #{trigger_hyper_forward.1} parent=11 // pred_region
          %s244 = ssub.s32 512, 512
          %245 = vsyncadd [#allocation7], %s244
          %s246 = sshll.u32 [#allocation6], 4
          %s247 = int_to_ptr.vmem [resolvable:$true] %s246
          %252 = dma.hbm_to_vmem [thread:$0]  %s2, 512, %s247, [#allocation7], 128, 128, 8
        $region20: #{trigger_hyper_forward.1} parent=11 // pred_fallthru
          _
        // Predicated region
        $region21: #{trigger_hyper_forward.1} parent=11 // pred_check
          %p253 = pneg %p91
        $region22: #{trigger_hyper_forward.1} parent=11 // pred_check_branch
          %255 = sbr.rel (%p253) target = $region24
        $region23: #{trigger_hyper_forward.1} parent=11 // pred_region
          %s257 = ssub.s32 16, 16
          %258 = vsyncadd [#allocation7], %s257
          %s260 = sshll.u32 [#allocation8], 4
          %s261 = int_to_ptr.vmem [resolvable:$true] %s260
          %263 = dma.hbm_to_vmem [thread:$0]  %s3, 16, %s261, [#allocation7]
        $region24: #{trigger_hyper_forward.1} parent=11 // pred_fallthru
          _
        // Predicated region
        $region25: #{trigger_hyper_forward.1} parent=11 // pred_check
          %p264 = pneg %p112
        $region26: #{trigger_hyper_forward.1} parent=11 // pred_check_branch
          %266 = sbr.rel (%p264) target = $region28
        $region27: #{trigger_hyper_forward.1} parent=11 // pred_region
          %s268 = ssub.s32 6144, 6144
          %269 = vsyncadd [#allocation10], %s268
          %s270 = sshll.u32 [#allocation9], 4
          %s271 = int_to_ptr.vmem [resolvable:$true] %s270
          %276 = dma.hbm_to_vmem [thread:$0]  %s4, 6144, %s271, [#allocation10], 128, 128, 8
        $region28: #{trigger_hyper_forward.1} parent=11 // pred_fallthru
          _
        // Predicated region
        $region29: #{trigger_hyper_forward.1} parent=11 // pred_check
          %p277 = pneg %p133
        $region30: #{trigger_hyper_forward.1} parent=11 // pred_check_branch
          %279 = sbr.rel (%p277) target = $region32
        $region31: #{trigger_hyper_forward.1} parent=11 // pred_region
          %s281 = ssub.s32 48, 48
          %282 = vsyncadd [#allocation10], %s281
          %s283 = sshll.u32 [#allocation11], 4
          %s284 = int_to_ptr.vmem [resolvable:$true] %s283
          %289 = dma.hbm_to_vmem [thread:$0]  %s5, 48, %s284, [#allocation10], 16, 16, 1
        $region32: #{trigger_hyper_forward.1} parent=11 // pred_fallthru
          _
      $region12: #{trigger_hyper_forward.1} parent=5 // pred_fallthru
        _
      %p290 = scmp.lt.s32.totalorder %s21, 2
      // Predicated region
      $region33: #{trigger_hyper_forward.1} parent=5 // pred_check
        %p291 = pneg %p290
      $region34: #{trigger_hyper_forward.1} parent=5 // pred_check_branch
        %293 = sbr.rel (%p291) target = $region36
      $region35: #{trigger_hyper_forward.1} parent=5 // pred_region
        // Predicated region
        $region37: #{trigger_hyper_forward.1} parent=35 // pred_check
          %p294 = pneg %p153
        $region38: #{trigger_hyper_forward.1} parent=35 // pred_check_branch
          %296 = sbr.rel (%p294) target = $region40
        $region39: #{trigger_hyper_forward.1} parent=35 // pred_region
          %s297 = sand.u32 %s21, 1
          %s298 = scalar_lea.sflag [#allocation13], %s297
          %s299 = sand.u32 %s143, 1
          %s300 = smul.addr %s299, 3072
          %s301 = scalar_lea.vmem [#allocation12], %s300
          %s302 = smul.u32 48, %s21
          %s304 = ssub.s32 49152, 49152
          %305 = vsyncadd %s298, %s304
          %s306 = smul.addr %s302, 64
          %s307 = scalar_lea.hbm %s6, %s306
          %s308 = sshll.u32 %s301, 4
          %s309 = int_to_ptr.vmem [resolvable:$true] %s308
          %314 = dma.hbm_to_vmem [thread:$0]  %s307, 49152, %s309, %s298, 6144, 3072, 192
        $region40: #{trigger_hyper_forward.1} parent=35 // pred_fallthru
          _
        // Predicated region
        $region41: #{trigger_hyper_forward.1} parent=35 // pred_check
          %p315 = pneg %p179
        $region42: #{trigger_hyper_forward.1} parent=35 // pred_check_branch
          %317 = sbr.rel (%p315) target = $region44
        $region43: #{trigger_hyper_forward.1} parent=35 // pred_region
          %s318 = sand.u32 %s21, 1
          %s319 = scalar_lea.sflag [#allocation13], %s318
          %s320 = sand.u32 %s169, 1
          %s321 = smul.addr %s320, 48
          %s322 = scalar_lea.vmem [#allocation14], %s321
          %s323 = smul.u32 48, %s21
          %s325 = ssub.s32 768, 768
          %326 = vsyncadd %s319, %s325
          %s327 = smul.addr %s323, 16
          %s328 = scalar_lea.hbm %s7, %s327
          %s330 = sshll.u32 %s322, 4
          %s331 = int_to_ptr.vmem [resolvable:$true] %s330
          %333 = dma.hbm_to_vmem [thread:$0]  %s328, 768, %s331, %s319
        $region44: #{trigger_hyper_forward.1} parent=35 // pred_fallthru
          _
      $region36: #{trigger_hyper_forward.1} parent=5 // pred_fallthru
        _
      %p334 = scmp.le.s32.totalorder 1, %s21
      %p335 = scmp.lt.s32.totalorder %s21, 3
      %p336 = pnand %p334, %p335
      %p337 = pneg %p336
      // Predicated region
      $region45: #{trigger_hyper_forward.1} parent=5 // pred_check
        _
      $region46: #{trigger_hyper_forward.1} parent=5 // pred_check_branch
        %339 = sbr.rel (%p336) target = $region48
      $region47: #{trigger_hyper_forward.1} parent=5 // pred_region
        %s340 = ssub.s32 %s21, 1
        // Predicated region
        $region49: #{trigger_hyper_forward.1} parent=47 // pred_check
          %p341 = pneg %p49
        $region50: #{trigger_hyper_forward.1} parent=47 // pred_check_branch
          %343 = sbr.rel (%p341) target = $region52
        $region51: #{trigger_hyper_forward.1} parent=47 // pred_region
          %344 = dma.done [#allocation5], 16
        $region52: #{trigger_hyper_forward.1} parent=47 // pred_fallthru
          _
        // Predicated region
        $region53: #{trigger_hyper_forward.1} parent=47 // pred_check
          %p345 = pneg %p70
        $region54: #{trigger_hyper_forward.1} parent=47 // pred_check_branch
          %347 = sbr.rel (%p345) target = $region56
        $region55: #{trigger_hyper_forward.1} parent=47 // pred_region
          %348 = dma.done [#allocation7], 512
        $region56: #{trigger_hyper_forward.1} parent=47 // pred_fallthru
          _
        // Predicated region
        $region57: #{trigger_hyper_forward.1} parent=47 // pred_check
          %p349 = pneg %p91
        $region58: #{trigger_hyper_forward.1} parent=47 // pred_check_branch
          %351 = sbr.rel (%p349) target = $region60
        $region59: #{trigger_hyper_forward.1} parent=47 // pred_region
          %352 = dma.done [#allocation7], 16
        $region60: #{trigger_hyper_forward.1} parent=47 // pred_fallthru
          _
        // Predicated region
        $region61: #{trigger_hyper_forward.1} parent=47 // pred_check
          %p353 = pneg %p112
        $region62: #{trigger_hyper_forward.1} parent=47 // pred_check_branch
          %355 = sbr.rel (%p353) target = $region64
        $region63: #{trigger_hyper_forward.1} parent=47 // pred_region
          %356 = dma.done [#allocation10], 6144
        $region64: #{trigger_hyper_forward.1} parent=47 // pred_fallthru
          _
        // Predicated region
        $region65: #{trigger_hyper_forward.1} parent=47 // pred_check
          %p357 = pneg %p133
        $region66: #{trigger_hyper_forward.1} parent=47 // pred_check_branch
          %359 = sbr.rel (%p357) target = $region68
        $region67: #{trigger_hyper_forward.1} parent=47 // pred_region
          %360 = dma.done [#allocation10], 48
        $region68: #{trigger_hyper_forward.1} parent=47 // pred_fallthru
          _
        %s361 = sand.u32 %s26, 1
        %s362 = scalar_lea.sflag [#allocation13], %s361
        %s363 = sand.u32 %s146, 1
        %s364 = smul.addr %s363, 3072
        %s365 = scalar_lea.vmem [#allocation12], %s364
        // Predicated region
        $region69: #{trigger_hyper_forward.1} parent=47 // pred_check
          %p366 = pneg %p159
        $region70: #{trigger_hyper_forward.1} parent=47 // pred_check_branch
          %368 = sbr.rel (%p366) target = $region72
        $region71: #{trigger_hyper_forward.1} parent=47 // pred_region
          %369 = dma.done %s362, 49152
        $region72: #{trigger_hyper_forward.1} parent=47 // pred_fallthru
          _
        %s370 = sand.u32 %s26, 1
        %s371 = scalar_lea.sflag [#allocation13], %s370
        %s372 = sand.u32 %s172, 1
        %s373 = smul.addr %s372, 48
        %s374 = scalar_lea.vmem [#allocation14], %s373
        // Predicated region
        $region73: #{trigger_hyper_forward.1} parent=47 // pred_check
          %p375 = pneg %p185
        $region74: #{trigger_hyper_forward.1} parent=47 // pred_check_branch
          %377 = sbr.rel (%p375) target = $region76
        $region75: #{trigger_hyper_forward.1} parent=47 // pred_region
          %378 = dma.done %s371, 768
        $region76: #{trigger_hyper_forward.1} parent=47 // pred_fallthru
          _
        %p379 = pneg %p49
        %p380 = pneg %p46
        %p381 = pneg %p70
        %p382 = pneg %p67
        %p383 = pneg %p91
        %p384 = pneg %p88
        %p385 = pneg %p112
        %p386 = pneg %p109
        %p387 = pneg %p133
        %p388 = pneg %p130
        %s389 = sand.u32 %s26, 1
        %s390 = scalar_lea.sflag [#allocation13], %s389
        %s391 = sand.u32 %s146, 1
        %s392 = smul.addr %s391, 3072
        %s393 = scalar_lea.vmem [#allocation12], %s392
        %p394 = pneg %p159
        %p395 = pneg %p156
        %s396 = sand.u32 %s26, 1
        %s397 = scalar_lea.sflag [#allocation13], %s396
        %s398 = sand.u32 %s172, 1
        %s399 = smul.addr %s398, 48
        %s400 = scalar_lea.vmem [#allocation14], %s399
        %p401 = pneg %p185
        %p402 = pneg %p182
        %p403 = pneg %p211
        %p404 = pneg %p208
        %s405 = smul.u32 48, %s26
        %p406 = scmp.lt.s32.totalorder %s405, 95
        %s407 = scalar_select %p406, %s405, 95
        %s408 = scalar_lea.vmem %s8, %s407
        %s409 = sld [smem:[#allocation3]]
        %s410 = smul.u32 48, %s26
        %s411 = smul.u32 48, %s26
        %s412 = smul.u32 48, %s26
        %p413 = scmp.lt.s32.totalorder %s412, 95
        %s414 = scalar_select %p413, %s412, 95
        %s415 = scalar_lea.vmem %s8, %s414
        %s416 = smul.u32 48, %s26
        %v418 = vld [vmem:[#allocation4] sm:$0x1]
        %v419 = vld [vmem:[#allocation6] sm:$0xff]
        %v420 = vld [vmem:[#allocation6 + $0x8] sm:$0xff]
        %v421 = vld [vmem:[#allocation6 + $0x10] sm:$0xff]
        %v422 = vld [vmem:[#allocation6 + $0x18] sm:$0xff]
        %v423 = vld [vmem:[#allocation8] sm:$0x1]
        %vm424 = vcmask 261120
        %v426 = vsel %vm424, %v418, 0
        %428 = vmatprep.subr.mxu0 0.0
        %429 = vmatpush1.msra.mxu0 %v419
        %430 = vmatprep.subr.mxu0 0.0
        %431 = vmatpush1.msra.mxu0 %v420
        %432 = vmatprep.subr.mxu0 0.0
        %433 = vmatpush1.msra.mxu0 %v421
        %434 = vmatprep.subr.mxu0 0.0
        %435 = vmatpush1.msra.mxu0 %v422
        %436 = vmatprep.subr.mxu0 0.0
        %437 = vmatpush1.msra.mxu0 0.0
        %438 = vmatprep.subr.mxu0 0.0
        %439 = vmatpush1.msra.mxu0 0.0
        %440 = vmatprep.subr.mxu0 0.0
        %441 = vmatpush1.msra.mxu0 0.0
        %442 = vmatprep.subr.mxu0 0.0
        %443 = vmatpush1.msra.mxu0 0.0
        %444 = vmatprep.subr.mxu0 0.0
        %445 = vmatpush1.msra.mxu0 0.0
        %446 = vmatprep.subr.mxu0 0.0
        %447 = vmatpush1.msra.mxu0 0.0
        %448 = vmatprep.subr.mxu0 0.0
        %449 = vmatpush1.msra.mxu0 0.0
        %450 = vmatprep.subr.mxu0 0.0
        %451 = vmatpush1.msra.mxu0 0.0
        %452 = vmatprep.subr.mxu0 0.0
        %453 = vmatpush1.msra.mxu0 0.0
        %454 = vmatprep.subr.mxu0 0.0
        %455 = vmatpush1.msra.mxu0 0.0
        %456 = vmatprep.subr.mxu0 0.0
        %457 = vmatpush1.msra.mxu0 0.0
        %458 = vmatprep.subr.mxu0 0.0
        %459 = vmatpush1.msra.mxu0 0.0
        %460 = vmatprep.subr.mxu0 0.0
        %461 = vmatpush1.msra.mxu0 0.0
        %462 = vmatprep.subr.mxu0 0.0
        %463 = vmatpush1.msra.mxu0 0.0
        %464 = vmatprep.subr.mxu0 0.0
        %465 = vmatpush1.msra.mxu0 0.0
        %466 = vmatprep.subr.mxu0 0.0
        %467 = vmatpush1.msra.mxu0 0.0
        %468 = vmatprep.subr.mxu0 0.0
        %469 = vmatpush1.msra.mxu0 0.0
        %470 = vmatprep.subr.mxu0 0.0
        %471 = vmatpush1.msra.mxu0 0.0
        %472 = vmatprep.subr.mxu0 0.0
        %473 = vmatpush1.msra.mxu0 0.0
        %474 = vmatprep.subr.mxu0 0.0
        %475 = vmatpush1.msra.mxu0 0.0
        %476 = vmatprep.subr.mxu0 0.0
        %477 = vmatpush1.msra.mxu0 0.0
        %478 = vmatprep.subr.mxu0 0.0
        %479 = vmatpush1.msra.mxu0 0.0
        %480 = vmatprep.subr.mxu0 0.0
        %481 = vmatpush1.msra.mxu0 0.0
        %482 = vmatprep.subr.mxu0 0.0
        %483 = vmatpush1.msra.mxu0 0.0
        %484 = vmatprep.subr.mxu0 0.0
        %485 = vmatpush1.msra.mxu0 0.0
        %486 = vmatprep.subr.mxu0 0.0
        %487 = vmatpush1.msra.mxu0 0.0
        %488 = vmatprep.subr.mxu0 0.0
        %489 = vmatpush1.msra.mxu0 0.0
        %490 = vmatprep.subr.mxu0 0.0
        %491 = vmatpush1.msra.mxu0 0.0
        %492 = vmatprep.mubr.f32.mxu0 0.0
        %493 = vmatmul.mubr.f32.gmra.mrb[0].mxu0 %v426
        %v494 = vpop.f32.mrb[0].mxu0
        %v495 = vadd.f32 %v423, %v494
        %v496 = vpop.f32.mrb[0].mxu0
        %497 = vdwg.mxu0
        %v498 = vmax.f32 %v495, 0.0
        %v499 = vld [vmem:[#allocation9] sm:$0xff]
        %v500 = vld [vmem:[#allocation9 + $0x8] sm:$0xff]
        %v501 = vld [vmem:[#allocation9 + $0x10] sm:$0xff]
        %v502 = vld [vmem:[#allocation9 + $0x18] sm:$0xff]
        %v503 = vld [vmem:[#allocation9 + $0x20] sm:$0xff]
        %v504 = vld [vmem:[#allocation9 + $0x28] sm:$0xff]
        %v505 = vld [vmem:[#allocation9 + $0x30] sm:$0xff]
        %v506 = vld [vmem:[#allocation9 + $0x38] sm:$0xff]
        %v507 = vld [vmem:[#allocation9 + $0x40] sm:$0xff]
        %v508 = vld [vmem:[#allocation9 + $0x48] sm:$0xff]
        %v509 = vld [vmem:[#allocation9 + $0x50] sm:$0xff]
        %v510 = vld [vmem:[#allocation9 + $0x58] sm:$0xff]
        %v511 = vld [vmem:[#allocation9 + $0x60] sm:$0xff]
        %v512 = vld [vmem:[#allocation9 + $0x68] sm:$0xff]
        %v513 = vld [vmem:[#allocation9 + $0x70] sm:$0xff]
        %v514 = vld [vmem:[#allocation9 + $0x78] sm:$0xff]
        %v515 = vld [vmem:[#allocation11] sm:$0x1]
        %516 = vmatprep.subr.mxu0 0.0
        %517 = vmatpush1.msra.mxu0 %v499
        %518 = vmatprep.subr.mxu0 0.0
        %519 = vmatpush1.msra.mxu0 %v500
        %520 = vmatprep.subr.mxu0 0.0
        %521 = vmatpush1.msra.mxu0 %v501
        %522 = vmatprep.subr.mxu0 0.0
        %523 = vmatpush1.msra.mxu0 %v502
        %524 = vmatprep.subr.mxu0 0.0
        %525 = vmatpush1.msra.mxu0 %v503
        %526 = vmatprep.subr.mxu0 0.0
        %527 = vmatpush1.msra.mxu0 %v504
        %528 = vmatprep.subr.mxu0 0.0
        %529 = vmatpush1.msra.mxu0 %v505
        %530 = vmatprep.subr.mxu0 0.0
        %531 = vmatpush1.msra.mxu0 %v506
        %532 = vmatprep.subr.mxu0 0.0
        %533 = vmatpush1.msra.mxu0 %v507
        %534 = vmatprep.subr.mxu0 0.0
        %535 = vmatpush1.msra.mxu0 %v508
        %536 = vmatprep.subr.mxu0 0.0
        %537 = vmatpush1.msra.mxu0 %v509
        %538 = vmatprep.subr.mxu0 0.0
        %539 = vmatpush1.msra.mxu0 %v510
        %540 = vmatprep.subr.mxu0 0.0
        %541 = vmatpush1.msra.mxu0 %v511
        %542 = vmatprep.subr.mxu0 0.0
        %543 = vmatpush1.msra.mxu0 %v512
        %544 = vmatprep.subr.mxu0 0.0
        %545 = vmatpush1.msra.mxu0 %v513
        %546 = vmatprep.subr.mxu0 0.0
        %547 = vmatpush1.msra.mxu0 %v514
        %548 = vmatprep.subr.mxu0 0.0
        %549 = vmatpush1.msra.mxu0 0.0
        %550 = vmatprep.subr.mxu0 0.0
        %551 = vmatpush1.msra.mxu0 0.0
        %552 = vmatprep.subr.mxu0 0.0
        %553 = vmatpush1.msra.mxu0 0.0
        %554 = vmatprep.subr.mxu0 0.0
        %555 = vmatpush1.msra.mxu0 0.0
        %556 = vmatprep.subr.mxu0 0.0
        %557 = vmatpush1.msra.mxu0 0.0
        %558 = vmatprep.subr.mxu0 0.0
        %559 = vmatpush1.msra.mxu0 0.0
        %560 = vmatprep.subr.mxu0 0.0
        %561 = vmatpush1.msra.mxu0 0.0
        %562 = vmatprep.subr.mxu0 0.0
        %563 = vmatpush1.msra.mxu0 0.0
        %564 = vmatprep.subr.mxu0 0.0
        %565 = vmatpush1.msra.mxu0 0.0
        %566 = vmatprep.subr.mxu0 0.0
        %567 = vmatpush1.msra.mxu0 0.0
        %568 = vmatprep.subr.mxu0 0.0
        %569 = vmatpush1.msra.mxu0 0.0
        %570 = vmatprep.subr.mxu0 0.0
        %571 = vmatpush1.msra.mxu0 0.0
        %572 = vmatprep.subr.mxu0 0.0
        %573 = vmatpush1.msra.mxu0 0.0
        %574 = vmatprep.subr.mxu0 0.0
        %575 = vmatpush1.msra.mxu0 0.0
        %576 = vmatprep.subr.mxu0 0.0
        %577 = vmatpush1.msra.mxu0 0.0
        %578 = vmatprep.subr.mxu0 0.0
        %579 = vmatpush1.msra.mxu0 0.0
        %580 = vmatprep.mubr.f32.mxu0 0.0
        %581 = vmatmul.mubr.f32.gmra.mrb[0].mxu0 %v498
        %v582 = vpop.f32.mrb[0].mxu0
        %v583 = vadd.f32 %v515, %v582
        %v584 = vpop.f32.mrb[0].mxu0
        %585 = vdwg.mxu0
        %v586 = vmax.f32 %v583, 0.0
        %s587 = scalar_lea.vmem [#allocation9], 128
        %v588 = vld [vmem:[%s587] sm:$0xff]
        %v589 = vld [vmem:[%s587 + $0x8] sm:$0xff]
        %v590 = vld [vmem:[%s587 + $0x10] sm:$0xff]
        %v591 = vld [vmem:[%s587 + $0x18] sm:$0xff]
        %v592 = vld [vmem:[%s587 + $0x20] sm:$0xff]
        %v593 = vld [vmem:[%s587 + $0x28] sm:$0xff]
        %v594 = vld [vmem:[%s587 + $0x30] sm:$0xff]
        %v595 = vld [vmem:[%s587 + $0x38] sm:$0xff]
        %v596 = vld [vmem:[%s587 + $0x40] sm:$0xff]
        %v597 = vld [vmem:[%s587 + $0x48] sm:$0xff]
        %v598 = vld [vmem:[%s587 + $0x50] sm:$0xff]
        %v599 = vld [vmem:[%s587 + $0x58] sm:$0xff]
        %v600 = vld [vmem:[%s587 + $0x60] sm:$0xff]
        %v601 = vld [vmem:[%s587 + $0x68] sm:$0xff]
        %v602 = vld [vmem:[%s587 + $0x70] sm:$0xff]
        %v603 = vld [vmem:[%s587 + $0x78] sm:$0xff]
        %s604 = scalar_lea.vmem [#allocation11], 1
        %v605 = vld [vmem:[%s604] sm:$0x1]
        %606 = vmatprep.subr.mxu0 0.0
        %607 = vmatpush1.msra.mxu0 %v588
        %608 = vmatprep.subr.mxu0 0.0
        %609 = vmatpush1.msra.mxu0 %v589
        %610 = vmatprep.subr.mxu0 0.0
        %611 = vmatpush1.msra.mxu0 %v590
        %612 = vmatprep.subr.mxu0 0.0
        %613 = vmatpush1.msra.mxu0 %v591
        %614 = vmatprep.subr.mxu0 0.0
        %615 = vmatpush1.msra.mxu0 %v592
        %616 = vmatprep.subr.mxu0 0.0
        %617 = vmatpush1.msra.mxu0 %v593
        %618 = vmatprep.subr.mxu0 0.0
        %619 = vmatpush1.msra.mxu0 %v594
        %620 = vmatprep.subr.mxu0 0.0
        %621 = vmatpush1.msra.mxu0 %v595
        %622 = vmatprep.subr.mxu0 0.0
        %623 = vmatpush1.msra.mxu0 %v596
        %624 = vmatprep.subr.mxu0 0.0
        %625 = vmatpush1.msra.mxu0 %v597
        %626 = vmatprep.subr.mxu0 0.0
        %627 = vmatpush1.msra.mxu0 %v598
        %628 = vmatprep.subr.mxu0 0.0
        %629 = vmatpush1.msra.mxu0 %v599
        %630 = vmatprep.subr.mxu0 0.0
        %631 = vmatpush1.msra.mxu0 %v600
        %632 = vmatprep.subr.mxu0 0.0
        %633 = vmatpush1.msra.mxu0 %v601
        %634 = vmatprep.subr.mxu0 0.0
        %635 = vmatpush1.msra.mxu0 %v602
        %636 = vmatprep.subr.mxu0 0.0
        %637 = vmatpush1.msra.mxu0 %v603
        %638 = vmatprep.subr.mxu0 0.0
        %639 = vmatpush1.msra.mxu0 0.0
        %640 = vmatprep.subr.mxu0 0.0
        %641 = vmatpush1.msra.mxu0 0.0
        %642 = vmatprep.subr.mxu0 0.0
        %643 = vmatpush1.msra.mxu0 0.0
        %644 = vmatprep.subr.mxu0 0.0
        %645 = vmatpush1.msra.mxu0 0.0
        %646 = vmatprep.subr.mxu0 0.0
        %647 = vmatpush1.msra.mxu0 0.0
        %648 = vmatprep.subr.mxu0 0.0
        %649 = vmatpush1.msra.mxu0 0.0
        %650 = vmatprep.subr.mxu0 0.0
        %651 = vmatpush1.msra.mxu0 0.0
        %652 = vmatprep.subr.mxu0 0.0
        %653 = vmatpush1.msra.mxu0 0.0
        %654 = vmatprep.subr.mxu0 0.0
        %655 = vmatpush1.msra.mxu0 0.0
        %656 = vmatprep.subr.mxu0 0.0
        %657 = vmatpush1.msra.mxu0 0.0
        %658 = vmatprep.subr.mxu0 0.0
        %659 = vmatpush1.msra.mxu0 0.0
        %660 = vmatprep.subr.mxu0 0.0
        %661 = vmatpush1.msra.mxu0 0.0
        %662 = vmatprep.subr.mxu0 0.0
        %663 = vmatpush1.msra.mxu0 0.0
        %664 = vmatprep.subr.mxu0 0.0
        %665 = vmatpush1.msra.mxu0 0.0
        %666 = vmatprep.subr.mxu0 0.0
        %667 = vmatpush1.msra.mxu0 0.0
        %668 = vmatprep.subr.mxu0 0.0
        %669 = vmatpush1.msra.mxu0 0.0
        %670 = vmatprep.mubr.f32.mxu0 0.0
        %671 = vmatmul.mubr.f32.gmra.mrb[0].mxu0 %v586
        %v672 = vpop.f32.mrb[0].mxu0
        %v673 = vadd.f32 %v605, %v672
        %v674 = vpop.f32.mrb[0].mxu0
        %675 = vdwg.mxu0
        %v676 = vmax.f32 %v673, 0.0
        %s677 = scalar_lea.vmem [#allocation9], 256
        %v678 = vld [vmem:[%s677] sm:$0xff]
        %v679 = vld [vmem:[%s677 + $0x8] sm:$0xff]
        %v680 = vld [vmem:[%s677 + $0x10] sm:$0xff]
        %v681 = vld [vmem:[%s677 + $0x18] sm:$0xff]
        %v682 = vld [vmem:[%s677 + $0x20] sm:$0xff]
        %v683 = vld [vmem:[%s677 + $0x28] sm:$0xff]
        %v684 = vld [vmem:[%s677 + $0x30] sm:$0xff]
        %v685 = vld [vmem:[%s677 + $0x38] sm:$0xff]
        %v686 = vld [vmem:[%s677 + $0x40] sm:$0xff]
        %v687 = vld [vmem:[%s677 + $0x48] sm:$0xff]
        %v688 = vld [vmem:[%s677 + $0x50] sm:$0xff]
        %v689 = vld [vmem:[%s677 + $0x58] sm:$0xff]
        %v690 = vld [vmem:[%s677 + $0x60] sm:$0xff]
        %v691 = vld [vmem:[%s677 + $0x68] sm:$0xff]
        %v692 = vld [vmem:[%s677 + $0x70] sm:$0xff]
        %v693 = vld [vmem:[%s677 + $0x78] sm:$0xff]
        %s694 = scalar_lea.vmem [#allocation11], 2
        %v695 = vld [vmem:[%s694] sm:$0x1]
        %696 = vmatprep.subr.mxu0 0.0
        %697 = vmatpush1.msra.mxu0 %v678
        %698 = vmatprep.subr.mxu0 0.0
        %699 = vmatpush1.msra.mxu0 %v679
        %700 = vmatprep.subr.mxu0 0.0
        %701 = vmatpush1.msra.mxu0 %v680
        %702 = vmatprep.subr.mxu0 0.0
        %703 = vmatpush1.msra.mxu0 %v681
        %704 = vmatprep.subr.mxu0 0.0
        %705 = vmatpush1.msra.mxu0 %v682
        %706 = vmatprep.subr.mxu0 0.0
        %707 = vmatpush1.msra.mxu0 %v683
        %708 = vmatprep.subr.mxu0 0.0
        %709 = vmatpush1.msra.mxu0 %v684
        %710 = vmatprep.subr.mxu0 0.0
        %711 = vmatpush1.msra.mxu0 %v685
        %712 = vmatprep.subr.mxu0 0.0
        %713 = vmatpush1.msra.mxu0 %v686
        %714 = vmatprep.subr.mxu0 0.0
        %715 = vmatpush1.msra.mxu0 %v687
        %716 = vmatprep.subr.mxu0 0.0
        %717 = vmatpush1.msra.mxu0 %v688
        %718 = vmatprep.subr.mxu0 0.0
        %719 = vmatpush1.msra.mxu0 %v689
        %720 = vmatprep.subr.mxu0 0.0
        %721 = vmatpush1.msra.mxu0 %v690
        %722 = vmatprep.subr.mxu0 0.0
        %723 = vmatpush1.msra.mxu0 %v691
        %724 = vmatprep.subr.mxu0 0.0
        %725 = vmatpush1.msra.mxu0 %v692
        %726 = vmatprep.subr.mxu0 0.0
        %727 = vmatpush1.msra.mxu0 %v693
        %728 = vmatprep.subr.mxu0 0.0
        %729 = vmatpush1.msra.mxu0 0.0
        %730 = vmatprep.subr.mxu0 0.0
        %731 = vmatpush1.msra.mxu0 0.0
        %732 = vmatprep.subr.mxu0 0.0
        %733 = vmatpush1.msra.mxu0 0.0
        %734 = vmatprep.subr.mxu0 0.0
        %735 = vmatpush1.msra.mxu0 0.0
        %736 = vmatprep.subr.mxu0 0.0
        %737 = vmatpush1.msra.mxu0 0.0
        %738 = vmatprep.subr.mxu0 0.0
        %739 = vmatpush1.msra.mxu0 0.0
        %740 = vmatprep.subr.mxu0 0.0
        %741 = vmatpush1.msra.mxu0 0.0
        %742 = vmatprep.subr.mxu0 0.0
        %743 = vmatpush1.msra.mxu0 0.0
        %744 = vmatprep.subr.mxu0 0.0
        %745 = vmatpush1.msra.mxu0 0.0
        %746 = vmatprep.subr.mxu0 0.0
        %747 = vmatpush1.msra.mxu0 0.0
        %748 = vmatprep.subr.mxu0 0.0
        %749 = vmatpush1.msra.mxu0 0.0
        %750 = vmatprep.subr.mxu0 0.0
        %751 = vmatpush1.msra.mxu0 0.0
        %752 = vmatprep.subr.mxu0 0.0
        %753 = vmatpush1.msra.mxu0 0.0
        %754 = vmatprep.subr.mxu0 0.0
        %755 = vmatpush1.msra.mxu0 0.0
        %756 = vmatprep.subr.mxu0 0.0
        %757 = vmatpush1.msra.mxu0 0.0
        %758 = vmatprep.subr.mxu0 0.0
        %759 = vmatpush1.msra.mxu0 0.0
        %760 = vmatprep.mubr.f32.mxu0 0.0
        %761 = vmatmul.mubr.f32.gmra.mrb[0].mxu0 %v676
        %v762 = vpop.f32.mrb[0].mxu0
        %v763 = vadd.f32 %v695, %v762
        %v764 = vpop.f32.mrb[0].mxu0
        %765 = vdwg.mxu0
        %v766 = vpack.c.bf16 %v763, %v763
        %v767 = vld [vmem:[%s365] sm:$0xff]
        %v768 = vld [vmem:[%s365 + $0x8] sm:$0xff]
        %v769 = vld [vmem:[%s365 + $0x10] sm:$0xff]
        %v770 = vld [vmem:[%s365 + $0x18] sm:$0xff]
        %v771 = vld [vmem:[%s365 + $0x20] sm:$0xff]
        %v772 = vld [vmem:[%s365 + $0x28] sm:$0xff]
        %v773 = vld [vmem:[%s365 + $0x30] sm:$0xff]
        %v774 = vld [vmem:[%s365 + $0x38] sm:$0xff]
        %v775 = vld [vmem:[%s365 + $0x40] sm:$0xff]
        %v776 = vld [vmem:[%s365 + $0x48] sm:$0xff]
        %v777 = vld [vmem:[%s365 + $0x50] sm:$0xff]
        %v778 = vld [vmem:[%s365 + $0x58] sm:$0xff]
        %v779 = vld [vmem:[%s365 + $0xc0] sm:$0xff]
        %v780 = vld [vmem:[%s365 + $0xc8] sm:$0xff]
        %v781 = vld [vmem:[%s365 + $0xd0] sm:$0xff]
        %v782 = vld [vmem:[%s365 + $0xd8] sm:$0xff]
        %v783 = vld [vmem:[%s365 + $0xe0] sm:$0xff]
        %v784 = vld [vmem:[%s365 + $0xe8] sm:$0xff]
        %v785 = vld [vmem:[%s365 + $0xf0] sm:$0xff]
        %v786 = vld [vmem:[%s365 + $0xf8] sm:$0xff]
        %v787 = vld [vmem:[%s365 + $0x100] sm:$0xff]
        %v788 = vld [vmem:[%s365 + $0x108] sm:$0xff]
        %v789 = vld [vmem:[%s365 + $0x110] sm:$0xff]
        %v790 = vld [vmem:[%s365 + $0x118] sm:$0xff]
        %v791 = vld [vmem:[%s365 + $0x180] sm:$0xff]
        %v792 = vld [vmem:[%s365 + $0x188] sm:$0xff]
        %v793 = vld [vmem:[%s365 + $0x190] sm:$0xff]
        %v794 = vld [vmem:[%s365 + $0x198] sm:$0xff]
        %v795 = vld [vmem:[%s365 + $0x1a0] sm:$0xff]
        %v796 = vld [vmem:[%s365 + $0x1a8] sm:$0xff]
        %v797 = vld [vmem:[%s365 + $0x1b0] sm:$0xff]
        %v798 = vld [vmem:[%s365 + $0x1b8] sm:$0xff]
        %v799 = vld [vmem:[%s365 + $0x1c0] sm:$0xff]
        %v800 = vld [vmem:[%s365 + $0x1c8] sm:$0xff]
        %v801 = vld [vmem:[%s365 + $0x1d0] sm:$0xff]
        %v802 = vld [vmem:[%s365 + $0x1d8] sm:$0xff]
        %v803 = vld [vmem:[%s365 + $0x240] sm:$0xff]
        %v804 = vld [vmem:[%s365 + $0x248] sm:$0xff]
        %v805 = vld [vmem:[%s365 + $0x250] sm:$0xff]
        %v806 = vld [vmem:[%s365 + $0x258] sm:$0xff]
        %v807 = vld [vmem:[%s365 + $0x260] sm:$0xff]
        %v808 = vld [vmem:[%s365 + $0x268] sm:$0xff]
        %v809 = vld [vmem:[%s365 + $0x270] sm:$0xff]
        %v810 = vld [vmem:[%s365 + $0x278] sm:$0xff]
        %v811 = vld [vmem:[%s365 + $0x280] sm:$0xff]
        %v812 = vld [vmem:[%s365 + $0x288] sm:$0xff]
        %v813 = vld [vmem:[%s365 + $0x290] sm:$0xff]
        %v814 = vld [vmem:[%s365 + $0x298] sm:$0xff]
        %v815 = vld [vmem:[%s365 + $0x300] sm:$0xff]
        %v816 = vld [vmem:[%s365 + $0x308] sm:$0xff]
        %v817 = vld [vmem:[%s365 + $0x310] sm:$0xff]
        %v818 = vld [vmem:[%s365 + $0x318] sm:$0xff]
        %v819 = vld [vmem:[%s365 + $0x320] sm:$0xff]
        %v820 = vld [vmem:[%s365 + $0x328] sm:$0xff]
        %v821 = vld [vmem:[%s365 + $0x330] sm:$0xff]
        %v822 = vld [vmem:[%s365 + $0x338] sm:$0xff]
        %v823 = vld [vmem:[%s365 + $0x340] sm:$0xff]
        %v824 = vld [vmem:[%s365 + $0x348] sm:$0xff]
        %v825 = vld [vmem:[%s365 + $0x350] sm:$0xff]
        %v826 = vld [vmem:[%s365 + $0x358] sm:$0xff]
        %v827 = vld [vmem:[%s365 + $0x3c0] sm:$0xff]
        %v828 = vld [vmem:[%s365 + $0x3c8] sm:$0xff]
        %v829 = vld [vmem:[%s365 + $0x3d0] sm:$0xff]
        %v830 = vld [vmem:[%s365 + $0x3d8] sm:$0xff]
        %v831 = vld [vmem:[%s365 + $0x3e0] sm:$0xff]
        %v832 = vld [vmem:[%s365 + $0x3e8] sm:$0xff]
        %v833 = vld [vmem:[%s365 + $0x3f0] sm:$0xff]
        %v834 = vld [vmem:[%s365 + $0x3f8] sm:$0xff]
        %v835 = vld [vmem:[%s365 + $0x400] sm:$0xff]
        %v836 = vld [vmem:[%s365 + $0x408] sm:$0xff]
        %v837 = vld [vmem:[%s365 + $0x410] sm:$0xff]
        %v838 = vld [vmem:[%s365 + $0x418] sm:$0xff]
        %v839 = vld [vmem:[%s365 + $0x480] sm:$0xff]
        %v840 = vld [vmem:[%s365 + $0x488] sm:$0xff]
        %v841 = vld [vmem:[%s365 + $0x490] sm:$0xff]
        %v842 = vld [vmem:[%s365 + $0x498] sm:$0xff]
        %v843 = vld [vmem:[%s365 + $0x4a0] sm:$0xff]
        %v844 = vld [vmem:[%s365 + $0x4a8] sm:$0xff]
        %v845 = vld [vmem:[%s365 + $0x4b0] sm:$0xff]
        %v846 = vld [vmem:[%s365 + $0x4b8] sm:$0xff]
        %v847 = vld [vmem:[%s365 + $0x4c0] sm:$0xff]
        %v848 = vld [vmem:[%s365 + $0x4c8] sm:$0xff]
        %v849 = vld [vmem:[%s365 + $0x4d0] sm:$0xff]
        %v850 = vld [vmem:[%s365 + $0x4d8] sm:$0xff]
        %v851 = vld [vmem:[%s365 + $0x540] sm:$0xff]
        %v852 = vld [vmem:[%s365 + $0x548] sm:$0xff]
        %v853 = vld [vmem:[%s365 + $0x550] sm:$0xff]
        %v854 = vld [vmem:[%s365 + $0x558] sm:$0xff]
        %v855 = vld [vmem:[%s365 + $0x560] sm:$0xff]
        %v856 = vld [vmem:[%s365 + $0x568] sm:$0xff]
        %v857 = vld [vmem:[%s365 + $0x570] sm:$0xff]
        %v858 = vld [vmem:[%s365 + $0x578] sm:$0xff]
        %v859 = vld [vmem:[%s365 + $0x580] sm:$0xff]
        %v860 = vld [vmem:[%s365 + $0x588] sm:$0xff]
        %v861 = vld [vmem:[%s365 + $0x590] sm:$0xff]
        %v862 = vld [vmem:[%s365 + $0x598] sm:$0xff]
        %v863 = vld [vmem:[%s365 + $0x600] sm:$0xff]
        %v864 = vld [vmem:[%s365 + $0x608] sm:$0xff]
        %v865 = vld [vmem:[%s365 + $0x610] sm:$0xff]
        %v866 = vld [vmem:[%s365 + $0x618] sm:$0xff]
        %v867 = vld [vmem:[%s365 + $0x620] sm:$0xff]
        %v868 = vld [vmem:[%s365 + $0x628] sm:$0xff]
        %v869 = vld [vmem:[%s365 + $0x630] sm:$0xff]
        %v870 = vld [vmem:[%s365 + $0x638] sm:$0xff]
        %v871 = vld [vmem:[%s365 + $0x640] sm:$0xff]
        %v872 = vld [vmem:[%s365 + $0x648] sm:$0xff]
        %v873 = vld [vmem:[%s365 + $0x650] sm:$0xff]
        %v874 = vld [vmem:[%s365 + $0x658] sm:$0xff]
        %v875 = vld [vmem:[%s365 + $0x6c0] sm:$0xff]
        %v876 = vld [vmem:[%s365 + $0x6c8] sm:$0xff]
        %v877 = vld [vmem:[%s365 + $0x6d0] sm:$0xff]
        %v878 = vld [vmem:[%s365 + $0x6d8] sm:$0xff]
        %v879 = vld [vmem:[%s365 + $0x6e0] sm:$0xff]
        %v880 = vld [vmem:[%s365 + $0x6e8] sm:$0xff]
        %v881 = vld [vmem:[%s365 + $0x6f0] sm:$0xff]
        %v882 = vld [vmem:[%s365 + $0x6f8] sm:$0xff]
        %v883 = vld [vmem:[%s365 + $0x700] sm:$0xff]
        %v884 = vld [vmem:[%s365 + $0x708] sm:$0xff]
        %v885 = vld [vmem:[%s365 + $0x710] sm:$0xff]
        %v886 = vld [vmem:[%s365 + $0x718] sm:$0xff]
        %v887 = vld [vmem:[%s365 + $0x780] sm:$0xff]
        %v888 = vld [vmem:[%s365 + $0x788] sm:$0xff]
        %v889 = vld [vmem:[%s365 + $0x790] sm:$0xff]
        %v890 = vld [vmem:[%s365 + $0x798] sm:$0xff]
        %v891 = vld [vmem:[%s365 + $0x7a0] sm:$0xff]
        %v892 = vld [vmem:[%s365 + $0x7a8] sm:$0xff]
        %v893 = vld [vmem:[%s365 + $0x7b0] sm:$0xff]
        %v894 = vld [vmem:[%s365 + $0x7b8] sm:$0xff]
        %v895 = vld [vmem:[%s365 + $0x7c0] sm:$0xff]
        %v896 = vld [vmem:[%s365 + $0x7c8] sm:$0xff]
        %v897 = vld [vmem:[%s365 + $0x7d0] sm:$0xff]
        %v898 = vld [vmem:[%s365 + $0x7d8] sm:$0xff]
        %v899 = vld [vmem:[%s365 + $0x840] sm:$0xff]
        %v900 = vld [vmem:[%s365 + $0x848] sm:$0xff]
        %v901 = vld [vmem:[%s365 + $0x850] sm:$0xff]
        %v902 = vld [vmem:[%s365 + $0x858] sm:$0xff]
        %v903 = vld [vmem:[%s365 + $0x860] sm:$0xff]
        %v904 = vld [vmem:[%s365 + $0x868] sm:$0xff]
        %v905 = vld [vmem:[%s365 + $0x870] sm:$0xff]
        %v906 = vld [vmem:[%s365 + $0x878] sm:$0xff]
        %v907 = vld [vmem:[%s365 + $0x880] sm:$0xff]
        %v908 = vld [vmem:[%s365 + $0x888] sm:$0xff]
        %v909 = vld [vmem:[%s365 + $0x890] sm:$0xff]
        %v910 = vld [vmem:[%s365 + $0x898] sm:$0xff]
        %v911 = vld [vmem:[%s365 + $0x900] sm:$0xff]
        %v912 = vld [vmem:[%s365 + $0x908] sm:$0xff]
        %v913 = vld [vmem:[%s365 + $0x910] sm:$0xff]
        %v914 = vld [vmem:[%s365 + $0x918] sm:$0xff]
        %v915 = vld [vmem:[%s365 + $0x920] sm:$0xff]
        %v916 = vld [vmem:[%s365 + $0x928] sm:$0xff]
        %v917 = vld [vmem:[%s365 + $0x930] sm:$0xff]
        %v918 = vld [vmem:[%s365 + $0x938] sm:$0xff]
        %v919 = vld [vmem:[%s365 + $0x940] sm:$0xff]
        %v920 = vld [vmem:[%s365 + $0x948] sm:$0xff]
        %v921 = vld [vmem:[%s365 + $0x950] sm:$0xff]
        %v922 = vld [vmem:[%s365 + $0x958] sm:$0xff]
        %v923 = vld [vmem:[%s365 + $0x9c0] sm:$0xff]
        %v924 = vld [vmem:[%s365 + $0x9c8] sm:$0xff]
        %v925 = vld [vmem:[%s365 + $0x9d0] sm:$0xff]
        %v926 = vld [vmem:[%s365 + $0x9d8] sm:$0xff]
        %v927 = vld [vmem:[%s365 + $0x9e0] sm:$0xff]
        %v928 = vld [vmem:[%s365 + $0x9e8] sm:$0xff]
        %v929 = vld [vmem:[%s365 + $0x9f0] sm:$0xff]
        %v930 = vld [vmem:[%s365 + $0x9f8] sm:$0xff]
        %v931 = vld [vmem:[%s365 + $0xa00] sm:$0xff]
        %v932 = vld [vmem:[%s365 + $0xa08] sm:$0xff]
        %v933 = vld [vmem:[%s365 + $0xa10] sm:$0xff]
        %v934 = vld [vmem:[%s365 + $0xa18] sm:$0xff]
        %v935 = vld [vmem:[%s365 + $0xa80] sm:$0xff]
        %v936 = vld [vmem:[%s365 + $0xa88] sm:$0xff]
        %v937 = vld [vmem:[%s365 + $0xa90] sm:$0xff]
        %v938 = vld [vmem:[%s365 + $0xa98] sm:$0xff]
        %v939 = vld [vmem:[%s365 + $0xaa0] sm:$0xff]
        %v940 = vld [vmem:[%s365 + $0xaa8] sm:$0xff]
        %v941 = vld [vmem:[%s365 + $0xab0] sm:$0xff]
        %v942 = vld [vmem:[%s365 + $0xab8] sm:$0xff]
        %v943 = vld [vmem:[%s365 + $0xac0] sm:$0xff]
        %v944 = vld [vmem:[%s365 + $0xac8] sm:$0xff]
        %v945 = vld [vmem:[%s365 + $0xad0] sm:$0xff]
        %v946 = vld [vmem:[%s365 + $0xad8] sm:$0xff]
        %v947 = vld [vmem:[%s365 + $0xb40] sm:$0xff]
        %v948 = vld [vmem:[%s365 + $0xb48] sm:$0xff]
        %v949 = vld [vmem:[%s365 + $0xb50] sm:$0xff]
        %v950 = vld [vmem:[%s365 + $0xb58] sm:$0xff]
        %v951 = vld [vmem:[%s365 + $0xb60] sm:$0xff]
        %v952 = vld [vmem:[%s365 + $0xb68] sm:$0xff]
        %v953 = vld [vmem:[%s365 + $0xb70] sm:$0xff]
        %v954 = vld [vmem:[%s365 + $0xb78] sm:$0xff]
        %v955 = vld [vmem:[%s365 + $0xb80] sm:$0xff]
        %v956 = vld [vmem:[%s365 + $0xb88] sm:$0xff]
        %v957 = vld [vmem:[%s365 + $0xb90] sm:$0xff]
        %v958 = vld [vmem:[%s365 + $0xb98] sm:$0xff]
        %v959 = vld [vmem:[%s374] sm:$0xff]
        %v960 = vld [vmem:[%s374 + $0x8] sm:$0xff]
        %v961 = vld [vmem:[%s374 + $0x10] sm:$0xff]
        %v1154 = vunpack.c.l.b16 %v767
        %v1155 = vunpack.c.h.b16 %v767
        %v1156 = vunpack.c.l.b16 %v768
        %v1157 = vunpack.c.h.b16 %v768
        %v1158 = vunpack.c.l.b16 %v769
        %v1159 = vunpack.c.h.b16 %v769
        %v1160 = vunpack.c.l.b16 %v770
        %v1161 = vunpack.c.h.b16 %v770
        %v1162 = vunpack.c.l.b16 %v771
        %v1163 = vunpack.c.h.b16 %v771
        %v1164 = vunpack.c.l.b16 %v772
        %v1165 = vunpack.c.h.b16 %v772
        %v1166 = vunpack.c.l.b16 %v773
        %v1167 = vunpack.c.h.b16 %v773
        %v1168 = vunpack.c.l.b16 %v774
        %v1169 = vunpack.c.h.b16 %v774
        %v1170 = vunpack.c.l.b16 %v775
        %v1171 = vunpack.c.h.b16 %v775
        %v1172 = vunpack.c.l.b16 %v776
        %v1173 = vunpack.c.h.b16 %v776
        %v1174 = vunpack.c.l.b16 %v777
        %v1175 = vunpack.c.h.b16 %v777
        %v1176 = vunpack.c.l.b16 %v778
        %v1177 = vunpack.c.h.b16 %v778
        %v1178 = vunpack.c.l.b16 %v779
        %v1179 = vunpack.c.h.b16 %v779
        %v1180 = vunpack.c.l.b16 %v780
        %v1181 = vunpack.c.h.b16 %v780
        %v1182 = vunpack.c.l.b16 %v781
        %v1183 = vunpack.c.h.b16 %v781
        %v1184 = vunpack.c.l.b16 %v782
        %v1185 = vunpack.c.h.b16 %v782
        %v1186 = vunpack.c.l.b16 %v783
        %v1187 = vunpack.c.h.b16 %v783
        %v1188 = vunpack.c.l.b16 %v784
        %v1189 = vunpack.c.h.b16 %v784
        %v1190 = vunpack.c.l.b16 %v785
        %v1191 = vunpack.c.h.b16 %v785
        %v1192 = vunpack.c.l.b16 %v786
        %v1193 = vunpack.c.h.b16 %v786
        %v1194 = vunpack.c.l.b16 %v787
        %v1195 = vunpack.c.h.b16 %v787
        %v1196 = vunpack.c.l.b16 %v788
        %v1197 = vunpack.c.h.b16 %v788
        %v1198 = vunpack.c.l.b16 %v789
        %v1199 = vunpack.c.h.b16 %v789
        %v1200 = vunpack.c.l.b16 %v790
        %v1201 = vunpack.c.h.b16 %v790
        %v1202 = vunpack.c.l.b16 %v791
        %v1203 = vunpack.c.h.b16 %v791
        %v1204 = vunpack.c.l.b16 %v792
        %v1205 = vunpack.c.h.b16 %v792
        %v1206 = vunpack.c.l.b16 %v793
        %v1207 = vunpack.c.h.b16 %v793
        %v1208 = vunpack.c.l.b16 %v794
        %v1209 = vunpack.c.h.b16 %v794
        %v1210 = vunpack.c.l.b16 %v795
        %v1211 = vunpack.c.h.b16 %v795
        %v1212 = vunpack.c.l.b16 %v796
        %v1213 = vunpack.c.h.b16 %v796
        %v1214 = vunpack.c.l.b16 %v797
        %v1215 = vunpack.c.h.b16 %v797
        %v1216 = vunpack.c.l.b16 %v798
        %v1217 = vunpack.c.h.b16 %v798
        %v1218 = vunpack.c.l.b16 %v799
        %v1219 = vunpack.c.h.b16 %v799
        %v1220 = vunpack.c.l.b16 %v800
        %v1221 = vunpack.c.h.b16 %v800
        %v1222 = vunpack.c.l.b16 %v801
        %v1223 = vunpack.c.h.b16 %v801
        %v1224 = vunpack.c.l.b16 %v802
        %v1225 = vunpack.c.h.b16 %v802
        %v1226 = vunpack.c.l.b16 %v803
        %v1227 = vunpack.c.h.b16 %v803
        %v1228 = vunpack.c.l.b16 %v804
        %v1229 = vunpack.c.h.b16 %v804
        %v1230 = vunpack.c.l.b16 %v805
        %v1231 = vunpack.c.h.b16 %v805
        %v1232 = vunpack.c.l.b16 %v806
        %v1233 = vunpack.c.h.b16 %v806
        %v1234 = vunpack.c.l.b16 %v807
        %v1235 = vunpack.c.h.b16 %v807
        %v1236 = vunpack.c.l.b16 %v808
        %v1237 = vunpack.c.h.b16 %v808
        %v1238 = vunpack.c.l.b16 %v809
        %v1239 = vunpack.c.h.b16 %v809
        %v1240 = vunpack.c.l.b16 %v810
        %v1241 = vunpack.c.h.b16 %v810
        %v1242 = vunpack.c.l.b16 %v811
        %v1243 = vunpack.c.h.b16 %v811
        %v1244 = vunpack.c.l.b16 %v812
        %v1245 = vunpack.c.h.b16 %v812
        %v1246 = vunpack.c.l.b16 %v813
        %v1247 = vunpack.c.h.b16 %v813
        %v1248 = vunpack.c.l.b16 %v814
        %v1249 = vunpack.c.h.b16 %v814
        %v1250 = vunpack.c.l.b16 %v815
        %v1251 = vunpack.c.h.b16 %v815
        %v1252 = vunpack.c.l.b16 %v816
        %v1253 = vunpack.c.h.b16 %v816
        %v1254 = vunpack.c.l.b16 %v817
        %v1255 = vunpack.c.h.b16 %v817
        %v1256 = vunpack.c.l.b16 %v818
        %v1257 = vunpack.c.h.b16 %v818
        %v1258 = vunpack.c.l.b16 %v819
        %v1259 = vunpack.c.h.b16 %v819
        %v1260 = vunpack.c.l.b16 %v820
        %v1261 = vunpack.c.h.b16 %v820
        %v1262 = vunpack.c.l.b16 %v821
        %v1263 = vunpack.c.h.b16 %v821
        %v1264 = vunpack.c.l.b16 %v822
        %v1265 = vunpack.c.h.b16 %v822
        %v1266 = vunpack.c.l.b16 %v823
        %v1267 = vunpack.c.h.b16 %v823
        %v1268 = vunpack.c.l.b16 %v824
        %v1269 = vunpack.c.h.b16 %v824
        %v1270 = vunpack.c.l.b16 %v825
        %v1271 = vunpack.c.h.b16 %v825
        %v1272 = vunpack.c.l.b16 %v826
        %v1273 = vunpack.c.h.b16 %v826
        %v1274 = vunpack.c.l.b16 %v827
        %v1275 = vunpack.c.h.b16 %v827
        %v1276 = vunpack.c.l.b16 %v828
        %v1277 = vunpack.c.h.b16 %v828
        %v1278 = vunpack.c.l.b16 %v829
        %v1279 = vunpack.c.h.b16 %v829
        %v1280 = vunpack.c.l.b16 %v830
        %v1281 = vunpack.c.h.b16 %v830
        %v1282 = vunpack.c.l.b16 %v831
        %v1283 = vunpack.c.h.b16 %v831
        %v1284 = vunpack.c.l.b16 %v832
        %v1285 = vunpack.c.h.b16 %v832
        %v1286 = vunpack.c.l.b16 %v833
        %v1287 = vunpack.c.h.b16 %v833
        %v1288 = vunpack.c.l.b16 %v834
        %v1289 = vunpack.c.h.b16 %v834
        %v1290 = vunpack.c.l.b16 %v835
        %v1291 = vunpack.c.h.b16 %v835
        %v1292 = vunpack.c.l.b16 %v836
        %v1293 = vunpack.c.h.b16 %v836
        %v1294 = vunpack.c.l.b16 %v837
        %v1295 = vunpack.c.h.b16 %v837
        %v1296 = vunpack.c.l.b16 %v838
        %v1297 = vunpack.c.h.b16 %v838
        %v1298 = vunpack.c.l.b16 %v839
        %v1299 = vunpack.c.h.b16 %v839
        %v1300 = vunpack.c.l.b16 %v840
        %v1301 = vunpack.c.h.b16 %v840
        %v1302 = vunpack.c.l.b16 %v841
        %v1303 = vunpack.c.h.b16 %v841
        %v1304 = vunpack.c.l.b16 %v842
        %v1305 = vunpack.c.h.b16 %v842
        %v1306 = vunpack.c.l.b16 %v843
        %v1307 = vunpack.c.h.b16 %v843
        %v1308 = vunpack.c.l.b16 %v844
        %v1309 = vunpack.c.h.b16 %v844
        %v1310 = vunpack.c.l.b16 %v845
        %v1311 = vunpack.c.h.b16 %v845
        %v1312 = vunpack.c.l.b16 %v846
        %v1313 = vunpack.c.h.b16 %v846
        %v1314 = vunpack.c.l.b16 %v847
        %v1315 = vunpack.c.h.b16 %v847
        %v1316 = vunpack.c.l.b16 %v848
        %v1317 = vunpack.c.h.b16 %v848
        %v1318 = vunpack.c.l.b16 %v849
        %v1319 = vunpack.c.h.b16 %v849
        %v1320 = vunpack.c.l.b16 %v850
        %v1321 = vunpack.c.h.b16 %v850
        %v1322 = vunpack.c.l.b16 %v851
        %v1323 = vunpack.c.h.b16 %v851
        %v1324 = vunpack.c.l.b16 %v852
        %v1325 = vunpack.c.h.b16 %v852
        %v1326 = vunpack.c.l.b16 %v853
        %v1327 = vunpack.c.h.b16 %v853
        %v1328 = vunpack.c.l.b16 %v854
        %v1329 = vunpack.c.h.b16 %v854
        %v1330 = vunpack.c.l.b16 %v855
        %v1331 = vunpack.c.h.b16 %v855
        %v1332 = vunpack.c.l.b16 %v856
        %v1333 = vunpack.c.h.b16 %v856
        %v1334 = vunpack.c.l.b16 %v857
        %v1335 = vunpack.c.h.b16 %v857
        %v1336 = vunpack.c.l.b16 %v858
        %v1337 = vunpack.c.h.b16 %v858
        %v1338 = vunpack.c.l.b16 %v859
        %v1339 = vunpack.c.h.b16 %v859
        %v1340 = vunpack.c.l.b16 %v860
        %v1341 = vunpack.c.h.b16 %v860
        %v1342 = vunpack.c.l.b16 %v861
        %v1343 = vunpack.c.h.b16 %v861
        %v1344 = vunpack.c.l.b16 %v862
        %v1345 = vunpack.c.h.b16 %v862
        %v1346 = vunpack.c.l.b16 %v863
        %v1347 = vunpack.c.h.b16 %v863
        %v1348 = vunpack.c.l.b16 %v864
        %v1349 = vunpack.c.h.b16 %v864
        %v1350 = vunpack.c.l.b16 %v865
        %v1351 = vunpack.c.h.b16 %v865
        %v1352 = vunpack.c.l.b16 %v866
        %v1353 = vunpack.c.h.b16 %v866
        %v1354 = vunpack.c.l.b16 %v867
        %v1355 = vunpack.c.h.b16 %v867
        %v1356 = vunpack.c.l.b16 %v868
        %v1357 = vunpack.c.h.b16 %v868
        %v1358 = vunpack.c.l.b16 %v869
        %v1359 = vunpack.c.h.b16 %v869
        %v1360 = vunpack.c.l.b16 %v870
        %v1361 = vunpack.c.h.b16 %v870
        %v1362 = vunpack.c.l.b16 %v871
        %v1363 = vunpack.c.h.b16 %v871
        %v1364 = vunpack.c.l.b16 %v872
        %v1365 = vunpack.c.h.b16 %v872
        %v1366 = vunpack.c.l.b16 %v873
        %v1367 = vunpack.c.h.b16 %v873
        %v1368 = vunpack.c.l.b16 %v874
        %v1369 = vunpack.c.h.b16 %v874
        %v1370 = vunpack.c.l.b16 %v875
        %v1371 = vunpack.c.h.b16 %v875
        %v1372 = vunpack.c.l.b16 %v876
        %v1373 = vunpack.c.h.b16 %v876
        %v1374 = vunpack.c.l.b16 %v877
        %v1375 = vunpack.c.h.b16 %v877
        %v1376 = vunpack.c.l.b16 %v878
        %v1377 = vunpack.c.h.b16 %v878
        %v1378 = vunpack.c.l.b16 %v879
        %v1379 = vunpack.c.h.b16 %v879
        %v1380 = vunpack.c.l.b16 %v880
        %v1381 = vunpack.c.h.b16 %v880
        %v1382 = vunpack.c.l.b16 %v881
        %v1383 = vunpack.c.h.b16 %v881
        %v1384 = vunpack.c.l.b16 %v882
        %v1385 = vunpack.c.h.b16 %v882
        %v1386 = vunpack.c.l.b16 %v883
        %v1387 = vunpack.c.h.b16 %v883
        %v1388 = vunpack.c.l.b16 %v884
        %v1389 = vunpack.c.h.b16 %v884
        %v1390 = vunpack.c.l.b16 %v885
        %v1391 = vunpack.c.h.b16 %v885
        %v1392 = vunpack.c.l.b16 %v886
        %v1393 = vunpack.c.h.b16 %v886
        %v1394 = vunpack.c.l.b16 %v887
        %v1395 = vunpack.c.h.b16 %v887
        %v1396 = vunpack.c.l.b16 %v888
        %v1397 = vunpack.c.h.b16 %v888
        %v1398 = vunpack.c.l.b16 %v889
        %v1399 = vunpack.c.h.b16 %v889
        %v1400 = vunpack.c.l.b16 %v890
        %v1401 = vunpack.c.h.b16 %v890
        %v1402 = vunpack.c.l.b16 %v891
        %v1403 = vunpack.c.h.b16 %v891
        %v1404 = vunpack.c.l.b16 %v892
        %v1405 = vunpack.c.h.b16 %v892
        %v1406 = vunpack.c.l.b16 %v893
        %v1407 = vunpack.c.h.b16 %v893
        %v1408 = vunpack.c.l.b16 %v894
        %v1409 = vunpack.c.h.b16 %v894
        %v1410 = vunpack.c.l.b16 %v895
        %v1411 = vunpack.c.h.b16 %v895
        %v1412 = vunpack.c.l.b16 %v896
        %v1413 = vunpack.c.h.b16 %v896
        %v1414 = vunpack.c.l.b16 %v897
        %v1415 = vunpack.c.h.b16 %v897
        %v1416 = vunpack.c.l.b16 %v898
        %v1417 = vunpack.c.h.b16 %v898
        %v1418 = vunpack.c.l.b16 %v899
        %v1419 = vunpack.c.h.b16 %v899
        %v1420 = vunpack.c.l.b16 %v900
        %v1421 = vunpack.c.h.b16 %v900
        %v1422 = vunpack.c.l.b16 %v901
        %v1423 = vunpack.c.h.b16 %v901
        %v1424 = vunpack.c.l.b16 %v902
        %v1425 = vunpack.c.h.b16 %v902
        %v1426 = vunpack.c.l.b16 %v903
        %v1427 = vunpack.c.h.b16 %v903
        %v1428 = vunpack.c.l.b16 %v904
        %v1429 = vunpack.c.h.b16 %v904
        %v1430 = vunpack.c.l.b16 %v905
        %v1431 = vunpack.c.h.b16 %v905
        %v1432 = vunpack.c.l.b16 %v906
        %v1433 = vunpack.c.h.b16 %v906
        %v1434 = vunpack.c.l.b16 %v907
        %v1435 = vunpack.c.h.b16 %v907
        %v1436 = vunpack.c.l.b16 %v908
        %v1437 = vunpack.c.h.b16 %v908
        %v1438 = vunpack.c.l.b16 %v909
        %v1439 = vunpack.c.h.b16 %v909
        %v1440 = vunpack.c.l.b16 %v910
        %v1441 = vunpack.c.h.b16 %v910
        %v1442 = vunpack.c.l.b16 %v911
        %v1443 = vunpack.c.h.b16 %v911
        %v1444 = vunpack.c.l.b16 %v912
        %v1445 = vunpack.c.h.b16 %v912
        %v1446 = vunpack.c.l.b16 %v913
        %v1447 = vunpack.c.h.b16 %v913
        %v1448 = vunpack.c.l.b16 %v914
        %v1449 = vunpack.c.h.b16 %v914
        %v1450 = vunpack.c.l.b16 %v915
        %v1451 = vunpack.c.h.b16 %v915
        %v1452 = vunpack.c.l.b16 %v916
        %v1453 = vunpack.c.h.b16 %v916
        %v1454 = vunpack.c.l.b16 %v917
        %v1455 = vunpack.c.h.b16 %v917
        %v1456 = vunpack.c.l.b16 %v918
        %v1457 = vunpack.c.h.b16 %v918
        %v1458 = vunpack.c.l.b16 %v919
        %v1459 = vunpack.c.h.b16 %v919
        %v1460 = vunpack.c.l.b16 %v920
        %v1461 = vunpack.c.h.b16 %v920
        %v1462 = vunpack.c.l.b16 %v921
        %v1463 = vunpack.c.h.b16 %v921
        %v1464 = vunpack.c.l.b16 %v922
        %v1465 = vunpack.c.h.b16 %v922
        %v1466 = vunpack.c.l.b16 %v923
        %v1467 = vunpack.c.h.b16 %v923
        %v1468 = vunpack.c.l.b16 %v924
        %v1469 = vunpack.c.h.b16 %v924
        %v1470 = vunpack.c.l.b16 %v925
        %v1471 = vunpack.c.h.b16 %v925
        %v1472 = vunpack.c.l.b16 %v926
        %v1473 = vunpack.c.h.b16 %v926
        %v1474 = vunpack.c.l.b16 %v927
        %v1475 = vunpack.c.h.b16 %v927
        %v1476 = vunpack.c.l.b16 %v928
        %v1477 = vunpack.c.h.b16 %v928
        %v1478 = vunpack.c.l.b16 %v929
        %v1479 = vunpack.c.h.b16 %v929
        %v1480 = vunpack.c.l.b16 %v930
        %v1481 = vunpack.c.h.b16 %v930
        %v1482 = vunpack.c.l.b16 %v931
        %v1483 = vunpack.c.h.b16 %v931
        %v1484 = vunpack.c.l.b16 %v932
        %v1485 = vunpack.c.h.b16 %v932
        %v1486 = vunpack.c.l.b16 %v933
        %v1487 = vunpack.c.h.b16 %v933
        %v1488 = vunpack.c.l.b16 %v934
        %v1489 = vunpack.c.h.b16 %v934
        %v1490 = vunpack.c.l.b16 %v935
        %v1491 = vunpack.c.h.b16 %v935
        %v1492 = vunpack.c.l.b16 %v936
        %v1493 = vunpack.c.h.b16 %v936
        %v1494 = vunpack.c.l.b16 %v937
        %v1495 = vunpack.c.h.b16 %v937
        %v1496 = vunpack.c.l.b16 %v938
        %v1497 = vunpack.c.h.b16 %v938
        %v1498 = vunpack.c.l.b16 %v939
        %v1499 = vunpack.c.h.b16 %v939
        %v1500 = vunpack.c.l.b16 %v940
        %v1501 = vunpack.c.h.b16 %v940
        %v1502 = vunpack.c.l.b16 %v941
        %v1503 = vunpack.c.h.b16 %v941
        %v1504 = vunpack.c.l.b16 %v942
        %v1505 = vunpack.c.h.b16 %v942
        %v1506 = vunpack.c.l.b16 %v943
        %v1507 = vunpack.c.h.b16 %v943
        %v1508 = vunpack.c.l.b16 %v944
        %v1509 = vunpack.c.h.b16 %v944
        %v1510 = vunpack.c.l.b16 %v945
        %v1511 = vunpack.c.h.b16 %v945
        %v1512 = vunpack.c.l.b16 %v946
        %v1513 = vunpack.c.h.b16 %v946
        %v1514 = vunpack.c.l.b16 %v947
        %v1515 = vunpack.c.h.b16 %v947
        %v1516 = vunpack.c.l.b16 %v948
        %v1517 = vunpack.c.h.b16 %v948
        %v1518 = vunpack.c.l.b16 %v949
        %v1519 = vunpack.c.h.b16 %v949
        %v1520 = vunpack.c.l.b16 %v950
        %v1521 = vunpack.c.h.b16 %v950
        %v1522 = vunpack.c.l.b16 %v951
        %v1523 = vunpack.c.h.b16 %v951
        %v1524 = vunpack.c.l.b16 %v952
        %v1525 = vunpack.c.h.b16 %v952
        %v1526 = vunpack.c.l.b16 %v953
        %v1527 = vunpack.c.h.b16 %v953
        %v1528 = vunpack.c.l.b16 %v954
        %v1529 = vunpack.c.h.b16 %v954
        %v1530 = vunpack.c.l.b16 %v955
        %v1531 = vunpack.c.h.b16 %v955
        %v1532 = vunpack.c.l.b16 %v956
        %v1533 = vunpack.c.h.b16 %v956
        %v1534 = vunpack.c.l.b16 %v957
        %v1535 = vunpack.c.h.b16 %v957
        %v1536 = vunpack.c.l.b16 %v958
        %v1537 = vunpack.c.h.b16 %v958
        %v1538 = vpack.c.b16 %v1178, %v1154
        %v1539 = vpack.c.b16 %v1179, %v1155
        %v1540 = vpack.c.b16 %v1180, %v1156
        %v1541 = vpack.c.b16 %v1181, %v1157
        %v1542 = vpack.c.b16 %v1182, %v1158
        %v1543 = vpack.c.b16 %v1183, %v1159
        %v1544 = vpack.c.b16 %v1184, %v1160
        %v1545 = vpack.c.b16 %v1185, %v1161
        %v1546 = vpack.c.b16 %v1186, %v1162
        %v1547 = vpack.c.b16 %v1187, %v1163
        %v1548 = vpack.c.b16 %v1188, %v1164
        %v1549 = vpack.c.b16 %v1189, %v1165
        %v1550 = vpack.c.b16 %v1190, %v1166
        %v1551 = vpack.c.b16 %v1191, %v1167
        %v1552 = vpack.c.b16 %v1192, %v1168
        %v1553 = vpack.c.b16 %v1193, %v1169
        %v1554 = vpack.c.b16 %v1194, %v1170
        %v1555 = vpack.c.b16 %v1195, %v1171
        %v1556 = vpack.c.b16 %v1196, %v1172
        %v1557 = vpack.c.b16 %v1197, %v1173
        %v1558 = vpack.c.b16 %v1198, %v1174
        %v1559 = vpack.c.b16 %v1199, %v1175
        %v1560 = vpack.c.b16 %v1200, %v1176
        %v1561 = vpack.c.b16 %v1201, %v1177
        %v1562 = vpack.c.b16 %v1226, %v1202
        %v1563 = vpack.c.b16 %v1227, %v1203
        %v1564 = vpack.c.b16 %v1228, %v1204
        %v1565 = vpack.c.b16 %v1229, %v1205
        %v1566 = vpack.c.b16 %v1230, %v1206
        %v1567 = vpack.c.b16 %v1231, %v1207
        %v1568 = vpack.c.b16 %v1232, %v1208
        %v1569 = vpack.c.b16 %v1233, %v1209
        %v1570 = vpack.c.b16 %v1234, %v1210
        %v1571 = vpack.c.b16 %v1235, %v1211
        %v1572 = vpack.c.b16 %v1236, %v1212
        %v1573 = vpack.c.b16 %v1237, %v1213
        %v1574 = vpack.c.b16 %v1238, %v1214
        %v1575 = vpack.c.b16 %v1239, %v1215
        %v1576 = vpack.c.b16 %v1240, %v1216
        %v1577 = vpack.c.b16 %v1241, %v1217
        %v1578 = vpack.c.b16 %v1242, %v1218
        %v1579 = vpack.c.b16 %v1243, %v1219
        %v1580 = vpack.c.b16 %v1244, %v1220
        %v1581 = vpack.c.b16 %v1245, %v1221
        %v1582 = vpack.c.b16 %v1246, %v1222
        %v1583 = vpack.c.b16 %v1247, %v1223
        %v1584 = vpack.c.b16 %v1248, %v1224
        %v1585 = vpack.c.b16 %v1249, %v1225
        %v1586 = vpack.c.b16 %v1274, %v1250
        %v1587 = vpack.c.b16 %v1275, %v1251
        %v1588 = vpack.c.b16 %v1276, %v1252
        %v1589 = vpack.c.b16 %v1277, %v1253
        %v1590 = vpack.c.b16 %v1278, %v1254
        %v1591 = vpack.c.b16 %v1279, %v1255
        %v1592 = vpack.c.b16 %v1280, %v1256
        %v1593 = vpack.c.b16 %v1281, %v1257
        %v1594 = vpack.c.b16 %v1282, %v1258
        %v1595 = vpack.c.b16 %v1283, %v1259
        %v1596 = vpack.c.b16 %v1284, %v1260
        %v1597 = vpack.c.b16 %v1285, %v1261
        %v1598 = vpack.c.b16 %v1286, %v1262
        %v1599 = vpack.c.b16 %v1287, %v1263
        %v1600 = vpack.c.b16 %v1288, %v1264
        %v1601 = vpack.c.b16 %v1289, %v1265
        %v1602 = vpack.c.b16 %v1290, %v1266
        %v1603 = vpack.c.b16 %v1291, %v1267
        %v1604 = vpack.c.b16 %v1292, %v1268
        %v1605 = vpack.c.b16 %v1293, %v1269
        %v1606 = vpack.c.b16 %v1294, %v1270
        %v1607 = vpack.c.b16 %v1295, %v1271
        %v1608 = vpack.c.b16 %v1296, %v1272
        %v1609 = vpack.c.b16 %v1297, %v1273
        %v1610 = vpack.c.b16 %v1322, %v1298
        %v1611 = vpack.c.b16 %v1323, %v1299
        %v1612 = vpack.c.b16 %v1324, %v1300
        %v1613 = vpack.c.b16 %v1325, %v1301
        %v1614 = vpack.c.b16 %v1326, %v1302
        %v1615 = vpack.c.b16 %v1327, %v1303
        %v1616 = vpack.c.b16 %v1328, %v1304
        %v1617 = vpack.c.b16 %v1329, %v1305
        %v1618 = vpack.c.b16 %v1330, %v1306
        %v1619 = vpack.c.b16 %v1331, %v1307
        %v1620 = vpack.c.b16 %v1332, %v1308
        %v1621 = vpack.c.b16 %v1333, %v1309
        %v1622 = vpack.c.b16 %v1334, %v1310
        %v1623 = vpack.c.b16 %v1335, %v1311
        %v1624 = vpack.c.b16 %v1336, %v1312
        %v1625 = vpack.c.b16 %v1337, %v1313
        %v1626 = vpack.c.b16 %v1338, %v1314
        %v1627 = vpack.c.b16 %v1339, %v1315
        %v1628 = vpack.c.b16 %v1340, %v1316
        %v1629 = vpack.c.b16 %v1341, %v1317
        %v1630 = vpack.c.b16 %v1342, %v1318
        %v1631 = vpack.c.b16 %v1343, %v1319
        %v1632 = vpack.c.b16 %v1344, %v1320
        %v1633 = vpack.c.b16 %v1345, %v1321
        %v1634 = vpack.c.b16 %v1370, %v1346
        %v1635 = vpack.c.b16 %v1371, %v1347
        %v1636 = vpack.c.b16 %v1372, %v1348
        %v1637 = vpack.c.b16 %v1373, %v1349
        %v1638 = vpack.c.b16 %v1374, %v1350
        %v1639 = vpack.c.b16 %v1375, %v1351
        %v1640 = vpack.c.b16 %v1376, %v1352
        %v1641 = vpack.c.b16 %v1377, %v1353
        %v1642 = vpack.c.b16 %v1378, %v1354
        %v1643 = vpack.c.b16 %v1379, %v1355
        %v1644 = vpack.c.b16 %v1380, %v1356
        %v1645 = vpack.c.b16 %v1381, %v1357
        %v1646 = vpack.c.b16 %v1382, %v1358
        %v1647 = vpack.c.b16 %v1383, %v1359
        %v1648 = vpack.c.b16 %v1384, %v1360
        %v1649 = vpack.c.b16 %v1385, %v1361
        %v1650 = vpack.c.b16 %v1386, %v1362
        %v1651 = vpack.c.b16 %v1387, %v1363
        %v1652 = vpack.c.b16 %v1388, %v1364
        %v1653 = vpack.c.b16 %v1389, %v1365
        %v1654 = vpack.c.b16 %v1390, %v1366
        %v1655 = vpack.c.b16 %v1391, %v1367
        %v1656 = vpack.c.b16 %v1392, %v1368
        %v1657 = vpack.c.b16 %v1393, %v1369
        %v1658 = vpack.c.b16 %v1418, %v1394
        %v1659 = vpack.c.b16 %v1419, %v1395
        %v1660 = vpack.c.b16 %v1420, %v1396
        %v1661 = vpack.c.b16 %v1421, %v1397
        %v1662 = vpack.c.b16 %v1422, %v1398
        %v1663 = vpack.c.b16 %v1423, %v1399
        %v1664 = vpack.c.b16 %v1424, %v1400
        %v1665 = vpack.c.b16 %v1425, %v1401
        %v1666 = vpack.c.b16 %v1426, %v1402
        %v1667 = vpack.c.b16 %v1427, %v1403
        %v1668 = vpack.c.b16 %v1428, %v1404
        %v1669 = vpack.c.b16 %v1429, %v1405
        %v1670 = vpack.c.b16 %v1430, %v1406
        %v1671 = vpack.c.b16 %v1431, %v1407
        %v1672 = vpack.c.b16 %v1432, %v1408
        %v1673 = vpack.c.b16 %v1433, %v1409
        %v1674 = vpack.c.b16 %v1434, %v1410
        %v1675 = vpack.c.b16 %v1435, %v1411
        %v1676 = vpack.c.b16 %v1436, %v1412
        %v1677 = vpack.c.b16 %v1437, %v1413
        %v1678 = vpack.c.b16 %v1438, %v1414
        %v1679 = vpack.c.b16 %v1439, %v1415
        %v1680 = vpack.c.b16 %v1440, %v1416
        %v1681 = vpack.c.b16 %v1441, %v1417
        %v1682 = vpack.c.b16 %v1466, %v1442
        %v1683 = vpack.c.b16 %v1467, %v1443
        %v1684 = vpack.c.b16 %v1468, %v1444
        %v1685 = vpack.c.b16 %v1469, %v1445
        %v1686 = vpack.c.b16 %v1470, %v1446
        %v1687 = vpack.c.b16 %v1471, %v1447
        %v1688 = vpack.c.b16 %v1472, %v1448
        %v1689 = vpack.c.b16 %v1473, %v1449
        %v1690 = vpack.c.b16 %v1474, %v1450
        %v1691 = vpack.c.b16 %v1475, %v1451
        %v1692 = vpack.c.b16 %v1476, %v1452
        %v1693 = vpack.c.b16 %v1477, %v1453
        %v1694 = vpack.c.b16 %v1478, %v1454
        %v1695 = vpack.c.b16 %v1479, %v1455
        %v1696 = vpack.c.b16 %v1480, %v1456
        %v1697 = vpack.c.b16 %v1481, %v1457
        %v1698 = vpack.c.b16 %v1482, %v1458
        %v1699 = vpack.c.b16 %v1483, %v1459
        %v1700 = vpack.c.b16 %v1484, %v1460
        %v1701 = vpack.c.b16 %v1485, %v1461
        %v1702 = vpack.c.b16 %v1486, %v1462
        %v1703 = vpack.c.b16 %v1487, %v1463
        %v1704 = vpack.c.b16 %v1488, %v1464
        %v1705 = vpack.c.b16 %v1489, %v1465
        %v1706 = vpack.c.b16 %v1514, %v1490
        %v1707 = vpack.c.b16 %v1515, %v1491
        %v1708 = vpack.c.b16 %v1516, %v1492
        %v1709 = vpack.c.b16 %v1517, %v1493
        %v1710 = vpack.c.b16 %v1518, %v1494
        %v1711 = vpack.c.b16 %v1519, %v1495
        %v1712 = vpack.c.b16 %v1520, %v1496
        %v1713 = vpack.c.b16 %v1521, %v1497
        %v1714 = vpack.c.b16 %v1522, %v1498
        %v1715 = vpack.c.b16 %v1523, %v1499
        %v1716 = vpack.c.b16 %v1524, %v1500
        %v1717 = vpack.c.b16 %v1525, %v1501
        %v1718 = vpack.c.b16 %v1526, %v1502
        %v1719 = vpack.c.b16 %v1527, %v1503
        %v1720 = vpack.c.b16 %v1528, %v1504
        %v1721 = vpack.c.b16 %v1529, %v1505
        %v1722 = vpack.c.b16 %v1530, %v1506
        %v1723 = vpack.c.b16 %v1531, %v1507
        %v1724 = vpack.c.b16 %v1532, %v1508
        %v1725 = vpack.c.b16 %v1533, %v1509
        %v1726 = vpack.c.b16 %v1534, %v1510
        %v1727 = vpack.c.b16 %v1535, %v1511
        %v1728 = vpack.c.b16 %v1536, %v1512
        %v1729 = vpack.c.b16 %v1537, %v1513
        %v1925 = vlaneseq
        %v1926 = vshrl.u32 %v1925, 7
        %v1927 = vsub.s32 0, %v1926
        %v1928 = vrot.slane %v959, %v1927
        %v1929 = vlaneseq
        %v1930 = vshrl.u32 %v1929, 7
        %v1931 = vsub.s32 1, %v1930
        %v1932 = vrot.slane %v959, %v1931
        %v1933 = vlaneseq
        %v1934 = vshrl.u32 %v1933, 7
        %v1935 = vsub.s32 2, %v1934
        %v1936 = vrot.slane %v959, %v1935
        %v1937 = vlaneseq
        %v1938 = vshrl.u32 %v1937, 7
        %v1939 = vsub.s32 3, %v1938
        %v1940 = vrot.slane %v959, %v1939
        %v1941 = vlaneseq
        %v1942 = vshrl.u32 %v1941, 7
        %v1943 = vsub.s32 4, %v1942
        %v1944 = vrot.slane %v959, %v1943
        %v1945 = vlaneseq
        %v1946 = vshrl.u32 %v1945, 7
        %v1947 = vsub.s32 5, %v1946
        %v1948 = vrot.slane %v959, %v1947
        %v1949 = vlaneseq
        %v1950 = vshrl.u32 %v1949, 7
        %v1951 = vsub.s32 6, %v1950
        %v1952 = vrot.slane %v959, %v1951
        %v1953 = vlaneseq
        %v1954 = vshrl.u32 %v1953, 7
        %v1955 = vsub.s32 7, %v1954
        %v1956 = vrot.slane %v959, %v1955
        %v1957 = vlaneseq
        %v1958 = vshrl.u32 %v1957, 7
        %v1959 = vsub.s32 0, %v1958
        %v1960 = vrot.slane %v960, %v1959
        %v1961 = vlaneseq
        %v1962 = vshrl.u32 %v1961, 7
        %v1963 = vsub.s32 1, %v1962
        %v1964 = vrot.slane %v960, %v1963
        %v1965 = vlaneseq
        %v1966 = vshrl.u32 %v1965, 7
        %v1967 = vsub.s32 2, %v1966
        %v1968 = vrot.slane %v960, %v1967
        %v1969 = vlaneseq
        %v1970 = vshrl.u32 %v1969, 7
        %v1971 = vsub.s32 3, %v1970
        %v1972 = vrot.slane %v960, %v1971
        %v1973 = vlaneseq
        %v1974 = vshrl.u32 %v1973, 7
        %v1975 = vsub.s32 4, %v1974
        %v1976 = vrot.slane %v960, %v1975
        %v1977 = vlaneseq
        %v1978 = vshrl.u32 %v1977, 7
        %v1979 = vsub.s32 5, %v1978
        %v1980 = vrot.slane %v960, %v1979
        %v1981 = vlaneseq
        %v1982 = vshrl.u32 %v1981, 7
        %v1983 = vsub.s32 6, %v1982
        %v1984 = vrot.slane %v960, %v1983
        %v1985 = vlaneseq
        %v1986 = vshrl.u32 %v1985, 7
        %v1987 = vsub.s32 7, %v1986
        %v1988 = vrot.slane %v960, %v1987
        %v1989 = vlaneseq
        %v1990 = vshrl.u32 %v1989, 7
        %v1991 = vsub.s32 0, %v1990
        %v1992 = vrot.slane %v961, %v1991
        %v1993 = vlaneseq
        %v1994 = vshrl.u32 %v1993, 7
        %v1995 = vsub.s32 1, %v1994
        %v1996 = vrot.slane %v961, %v1995
        %v1997 = vlaneseq
        %v1998 = vshrl.u32 %v1997, 7
        %v1999 = vsub.s32 2, %v1998
        %v2000 = vrot.slane %v961, %v1999
        %v2001 = vlaneseq
        %v2002 = vshrl.u32 %v2001, 7
        %v2003 = vsub.s32 3, %v2002
        %v2004 = vrot.slane %v961, %v2003
        %v2005 = vlaneseq
        %v2006 = vshrl.u32 %v2005, 7
        %v2007 = vsub.s32 4, %v2006
        %v2008 = vrot.slane %v961, %v2007
        %v2009 = vlaneseq
        %v2010 = vshrl.u32 %v2009, 7
        %v2011 = vsub.s32 5, %v2010
        %v2012 = vrot.slane %v961, %v2011
        %v2013 = vlaneseq
        %v2014 = vshrl.u32 %v2013, 7
        %v2015 = vsub.s32 6, %v2014
        %v2016 = vrot.slane %v961, %v2015
        %v2017 = vlaneseq
        %v2018 = vshrl.u32 %v2017, 7
        %v2019 = vsub.s32 7, %v2018
        %v2020 = vrot.slane %v961, %v2019
        %2045 = vmatprep.subr.bf16.mxu0 %v1539
        %2046 = vmatpush1.bf16.msra.mxu0 %v1538
        %2047 = vmatprep.subr.bf16.mxu0 %v1563
        %2048 = vmatpush1.bf16.msra.mxu0 %v1562
        %2049 = vmatprep.subr.bf16.mxu0 %v1587
        %2050 = vmatpush1.bf16.msra.mxu0 %v1586
        %2051 = vmatprep.subr.bf16.mxu0 %v1611
        %2052 = vmatpush1.bf16.msra.mxu0 %v1610
        %2053 = vmatprep.subr.bf16.mxu0 %v1635
        %2054 = vmatpush1.bf16.msra.mxu0 %v1634
        %2055 = vmatprep.subr.bf16.mxu0 %v1659
        %2056 = vmatpush1.bf16.msra.mxu0 %v1658
        %2057 = vmatprep.subr.bf16.mxu0 %v1683
        %2058 = vmatpush1.bf16.msra.mxu0 %v1682
        %2059 = vmatprep.subr.bf16.mxu0 %v1707
        %2060 = vmatpush1.bf16.msra.mxu0 %v1706
        %2061 = vmatprep.subr.bf16.mxu0 0
        %2062 = vmatpush1.bf16.msra.mxu0 0
        %2063 = vmatprep.subr.bf16.mxu0 0
        %2064 = vmatpush1.bf16.msra.mxu0 0
        %2065 = vmatprep.subr.bf16.mxu0 0
        %2066 = vmatpush1.bf16.msra.mxu0 0
        %2067 = vmatprep.subr.bf16.mxu0 0
        %2068 = vmatpush1.bf16.msra.mxu0 0
        %2069 = vmatprep.subr.bf16.mxu0 0
        %2070 = vmatpush1.bf16.msra.mxu0 0
        %2071 = vmatprep.subr.bf16.mxu0 0
        %2072 = vmatpush1.bf16.msra.mxu0 0
        %2073 = vmatprep.subr.bf16.mxu0 0
        %2074 = vmatpush1.bf16.msra.mxu0 0
        %2075 = vmatprep.subr.bf16.mxu0 0
        %2076 = vmatpush1.bf16.msra.mxu0 0
        %2077 = vmatprep.mubr.bf16.mxu0 0
        %2078 = vmatmul.mubr.bf16.gmra.mrb[0].mxu0 %v766
        %v2079 = vpop.f32.mrb[0].mxu0
        %v2080 = vadd.f32 %v1928, %v2079
        %v2081 = vpop.f32.mrb[0].mxu0
        %v2082 = vadd.f32 %v1932, %v2081
        %v2083 = vpop.f32.mrb[0].mxu0
        %v2084 = vpop.f32.mrb[0].mxu0
        %2085 = vdwg.mxu0
        %2086 = vmatprep.subr.bf16.mxu0 %v1541
        %2087 = vmatpush1.bf16.msra.mxu0 %v1540
        %2088 = vmatprep.subr.bf16.mxu0 %v1565
        %2089 = vmatpush1.bf16.msra.mxu0 %v1564
        %2090 = vmatprep.subr.bf16.mxu0 %v1589
        %2091 = vmatpush1.bf16.msra.mxu0 %v1588
        %2092 = vmatprep.subr.bf16.mxu0 %v1613
        %2093 = vmatpush1.bf16.msra.mxu0 %v1612
        %2094 = vmatprep.subr.bf16.mxu0 %v1637
        %2095 = vmatpush1.bf16.msra.mxu0 %v1636
        %2096 = vmatprep.subr.bf16.mxu0 %v1661
        %2097 = vmatpush1.bf16.msra.mxu0 %v1660
        %2098 = vmatprep.subr.bf16.mxu0 %v1685
        %2099 = vmatpush1.bf16.msra.mxu0 %v1684
        %2100 = vmatprep.subr.bf16.mxu0 %v1709
        %2101 = vmatpush1.bf16.msra.mxu0 %v1708
        %2102 = vmatprep.subr.bf16.mxu0 0
        %2103 = vmatpush1.bf16.msra.mxu0 0
        %2104 = vmatprep.subr.bf16.mxu0 0
        %2105 = vmatpush1.bf16.msra.mxu0 0
        %2106 = vmatprep.subr.bf16.mxu0 0
        %2107 = vmatpush1.bf16.msra.mxu0 0
        %2108 = vmatprep.subr.bf16.mxu0 0
        %2109 = vmatpush1.bf16.msra.mxu0 0
        %2110 = vmatprep.subr.bf16.mxu0 0
        %2111 = vmatpush1.bf16.msra.mxu0 0
        %2112 = vmatprep.subr.bf16.mxu0 0
        %2113 = vmatpush1.bf16.msra.mxu0 0
        %2114 = vmatprep.subr.bf16.mxu0 0
        %2115 = vmatpush1.bf16.msra.mxu0 0
        %2116 = vmatprep.subr.bf16.mxu0 0
        %2117 = vmatpush1.bf16.msra.mxu0 0
        %2118 = vmatprep.mubr.bf16.mxu0 0
        %2119 = vmatmul.mubr.bf16.gmra.mrb[0].mxu0 %v766
        %v2120 = vpop.f32.mrb[0].mxu0
        %v2121 = vadd.f32 %v1936, %v2120
        %v2122 = vpop.f32.mrb[0].mxu0
        %v2123 = vadd.f32 %v1940, %v2122
        %v2124 = vpop.f32.mrb[0].mxu0
        %v2125 = vpop.f32.mrb[0].mxu0
        %2126 = vdwg.mxu0
        %2127 = vmatprep.subr.bf16.mxu0 %v1543
        %2128 = vmatpush1.bf16.msra.mxu0 %v1542
        %2129 = vmatprep.subr.bf16.mxu0 %v1567
        %2130 = vmatpush1.bf16.msra.mxu0 %v1566
        %2131 = vmatprep.subr.bf16.mxu0 %v1591
        %2132 = vmatpush1.bf16.msra.mxu0 %v1590
        %2133 = vmatprep.subr.bf16.mxu0 %v1615
        %2134 = vmatpush1.bf16.msra.mxu0 %v1614
        %2135 = vmatprep.subr.bf16.mxu0 %v1639
        %2136 = vmatpush1.bf16.msra.mxu0 %v1638
        %2137 = vmatprep.subr.bf16.mxu0 %v1663
        %2138 = vmatpush1.bf16.msra.mxu0 %v1662
        %2139 = vmatprep.subr.bf16.mxu0 %v1687
        %2140 = vmatpush1.bf16.msra.mxu0 %v1686
        %2141 = vmatprep.subr.bf16.mxu0 %v1711
        %2142 = vmatpush1.bf16.msra.mxu0 %v1710
        %2143 = vmatprep.subr.bf16.mxu0 0
        %2144 = vmatpush1.bf16.msra.mxu0 0
        %2145 = vmatprep.subr.bf16.mxu0 0
        %2146 = vmatpush1.bf16.msra.mxu0 0
        %2147 = vmatprep.subr.bf16.mxu0 0
        %2148 = vmatpush1.bf16.msra.mxu0 0
        %2149 = vmatprep.subr.bf16.mxu0 0
        %2150 = vmatpush1.bf16.msra.mxu0 0
        %2151 = vmatprep.subr.bf16.mxu0 0
        %2152 = vmatpush1.bf16.msra.mxu0 0
        %2153 = vmatprep.subr.bf16.mxu0 0
        %2154 = vmatpush1.bf16.msra.mxu0 0
        %2155 = vmatprep.subr.bf16.mxu0 0
        %2156 = vmatpush1.bf16.msra.mxu0 0
        %2157 = vmatprep.subr.bf16.mxu0 0
        %2158 = vmatpush1.bf16.msra.mxu0 0
        %2159 = vmatprep.mubr.bf16.mxu0 0
        %2160 = vmatmul.mubr.bf16.gmra.mrb[0].mxu0 %v766
        %v2161 = vpop.f32.mrb[0].mxu0
        %v2162 = vadd.f32 %v1944, %v2161
        %v2163 = vpop.f32.mrb[0].mxu0
        %v2164 = vadd.f32 %v1948, %v2163
        %v2165 = vpop.f32.mrb[0].mxu0
        %v2166 = vpop.f32.mrb[0].mxu0
        %2167 = vdwg.mxu0
        %2168 = vmatprep.subr.bf16.mxu0 %v1545
        %2169 = vmatpush1.bf16.msra.mxu0 %v1544
        %2170 = vmatprep.subr.bf16.mxu0 %v1569
        %2171 = vmatpush1.bf16.msra.mxu0 %v1568
        %2172 = vmatprep.subr.bf16.mxu0 %v1593
        %2173 = vmatpush1.bf16.msra.mxu0 %v1592
        %2174 = vmatprep.subr.bf16.mxu0 %v1617
        %2175 = vmatpush1.bf16.msra.mxu0 %v1616
        %2176 = vmatprep.subr.bf16.mxu0 %v1641
        %2177 = vmatpush1.bf16.msra.mxu0 %v1640
        %2178 = vmatprep.subr.bf16.mxu0 %v1665
        %2179 = vmatpush1.bf16.msra.mxu0 %v1664
        %2180 = vmatprep.subr.bf16.mxu0 %v1689
        %2181 = vmatpush1.bf16.msra.mxu0 %v1688
        %2182 = vmatprep.subr.bf16.mxu0 %v1713
        %2183 = vmatpush1.bf16.msra.mxu0 %v1712
        %2184 = vmatprep.subr.bf16.mxu0 0
        %2185 = vmatpush1.bf16.msra.mxu0 0
        %2186 = vmatprep.subr.bf16.mxu0 0
        %2187 = vmatpush1.bf16.msra.mxu0 0
        %2188 = vmatprep.subr.bf16.mxu0 0
        %2189 = vmatpush1.bf16.msra.mxu0 0
        %2190 = vmatprep.subr.bf16.mxu0 0
        %2191 = vmatpush1.bf16.msra.mxu0 0
        %2192 = vmatprep.subr.bf16.mxu0 0
        %2193 = vmatpush1.bf16.msra.mxu0 0
        %2194 = vmatprep.subr.bf16.mxu0 0
        %2195 = vmatpush1.bf16.msra.mxu0 0
        %2196 = vmatprep.subr.bf16.mxu0 0
        %2197 = vmatpush1.bf16.msra.mxu0 0
        %2198 = vmatprep.subr.bf16.mxu0 0
        %2199 = vmatpush1.bf16.msra.mxu0 0
        %2200 = vmatprep.mubr.bf16.mxu0 0
        %2201 = vmatmul.mubr.bf16.gmra.mrb[0].mxu0 %v766
        %v2202 = vpop.f32.mrb[0].mxu0
        %v2203 = vadd.f32 %v1952, %v2202
        %v2204 = vpop.f32.mrb[0].mxu0
        %v2205 = vadd.f32 %v1956, %v2204
        %v2206 = vpop.f32.mrb[0].mxu0
        %v2207 = vpop.f32.mrb[0].mxu0
        %2208 = vdwg.mxu0
        %2209 = vmatprep.subr.bf16.mxu0 %v1547
        %2210 = vmatpush1.bf16.msra.mxu0 %v1546
        %2211 = vmatprep.subr.bf16.mxu0 %v1571
        %2212 = vmatpush1.bf16.msra.mxu0 %v1570
        %2213 = vmatprep.subr.bf16.mxu0 %v1595
        %2214 = vmatpush1.bf16.msra.mxu0 %v1594
        %2215 = vmatprep.subr.bf16.mxu0 %v1619
        %2216 = vmatpush1.bf16.msra.mxu0 %v1618
        %2217 = vmatprep.subr.bf16.mxu0 %v1643
        %2218 = vmatpush1.bf16.msra.mxu0 %v1642
        %2219 = vmatprep.subr.bf16.mxu0 %v1667
        %2220 = vmatpush1.bf16.msra.mxu0 %v1666
        %2221 = vmatprep.subr.bf16.mxu0 %v1691
        %2222 = vmatpush1.bf16.msra.mxu0 %v1690
        %2223 = vmatprep.subr.bf16.mxu0 %v1715
        %2224 = vmatpush1.bf16.msra.mxu0 %v1714
        %2225 = vmatprep.subr.bf16.mxu0 0
        %2226 = vmatpush1.bf16.msra.mxu0 0
        %2227 = vmatprep.subr.bf16.mxu0 0
        %2228 = vmatpush1.bf16.msra.mxu0 0
        %2229 = vmatprep.subr.bf16.mxu0 0
        %2230 = vmatpush1.bf16.msra.mxu0 0
        %2231 = vmatprep.subr.bf16.mxu0 0
        %2232 = vmatpush1.bf16.msra.mxu0 0
        %2233 = vmatprep.subr.bf16.mxu0 0
        %2234 = vmatpush1.bf16.msra.mxu0 0
        %2235 = vmatprep.subr.bf16.mxu0 0
        %2236 = vmatpush1.bf16.msra.mxu0 0
        %2237 = vmatprep.subr.bf16.mxu0 0
        %2238 = vmatpush1.bf16.msra.mxu0 0
        %2239 = vmatprep.subr.bf16.mxu0 0
        %2240 = vmatpush1.bf16.msra.mxu0 0
        %2241 = vmatprep.mubr.bf16.mxu0 0
        %2242 = vmatmul.mubr.bf16.gmra.mrb[0].mxu0 %v766
        %v2243 = vpop.f32.mrb[0].mxu0
        %v2244 = vadd.f32 %v1960, %v2243
        %v2245 = vpop.f32.mrb[0].mxu0
        %v2246 = vadd.f32 %v1964, %v2245
        %v2247 = vpop.f32.mrb[0].mxu0
        %v2248 = vpop.f32.mrb[0].mxu0
        %2249 = vdwg.mxu0
        %2250 = vmatprep.subr.bf16.mxu0 %v1549
        %2251 = vmatpush1.bf16.msra.mxu0 %v1548
        %2252 = vmatprep.subr.bf16.mxu0 %v1573
        %2253 = vmatpush1.bf16.msra.mxu0 %v1572
        %2254 = vmatprep.subr.bf16.mxu0 %v1597
        %2255 = vmatpush1.bf16.msra.mxu0 %v1596
        %2256 = vmatprep.subr.bf16.mxu0 %v1621
        %2257 = vmatpush1.bf16.msra.mxu0 %v1620
        %2258 = vmatprep.subr.bf16.mxu0 %v1645
        %2259 = vmatpush1.bf16.msra.mxu0 %v1644
        %2260 = vmatprep.subr.bf16.mxu0 %v1669
        %2261 = vmatpush1.bf16.msra.mxu0 %v1668
        %2262 = vmatprep.subr.bf16.mxu0 %v1693
        %2263 = vmatpush1.bf16.msra.mxu0 %v1692
        %2264 = vmatprep.subr.bf16.mxu0 %v1717
        %2265 = vmatpush1.bf16.msra.mxu0 %v1716
        %2266 = vmatprep.subr.bf16.mxu0 0
        %2267 = vmatpush1.bf16.msra.mxu0 0
        %2268 = vmatprep.subr.bf16.mxu0 0
        %2269 = vmatpush1.bf16.msra.mxu0 0
        %2270 = vmatprep.subr.bf16.mxu0 0
        %2271 = vmatpush1.bf16.msra.mxu0 0
        %2272 = vmatprep.subr.bf16.mxu0 0
        %2273 = vmatpush1.bf16.msra.mxu0 0
        %2274 = vmatprep.subr.bf16.mxu0 0
        %2275 = vmatpush1.bf16.msra.mxu0 0
        %2276 = vmatprep.subr.bf16.mxu0 0
        %2277 = vmatpush1.bf16.msra.mxu0 0
        %2278 = vmatprep.subr.bf16.mxu0 0
        %2279 = vmatpush1.bf16.msra.mxu0 0
        %2280 = vmatprep.subr.bf16.mxu0 0
        %2281 = vmatpush1.bf16.msra.mxu0 0
        %2282 = vmatprep.mubr.bf16.mxu0 0
        %2283 = vmatmul.mubr.bf16.gmra.mrb[0].mxu0 %v766
        %v2284 = vpop.f32.mrb[0].mxu0
        %v2285 = vadd.f32 %v1968, %v2284
        %v2286 = vpop.f32.mrb[0].mxu0
        %v2287 = vadd.f32 %v1972, %v2286
        %v2288 = vpop.f32.mrb[0].mxu0
        %v2289 = vpop.f32.mrb[0].mxu0
        %2290 = vdwg.mxu0
        %2291 = vmatprep.subr.bf16.mxu0 %v1551
        %2292 = vmatpush1.bf16.msra.mxu0 %v1550
        %2293 = vmatprep.subr.bf16.mxu0 %v1575
        %2294 = vmatpush1.bf16.msra.mxu0 %v1574
        %2295 = vmatprep.subr.bf16.mxu0 %v1599
        %2296 = vmatpush1.bf16.msra.mxu0 %v1598
        %2297 = vmatprep.subr.bf16.mxu0 %v1623
        %2298 = vmatpush1.bf16.msra.mxu0 %v1622
        %2299 = vmatprep.subr.bf16.mxu0 %v1647
        %2300 = vmatpush1.bf16.msra.mxu0 %v1646
        %2301 = vmatprep.subr.bf16.mxu0 %v1671
        %2302 = vmatpush1.bf16.msra.mxu0 %v1670
        %2303 = vmatprep.subr.bf16.mxu0 %v1695
        %2304 = vmatpush1.bf16.msra.mxu0 %v1694
        %2305 = vmatprep.subr.bf16.mxu0 %v1719
        %2306 = vmatpush1.bf16.msra.mxu0 %v1718
        %2307 = vmatprep.subr.bf16.mxu0 0
        %2308 = vmatpush1.bf16.msra.mxu0 0
        %2309 = vmatprep.subr.bf16.mxu0 0
        %2310 = vmatpush1.bf16.msra.mxu0 0
        %2311 = vmatprep.subr.bf16.mxu0 0
        %2312 = vmatpush1.bf16.msra.mxu0 0
        %2313 = vmatprep.subr.bf16.mxu0 0
        %2314 = vmatpush1.bf16.msra.mxu0 0
        %2315 = vmatprep.subr.bf16.mxu0 0
        %2316 = vmatpush1.bf16.msra.mxu0 0
        %2317 = vmatprep.subr.bf16.mxu0 0
        %2318 = vmatpush1.bf16.msra.mxu0 0
        %2319 = vmatprep.subr.bf16.mxu0 0
        %2320 = vmatpush1.bf16.msra.mxu0 0
        %2321 = vmatprep.subr.bf16.mxu0 0
        %2322 = vmatpush1.bf16.msra.mxu0 0
        %2323 = vmatprep.mubr.bf16.mxu0 0
        %2324 = vmatmul.mubr.bf16.gmra.mrb[0].mxu0 %v766
        %v2325 = vpop.f32.mrb[0].mxu0
        %v2326 = vadd.f32 %v1976, %v2325
        %v2327 = vpop.f32.mrb[0].mxu0
        %v2328 = vadd.f32 %v1980, %v2327
        %v2329 = vpop.f32.mrb[0].mxu0
        %v2330 = vpop.f32.mrb[0].mxu0
        %2331 = vdwg.mxu0
        %2332 = vmatprep.subr.bf16.mxu0 %v1553
        %2333 = vmatpush1.bf16.msra.mxu0 %v1552
        %2334 = vmatprep.subr.bf16.mxu0 %v1577
        %2335 = vmatpush1.bf16.msra.mxu0 %v1576
        %2336 = vmatprep.subr.bf16.mxu0 %v1601
        %2337 = vmatpush1.bf16.msra.mxu0 %v1600
        %2338 = vmatprep.subr.bf16.mxu0 %v1625
        %2339 = vmatpush1.bf16.msra.mxu0 %v1624
        %2340 = vmatprep.subr.bf16.mxu0 %v1649
        %2341 = vmatpush1.bf16.msra.mxu0 %v1648
        %2342 = vmatprep.subr.bf16.mxu0 %v1673
        %2343 = vmatpush1.bf16.msra.mxu0 %v1672
        %2344 = vmatprep.subr.bf16.mxu0 %v1697
        %2345 = vmatpush1.bf16.msra.mxu0 %v1696
        %2346 = vmatprep.subr.bf16.mxu0 %v1721
        %2347 = vmatpush1.bf16.msra.mxu0 %v1720
        %2348 = vmatprep.subr.bf16.mxu0 0
        %2349 = vmatpush1.bf16.msra.mxu0 0
        %2350 = vmatprep.subr.bf16.mxu0 0
        %2351 = vmatpush1.bf16.msra.mxu0 0
        %2352 = vmatprep.subr.bf16.mxu0 0
        %2353 = vmatpush1.bf16.msra.mxu0 0
        %2354 = vmatprep.subr.bf16.mxu0 0
        %2355 = vmatpush1.bf16.msra.mxu0 0
        %2356 = vmatprep.subr.bf16.mxu0 0
        %2357 = vmatpush1.bf16.msra.mxu0 0
        %2358 = vmatprep.subr.bf16.mxu0 0
        %2359 = vmatpush1.bf16.msra.mxu0 0
        %2360 = vmatprep.subr.bf16.mxu0 0
        %2361 = vmatpush1.bf16.msra.mxu0 0
        %2362 = vmatprep.subr.bf16.mxu0 0
        %2363 = vmatpush1.bf16.msra.mxu0 0
        %2364 = vmatprep.mubr.bf16.mxu0 0
        %2365 = vmatmul.mubr.bf16.gmra.mrb[0].mxu0 %v766
        %v2366 = vpop.f32.mrb[0].mxu0
        %v2367 = vadd.f32 %v1984, %v2366
        %v2368 = vpop.f32.mrb[0].mxu0
        %v2369 = vadd.f32 %v1988, %v2368
        %v2370 = vpop.f32.mrb[0].mxu0
        %v2371 = vpop.f32.mrb[0].mxu0
        %2372 = vdwg.mxu0
        %2373 = vmatprep.subr.bf16.mxu0 %v1555
        %2374 = vmatpush1.bf16.msra.mxu0 %v1554
        %2375 = vmatprep.subr.bf16.mxu0 %v1579
        %2376 = vmatpush1.bf16.msra.mxu0 %v1578
        %2377 = vmatprep.subr.bf16.mxu0 %v1603
        %2378 = vmatpush1.bf16.msra.mxu0 %v1602
        %2379 = vmatprep.subr.bf16.mxu0 %v1627
        %2380 = vmatpush1.bf16.msra.mxu0 %v1626
        %2381 = vmatprep.subr.bf16.mxu0 %v1651
        %2382 = vmatpush1.bf16.msra.mxu0 %v1650
        %2383 = vmatprep.subr.bf16.mxu0 %v1675
        %2384 = vmatpush1.bf16.msra.mxu0 %v1674
        %2385 = vmatprep.subr.bf16.mxu0 %v1699
        %2386 = vmatpush1.bf16.msra.mxu0 %v1698
        %2387 = vmatprep.subr.bf16.mxu0 %v1723
        %2388 = vmatpush1.bf16.msra.mxu0 %v1722
        %2389 = vmatprep.subr.bf16.mxu0 0
        %2390 = vmatpush1.bf16.msra.mxu0 0
        %2391 = vmatprep.subr.bf16.mxu0 0
        %2392 = vmatpush1.bf16.msra.mxu0 0
        %2393 = vmatprep.subr.bf16.mxu0 0
        %2394 = vmatpush1.bf16.msra.mxu0 0
        %2395 = vmatprep.subr.bf16.mxu0 0
        %2396 = vmatpush1.bf16.msra.mxu0 0
        %2397 = vmatprep.subr.bf16.mxu0 0
        %2398 = vmatpush1.bf16.msra.mxu0 0
        %2399 = vmatprep.subr.bf16.mxu0 0
        %2400 = vmatpush1.bf16.msra.mxu0 0
        %2401 = vmatprep.subr.bf16.mxu0 0
        %2402 = vmatpush1.bf16.msra.mxu0 0
        %2403 = vmatprep.subr.bf16.mxu0 0
        %2404 = vmatpush1.bf16.msra.mxu0 0
        %2405 = vmatprep.mubr.bf16.mxu0 0
        %2406 = vmatmul.mubr.bf16.gmra.mrb[0].mxu0 %v766
        %v2407 = vpop.f32.mrb[0].mxu0
        %v2408 = vadd.f32 %v1992, %v2407
        %v2409 = vpop.f32.mrb[0].mxu0
        %v2410 = vadd.f32 %v1996, %v2409
        %v2411 = vpop.f32.mrb[0].mxu0
        %v2412 = vpop.f32.mrb[0].mxu0
        %2413 = vdwg.mxu0
        %2414 = vmatprep.subr.bf16.mxu0 %v1557
        %2415 = vmatpush1.bf16.msra.mxu0 %v1556
        %2416 = vmatprep.subr.bf16.mxu0 %v1581
        %2417 = vmatpush1.bf16.msra.mxu0 %v1580
        %2418 = vmatprep.subr.bf16.mxu0 %v1605
        %2419 = vmatpush1.bf16.msra.mxu0 %v1604
        %2420 = vmatprep.subr.bf16.mxu0 %v1629
        %2421 = vmatpush1.bf16.msra.mxu0 %v1628
        %2422 = vmatprep.subr.bf16.mxu0 %v1653
        %2423 = vmatpush1.bf16.msra.mxu0 %v1652
        %2424 = vmatprep.subr.bf16.mxu0 %v1677
        %2425 = vmatpush1.bf16.msra.mxu0 %v1676
        %2426 = vmatprep.subr.bf16.mxu0 %v1701
        %2427 = vmatpush1.bf16.msra.mxu0 %v1700
        %2428 = vmatprep.subr.bf16.mxu0 %v1725
        %2429 = vmatpush1.bf16.msra.mxu0 %v1724
        %2430 = vmatprep.subr.bf16.mxu0 0
        %2431 = vmatpush1.bf16.msra.mxu0 0
        %2432 = vmatprep.subr.bf16.mxu0 0
        %2433 = vmatpush1.bf16.msra.mxu0 0
        %2434 = vmatprep.subr.bf16.mxu0 0
        %2435 = vmatpush1.bf16.msra.mxu0 0
        %2436 = vmatprep.subr.bf16.mxu0 0
        %2437 = vmatpush1.bf16.msra.mxu0 0
        %2438 = vmatprep.subr.bf16.mxu0 0
        %2439 = vmatpush1.bf16.msra.mxu0 0
        %2440 = vmatprep.subr.bf16.mxu0 0
        %2441 = vmatpush1.bf16.msra.mxu0 0
        %2442 = vmatprep.subr.bf16.mxu0 0
        %2443 = vmatpush1.bf16.msra.mxu0 0
        %2444 = vmatprep.subr.bf16.mxu0 0
        %2445 = vmatpush1.bf16.msra.mxu0 0
        %2446 = vmatprep.mubr.bf16.mxu0 0
        %2447 = vmatmul.mubr.bf16.gmra.mrb[0].mxu0 %v766
        %v2448 = vpop.f32.mrb[0].mxu0
        %v2449 = vadd.f32 %v2000, %v2448
        %v2450 = vpop.f32.mrb[0].mxu0
        %v2451 = vadd.f32 %v2004, %v2450
        %v2452 = vpop.f32.mrb[0].mxu0
        %v2453 = vpop.f32.mrb[0].mxu0
        %2454 = vdwg.mxu0
        %2455 = vmatprep.subr.bf16.mxu0 %v1559
        %2456 = vmatpush1.bf16.msra.mxu0 %v1558
        %2457 = vmatprep.subr.bf16.mxu0 %v1583
        %2458 = vmatpush1.bf16.msra.mxu0 %v1582
        %2459 = vmatprep.subr.bf16.mxu0 %v1607
        %2460 = vmatpush1.bf16.msra.mxu0 %v1606
        %2461 = vmatprep.subr.bf16.mxu0 %v1631
        %2462 = vmatpush1.bf16.msra.mxu0 %v1630
        %2463 = vmatprep.subr.bf16.mxu0 %v1655
        %2464 = vmatpush1.bf16.msra.mxu0 %v1654
        %2465 = vmatprep.subr.bf16.mxu0 %v1679
        %2466 = vmatpush1.bf16.msra.mxu0 %v1678
        %2467 = vmatprep.subr.bf16.mxu0 %v1703
        %2468 = vmatpush1.bf16.msra.mxu0 %v1702
        %2469 = vmatprep.subr.bf16.mxu0 %v1727
        %2470 = vmatpush1.bf16.msra.mxu0 %v1726
        %2471 = vmatprep.subr.bf16.mxu0 0
        %2472 = vmatpush1.bf16.msra.mxu0 0
        %2473 = vmatprep.subr.bf16.mxu0 0
        %2474 = vmatpush1.bf16.msra.mxu0 0
        %2475 = vmatprep.subr.bf16.mxu0 0
        %2476 = vmatpush1.bf16.msra.mxu0 0
        %2477 = vmatprep.subr.bf16.mxu0 0
        %2478 = vmatpush1.bf16.msra.mxu0 0
        %2479 = vmatprep.subr.bf16.mxu0 0
        %2480 = vmatpush1.bf16.msra.mxu0 0
        %2481 = vmatprep.subr.bf16.mxu0 0
        %2482 = vmatpush1.bf16.msra.mxu0 0
        %2483 = vmatprep.subr.bf16.mxu0 0
        %2484 = vmatpush1.bf16.msra.mxu0 0
        %2485 = vmatprep.subr.bf16.mxu0 0
        %2486 = vmatpush1.bf16.msra.mxu0 0
        %2487 = vmatprep.mubr.bf16.mxu0 0
        %2488 = vmatmul.mubr.bf16.gmra.mrb[0].mxu0 %v766
        %v2489 = vpop.f32.mrb[0].mxu0
        %v2490 = vadd.f32 %v2008, %v2489
        %v2491 = vpop.f32.mrb[0].mxu0
        %v2492 = vadd.f32 %v2012, %v2491
        %v2493 = vpop.f32.mrb[0].mxu0
        %v2494 = vpop.f32.mrb[0].mxu0
        %2495 = vdwg.mxu0
        %2496 = vmatprep.subr.bf16.mxu0 %v1561
        %2497 = vmatpush1.bf16.msra.mxu0 %v1560
        %2498 = vmatprep.subr.bf16.mxu0 %v1585
        %2499 = vmatpush1.bf16.msra.mxu0 %v1584
        %2500 = vmatprep.subr.bf16.mxu0 %v1609
        %2501 = vmatpush1.bf16.msra.mxu0 %v1608
        %2502 = vmatprep.subr.bf16.mxu0 %v1633
        %2503 = vmatpush1.bf16.msra.mxu0 %v1632
        %2504 = vmatprep.subr.bf16.mxu0 %v1657
        %2505 = vmatpush1.bf16.msra.mxu0 %v1656
        %2506 = vmatprep.subr.bf16.mxu0 %v1681
        %2507 = vmatpush1.bf16.msra.mxu0 %v1680
        %2508 = vmatprep.subr.bf16.mxu0 %v1705
        %2509 = vmatpush1.bf16.msra.mxu0 %v1704
        %2510 = vmatprep.subr.bf16.mxu0 %v1729
        %2511 = vmatpush1.bf16.msra.mxu0 %v1728
        %2512 = vmatprep.subr.bf16.mxu0 0
        %2513 = vmatpush1.bf16.msra.mxu0 0
        %2514 = vmatprep.subr.bf16.mxu0 0
        %2515 = vmatpush1.bf16.msra.mxu0 0
        %2516 = vmatprep.subr.bf16.mxu0 0
        %2517 = vmatpush1.bf16.msra.mxu0 0
        %2518 = vmatprep.subr.bf16.mxu0 0
        %2519 = vmatpush1.bf16.msra.mxu0 0
        %2520 = vmatprep.subr.bf16.mxu0 0
        %2521 = vmatpush1.bf16.msra.mxu0 0
        %2522 = vmatprep.subr.bf16.mxu0 0
        %2523 = vmatpush1.bf16.msra.mxu0 0
        %2524 = vmatprep.subr.bf16.mxu0 0
        %2525 = vmatpush1.bf16.msra.mxu0 0
        %2526 = vmatprep.subr.bf16.mxu0 0
        %2527 = vmatpush1.bf16.msra.mxu0 0
        %2528 = vmatprep.mubr.bf16.mxu0 0
        %2529 = vmatmul.mubr.bf16.gmra.mrb[0].mxu0 %v766
        %v2530 = vpop.f32.mrb[0].mxu0
        %v2531 = vadd.f32 %v2016, %v2530
        %v2532 = vpop.f32.mrb[0].mxu0
        %v2533 = vadd.f32 %v2020, %v2532
        %v2534 = vpop.f32.mrb[0].mxu0
        %v2535 = vpop.f32.mrb[0].mxu0
        %2536 = vdwg.mxu0
        %v2537 = vtanh.pop %v2080
        %v2538 = vtanh.pop %v2082
        %v2539 = vtanh.pop %v2121
        %v2540 = vtanh.pop %v2123
        %v2541 = vtanh.pop %v2162
        %v2542 = vtanh.pop %v2164
        %v2543 = vtanh.pop %v2203
        %v2544 = vtanh.pop %v2205
        %v2545 = vtanh.pop %v2244
        %v2546 = vtanh.pop %v2246
        %v2547 = vtanh.pop %v2285
        %v2548 = vtanh.pop %v2287
        %v2549 = vtanh.pop %v2326
        %v2550 = vtanh.pop %v2328
        %v2551 = vtanh.pop %v2367
        %v2552 = vtanh.pop %v2369
        %v2553 = vtanh.pop %v2408
        %v2554 = vtanh.pop %v2410
        %v2555 = vtanh.pop %v2449
        %v2556 = vtanh.pop %v2451
        %v2557 = vtanh.pop %v2490
        %v2558 = vtanh.pop %v2492
        %v2559 = vtanh.pop %v2531
        %v2560 = vtanh.pop %v2533
        %v2585 = vcombine.low %v2537, %v2538
        %v2586 = vcombine.low %v2539, %v2540
        %v2587 = vcombine.low %v2541, %v2542
        %v2588 = vcombine.low %v2543, %v2544
        %v2590 = vunpack.c.l.s4 1966171168
        %v2591 = vunpack.c.0.s8 %v2590
        %v2592 = vlaneseq
        %v2593 = vshrl.u32 %v2592, 7
        %v2594 = vsub.s32 %v2591, %v2593
        %v2595 = vrot.slane %v2585, %v2594
        %v2597 = vunpack.c.l.s4 1966171168
        %v2598 = vunpack.c.0.s8 %v2597
        %v2599 = vlaneseq
        %v2600 = vshrl.u32 %v2599, 7
        %v2601 = vsub.s32 %v2598, %v2600
        %v2602 = vrot.slane %v2586, %v2601
        %v2604 = vunpack.c.l.s4 1966171168
        %v2605 = vunpack.c.0.s8 %v2604
        %v2606 = vlaneseq
        %v2607 = vshrl.u32 %v2606, 7
        %v2608 = vsub.s32 %v2605, %v2607
        %v2609 = vrot.slane %v2587, %v2608
        %v2611 = vunpack.c.l.s4 1966171168
        %v2612 = vunpack.c.0.s8 %v2611
        %v2613 = vlaneseq
        %v2614 = vshrl.u32 %v2613, 7
        %v2615 = vsub.s32 %v2612, %v2614
        %v2616 = vrot.slane %v2588, %v2615
        %v2617 = vcombine.low %v2595, %v2602
        %v2618 = vcombine.low %v2609, %v2616
        %v2620 = vunpack.c.l.s4 1966171168
        %v2621 = vunpack.c.0.s8 %v2620
        %v2622 = vlaneseq
        %v2623 = vshrl.u32 %v2622, 7
        %v2624 = vsub.s32 %v2621, %v2623
        %v2625 = vrot.slane %v2617, %v2624
        %v2627 = vunpack.c.l.s4 1966171168
        %v2628 = vunpack.c.0.s8 %v2627
        %v2629 = vlaneseq
        %v2630 = vshrl.u32 %v2629, 7
        %v2631 = vsub.s32 %v2628, %v2630
        %v2632 = vrot.slane %v2618, %v2631
        %v2633 = vcombine.low %v2625, %v2632
        %v2634 = vcombine.low %v2545, %v2546
        %v2635 = vcombine.low %v2547, %v2548
        %v2636 = vcombine.low %v2549, %v2550
        %v2637 = vcombine.low %v2551, %v2552
        %v2639 = vunpack.c.l.s4 1966171168
        %v2640 = vunpack.c.0.s8 %v2639
        %v2641 = vlaneseq
        %v2642 = vshrl.u32 %v2641, 7
        %v2643 = vsub.s32 %v2640, %v2642
        %v2644 = vrot.slane %v2634, %v2643
        %v2646 = vunpack.c.l.s4 1966171168
        %v2647 = vunpack.c.0.s8 %v2646
        %v2648 = vlaneseq
        %v2649 = vshrl.u32 %v2648, 7
        %v2650 = vsub.s32 %v2647, %v2649
        %v2651 = vrot.slane %v2635, %v2650
        %v2653 = vunpack.c.l.s4 1966171168
        %v2654 = vunpack.c.0.s8 %v2653
        %v2655 = vlaneseq
        %v2656 = vshrl.u32 %v2655, 7
        %v2657 = vsub.s32 %v2654, %v2656
        %v2658 = vrot.slane %v2636, %v2657
        %v2660 = vunpack.c.l.s4 1966171168
        %v2661 = vunpack.c.0.s8 %v2660
        %v2662 = vlaneseq
        %v2663 = vshrl.u32 %v2662, 7
        %v2664 = vsub.s32 %v2661, %v2663
        %v2665 = vrot.slane %v2637, %v2664
        %v2666 = vcombine.low %v2644, %v2651
        %v2667 = vcombine.low %v2658, %v2665
        %v2669 = vunpack.c.l.s4 1966171168
        %v2670 = vunpack.c.0.s8 %v2669
        %v2671 = vlaneseq
        %v2672 = vshrl.u32 %v2671, 7
        %v2673 = vsub.s32 %v2670, %v2672
        %v2674 = vrot.slane %v2666, %v2673
        %v2676 = vunpack.c.l.s4 1966171168
        %v2677 = vunpack.c.0.s8 %v2676
        %v2678 = vlaneseq
        %v2679 = vshrl.u32 %v2678, 7
        %v2680 = vsub.s32 %v2677, %v2679
        %v2681 = vrot.slane %v2667, %v2680
        %v2682 = vcombine.low %v2674, %v2681
        %v2683 = vcombine.low %v2553, %v2554
        %v2684 = vcombine.low %v2555, %v2556
        %v2685 = vcombine.low %v2557, %v2558
        %v2686 = vcombine.low %v2559, %v2560
        %v2688 = vunpack.c.l.s4 1966171168
        %v2689 = vunpack.c.0.s8 %v2688
        %v2690 = vlaneseq
        %v2691 = vshrl.u32 %v2690, 7
        %v2692 = vsub.s32 %v2689, %v2691
        %v2693 = vrot.slane %v2683, %v2692
        %v2695 = vunpack.c.l.s4 1966171168
        %v2696 = vunpack.c.0.s8 %v2695
        %v2697 = vlaneseq
        %v2698 = vshrl.u32 %v2697, 7
        %v2699 = vsub.s32 %v2696, %v2698
        %v2700 = vrot.slane %v2684, %v2699
        %v2702 = vunpack.c.l.s4 1966171168
        %v2703 = vunpack.c.0.s8 %v2702
        %v2704 = vlaneseq
        %v2705 = vshrl.u32 %v2704, 7
        %v2706 = vsub.s32 %v2703, %v2705
        %v2707 = vrot.slane %v2685, %v2706
        %v2709 = vunpack.c.l.s4 1966171168
        %v2710 = vunpack.c.0.s8 %v2709
        %v2711 = vlaneseq
        %v2712 = vshrl.u32 %v2711, 7
        %v2713 = vsub.s32 %v2710, %v2712
        %v2714 = vrot.slane %v2686, %v2713
        %v2715 = vcombine.low %v2693, %v2700
        %v2716 = vcombine.low %v2707, %v2714
        %v2718 = vunpack.c.l.s4 1966171168
        %v2719 = vunpack.c.0.s8 %v2718
        %v2720 = vlaneseq
        %v2721 = vshrl.u32 %v2720, 7
        %v2722 = vsub.s32 %v2719, %v2721
        %v2723 = vrot.slane %v2715, %v2722
        %v2725 = vunpack.c.l.s4 1966171168
        %v2726 = vunpack.c.0.s8 %v2725
        %v2727 = vlaneseq
        %v2728 = vshrl.u32 %v2727, 7
        %v2729 = vsub.s32 %v2726, %v2728
        %v2730 = vrot.slane %v2716, %v2729
        %v2731 = vcombine.low %v2723, %v2730
        %2735 = vst [vmem:[%s415] sm:$0xff] %v2633
        %2736 = vst [vmem:[%s415 + $0x8] sm:$0xff] %v2682
        %2737 = vst [vmem:[%s415 + $0x10] sm:$0xff] %v2731
        %v2738 = vld [vmem:[%s365 + $0x60] sm:$0xff]
        %v2739 = vld [vmem:[%s365 + $0x68] sm:$0xff]
        %v2740 = vld [vmem:[%s365 + $0x70] sm:$0xff]
        %v2741 = vld [vmem:[%s365 + $0x78] sm:$0xff]
        %v2742 = vld [vmem:[%s365 + $0x80] sm:$0xff]
        %v2743 = vld [vmem:[%s365 + $0x88] sm:$0xff]
        %v2744 = vld [vmem:[%s365 + $0x90] sm:$0xff]
        %v2745 = vld [vmem:[%s365 + $0x98] sm:$0xff]
        %v2746 = vld [vmem:[%s365 + $0xa0] sm:$0xff]
        %v2747 = vld [vmem:[%s365 + $0xa8] sm:$0xff]
        %v2748 = vld [vmem:[%s365 + $0xb0] sm:$0xff]
        %v2749 = vld [vmem:[%s365 + $0xb8] sm:$0xff]
        %v2750 = vld [vmem:[%s365 + $0x120] sm:$0xff]
        %v2751 = vld [vmem:[%s365 + $0x128] sm:$0xff]
        %v2752 = vld [vmem:[%s365 + $0x130] sm:$0xff]
        %v2753 = vld [vmem:[%s365 + $0x138] sm:$0xff]
        %v2754 = vld [vmem:[%s365 + $0x140] sm:$0xff]
        %v2755 = vld [vmem:[%s365 + $0x148] sm:$0xff]
        %v2756 = vld [vmem:[%s365 + $0x150] sm:$0xff]
        %v2757 = vld [vmem:[%s365 + $0x158] sm:$0xff]
        %v2758 = vld [vmem:[%s365 + $0x160] sm:$0xff]
        %v2759 = vld [vmem:[%s365 + $0x168] sm:$0xff]
        %v2760 = vld [vmem:[%s365 + $0x170] sm:$0xff]
        %v2761 = vld [vmem:[%s365 + $0x178] sm:$0xff]
        %v2762 = vld [vmem:[%s365 + $0x1e0] sm:$0xff]
        %v2763 = vld [vmem:[%s365 + $0x1e8] sm:$0xff]
        %v2764 = vld [vmem:[%s365 + $0x1f0] sm:$0xff]
        %v2765 = vld [vmem:[%s365 + $0x1f8] sm:$0xff]
        %v2766 = vld [vmem:[%s365 + $0x200] sm:$0xff]
        %v2767 = vld [vmem:[%s365 + $0x208] sm:$0xff]
        %v2768 = vld [vmem:[%s365 + $0x210] sm:$0xff]
        %v2769 = vld [vmem:[%s365 + $0x218] sm:$0xff]
        %v2770 = vld [vmem:[%s365 + $0x220] sm:$0xff]
        %v2771 = vld [vmem:[%s365 + $0x228] sm:$0xff]
        %v2772 = vld [vmem:[%s365 + $0x230] sm:$0xff]
        %v2773 = vld [vmem:[%s365 + $0x238] sm:$0xff]
        %v2774 = vld [vmem:[%s365 + $0x2a0] sm:$0xff]
        %v2775 = vld [vmem:[%s365 + $0x2a8] sm:$0xff]
        %v2776 = vld [vmem:[%s365 + $0x2b0] sm:$0xff]
        %v2777 = vld [vmem:[%s365 + $0x2b8] sm:$0xff]
        %v2778 = vld [vmem:[%s365 + $0x2c0] sm:$0xff]
        %v2779 = vld [vmem:[%s365 + $0x2c8] sm:$0xff]
        %v2780 = vld [vmem:[%s365 + $0x2d0] sm:$0xff]
        %v2781 = vld [vmem:[%s365 + $0x2d8] sm:$0xff]
        %v2782 = vld [vmem:[%s365 + $0x2e0] sm:$0xff]
        %v2783 = vld [vmem:[%s365 + $0x2e8] sm:$0xff]
        %v2784 = vld [vmem:[%s365 + $0x2f0] sm:$0xff]
        %v2785 = vld [vmem:[%s365 + $0x2f8] sm:$0xff]
        %v2786 = vld [vmem:[%s365 + $0x360] sm:$0xff]
        %v2787 = vld [vmem:[%s365 + $0x368] sm:$0xff]
        %v2788 = vld [vmem:[%s365 + $0x370] sm:$0xff]
        %v2789 = vld [vmem:[%s365 + $0x378] sm:$0xff]
        %v2790 = vld [vmem:[%s365 + $0x380] sm:$0xff]
        %v2791 = vld [vmem:[%s365 + $0x388] sm:$0xff]
        %v2792 = vld [vmem:[%s365 + $0x390] sm:$0xff]
        %v2793 = vld [vmem:[%s365 + $0x398] sm:$0xff]
        %v2794 = vld [vmem:[%s365 + $0x3a0] sm:$0xff]
        %v2795 = vld [vmem:[%s365 + $0x3a8] sm:$0xff]
        %v2796 = vld [vmem:[%s365 + $0x3b0] sm:$0xff]
        %v2797 = vld [vmem:[%s365 + $0x3b8] sm:$0xff]
        %v2798 = vld [vmem:[%s365 + $0x420] sm:$0xff]
        %v2799 = vld [vmem:[%s365 + $0x428] sm:$0xff]
        %v2800 = vld [vmem:[%s365 + $0x430] sm:$0xff]
        %v2801 = vld [vmem:[%s365 + $0x438] sm:$0xff]
        %v2802 = vld [vmem:[%s365 + $0x440] sm:$0xff]
        %v2803 = vld [vmem:[%s365 + $0x448] sm:$0xff]
        %v2804 = vld [vmem:[%s365 + $0x450] sm:$0xff]
        %v2805 = vld [vmem:[%s365 + $0x458] sm:$0xff]
        %v2806 = vld [vmem:[%s365 + $0x460] sm:$0xff]
        %v2807 = vld [vmem:[%s365 + $0x468] sm:$0xff]
        %v2808 = vld [vmem:[%s365 + $0x470] sm:$0xff]
        %v2809 = vld [vmem:[%s365 + $0x478] sm:$0xff]
        %v2810 = vld [vmem:[%s365 + $0x4e0] sm:$0xff]
        %v2811 = vld [vmem:[%s365 + $0x4e8] sm:$0xff]
        %v2812 = vld [vmem:[%s365 + $0x4f0] sm:$0xff]
        %v2813 = vld [vmem:[%s365 + $0x4f8] sm:$0xff]
        %v2814 = vld [vmem:[%s365 + $0x500] sm:$0xff]
        %v2815 = vld [vmem:[%s365 + $0x508] sm:$0xff]
        %v2816 = vld [vmem:[%s365 + $0x510] sm:$0xff]
        %v2817 = vld [vmem:[%s365 + $0x518] sm:$0xff]
        %v2818 = vld [vmem:[%s365 + $0x520] sm:$0xff]
        %v2819 = vld [vmem:[%s365 + $0x528] sm:$0xff]
        %v2820 = vld [vmem:[%s365 + $0x530] sm:$0xff]
        %v2821 = vld [vmem:[%s365 + $0x538] sm:$0xff]
        %v2822 = vld [vmem:[%s365 + $0x5a0] sm:$0xff]
        %v2823 = vld [vmem:[%s365 + $0x5a8] sm:$0xff]
        %v2824 = vld [vmem:[%s365 + $0x5b0] sm:$0xff]
        %v2825 = vld [vmem:[%s365 + $0x5b8] sm:$0xff]
        %v2826 = vld [vmem:[%s365 + $0x5c0] sm:$0xff]
        %v2827 = vld [vmem:[%s365 + $0x5c8] sm:$0xff]
        %v2828 = vld [vmem:[%s365 + $0x5d0] sm:$0xff]
        %v2829 = vld [vmem:[%s365 + $0x5d8] sm:$0xff]
        %v2830 = vld [vmem:[%s365 + $0x5e0] sm:$0xff]
        %v2831 = vld [vmem:[%s365 + $0x5e8] sm:$0xff]
        %v2832 = vld [vmem:[%s365 + $0x5f0] sm:$0xff]
        %v2833 = vld [vmem:[%s365 + $0x5f8] sm:$0xff]
        %v2834 = vld [vmem:[%s365 + $0x660] sm:$0xff]
        %v2835 = vld [vmem:[%s365 + $0x668] sm:$0xff]
        %v2836 = vld [vmem:[%s365 + $0x670] sm:$0xff]
        %v2837 = vld [vmem:[%s365 + $0x678] sm:$0xff]
        %v2838 = vld [vmem:[%s365 + $0x680] sm:$0xff]
        %v2839 = vld [vmem:[%s365 + $0x688] sm:$0xff]
        %v2840 = vld [vmem:[%s365 + $0x690] sm:$0xff]
        %v2841 = vld [vmem:[%s365 + $0x698] sm:$0xff]
        %v2842 = vld [vmem:[%s365 + $0x6a0] sm:$0xff]
        %v2843 = vld [vmem:[%s365 + $0x6a8] sm:$0xff]
        %v2844 = vld [vmem:[%s365 + $0x6b0] sm:$0xff]
        %v2845 = vld [vmem:[%s365 + $0x6b8] sm:$0xff]
        %v2846 = vld [vmem:[%s365 + $0x720] sm:$0xff]
        %v2847 = vld [vmem:[%s365 + $0x728] sm:$0xff]
        %v2848 = vld [vmem:[%s365 + $0x730] sm:$0xff]
        %v2849 = vld [vmem:[%s365 + $0x738] sm:$0xff]
        %v2850 = vld [vmem:[%s365 + $0x740] sm:$0xff]
        %v2851 = vld [vmem:[%s365 + $0x748] sm:$0xff]
        %v2852 = vld [vmem:[%s365 + $0x750] sm:$0xff]
        %v2853 = vld [vmem:[%s365 + $0x758] sm:$0xff]
        %v2854 = vld [vmem:[%s365 + $0x760] sm:$0xff]
        %v2855 = vld [vmem:[%s365 + $0x768] sm:$0xff]
        %v2856 = vld [vmem:[%s365 + $0x770] sm:$0xff]
        %v2857 = vld [vmem:[%s365 + $0x778] sm:$0xff]
        %v2858 = vld [vmem:[%s365 + $0x7e0] sm:$0xff]
        %v2859 = vld [vmem:[%s365 + $0x7e8] sm:$0xff]
        %v2860 = vld [vmem:[%s365 + $0x7f0] sm:$0xff]
        %v2861 = vld [vmem:[%s365 + $0x7f8] sm:$0xff]
        %v2862 = vld [vmem:[%s365 + $0x800] sm:$0xff]
        %v2863 = vld [vmem:[%s365 + $0x808] sm:$0xff]
        %v2864 = vld [vmem:[%s365 + $0x810] sm:$0xff]
        %v2865 = vld [vmem:[%s365 + $0x818] sm:$0xff]
        %v2866 = vld [vmem:[%s365 + $0x820] sm:$0xff]
        %v2867 = vld [vmem:[%s365 + $0x828] sm:$0xff]
        %v2868 = vld [vmem:[%s365 + $0x830] sm:$0xff]
        %v2869 = vld [vmem:[%s365 + $0x838] sm:$0xff]
        %v2870 = vld [vmem:[%s365 + $0x8a0] sm:$0xff]
        %v2871 = vld [vmem:[%s365 + $0x8a8] sm:$0xff]
        %v2872 = vld [vmem:[%s365 + $0x8b0] sm:$0xff]
        %v2873 = vld [vmem:[%s365 + $0x8b8] sm:$0xff]
        %v2874 = vld [vmem:[%s365 + $0x8c0] sm:$0xff]
        %v2875 = vld [vmem:[%s365 + $0x8c8] sm:$0xff]
        %v2876 = vld [vmem:[%s365 + $0x8d0] sm:$0xff]
        %v2877 = vld [vmem:[%s365 + $0x8d8] sm:$0xff]
        %v2878 = vld [vmem:[%s365 + $0x8e0] sm:$0xff]
        %v2879 = vld [vmem:[%s365 + $0x8e8] sm:$0xff]
        %v2880 = vld [vmem:[%s365 + $0x8f0] sm:$0xff]
        %v2881 = vld [vmem:[%s365 + $0x8f8] sm:$0xff]
        %v2882 = vld [vmem:[%s365 + $0x960] sm:$0xff]
        %v2883 = vld [vmem:[%s365 + $0x968] sm:$0xff]
        %v2884 = vld [vmem:[%s365 + $0x970] sm:$0xff]
        %v2885 = vld [vmem:[%s365 + $0x978] sm:$0xff]
        %v2886 = vld [vmem:[%s365 + $0x980] sm:$0xff]
        %v2887 = vld [vmem:[%s365 + $0x988] sm:$0xff]
        %v2888 = vld [vmem:[%s365 + $0x990] sm:$0xff]
        %v2889 = vld [vmem:[%s365 + $0x998] sm:$0xff]
        %v2890 = vld [vmem:[%s365 + $0x9a0] sm:$0xff]
        %v2891 = vld [vmem:[%s365 + $0x9a8] sm:$0xff]
        %v2892 = vld [vmem:[%s365 + $0x9b0] sm:$0xff]
        %v2893 = vld [vmem:[%s365 + $0x9b8] sm:$0xff]
        %v2894 = vld [vmem:[%s365 + $0xa20] sm:$0xff]
        %v2895 = vld [vmem:[%s365 + $0xa28] sm:$0xff]
        %v2896 = vld [vmem:[%s365 + $0xa30] sm:$0xff]
        %v2897 = vld [vmem:[%s365 + $0xa38] sm:$0xff]
        %v2898 = vld [vmem:[%s365 + $0xa40] sm:$0xff]
        %v2899 = vld [vmem:[%s365 + $0xa48] sm:$0xff]
        %v2900 = vld [vmem:[%s365 + $0xa50] sm:$0xff]
        %v2901 = vld [vmem:[%s365 + $0xa58] sm:$0xff]
        %v2902 = vld [vmem:[%s365 + $0xa60] sm:$0xff]
        %v2903 = vld [vmem:[%s365 + $0xa68] sm:$0xff]
        %v2904 = vld [vmem:[%s365 + $0xa70] sm:$0xff]
        %v2905 = vld [vmem:[%s365 + $0xa78] sm:$0xff]
        %v2906 = vld [vmem:[%s365 + $0xae0] sm:$0xff]
        %v2907 = vld [vmem:[%s365 + $0xae8] sm:$0xff]
        %v2908 = vld [vmem:[%s365 + $0xaf0] sm:$0xff]
        %v2909 = vld [vmem:[%s365 + $0xaf8] sm:$0xff]
        %v2910 = vld [vmem:[%s365 + $0xb00] sm:$0xff]
        %v2911 = vld [vmem:[%s365 + $0xb08] sm:$0xff]
        %v2912 = vld [vmem:[%s365 + $0xb10] sm:$0xff]
        %v2913 = vld [vmem:[%s365 + $0xb18] sm:$0xff]
        %v2914 = vld [vmem:[%s365 + $0xb20] sm:$0xff]
        %v2915 = vld [vmem:[%s365 + $0xb28] sm:$0xff]
        %v2916 = vld [vmem:[%s365 + $0xb30] sm:$0xff]
        %v2917 = vld [vmem:[%s365 + $0xb38] sm:$0xff]
        %v2918 = vld [vmem:[%s365 + $0xba0] sm:$0xff]
        %v2919 = vld [vmem:[%s365 + $0xba8] sm:$0xff]
        %v2920 = vld [vmem:[%s365 + $0xbb0] sm:$0xff]
        %v2921 = vld [vmem:[%s365 + $0xbb8] sm:$0xff]
        %v2922 = vld [vmem:[%s365 + $0xbc0] sm:$0xff]
        %v2923 = vld [vmem:[%s365 + $0xbc8] sm:$0xff]
        %v2924 = vld [vmem:[%s365 + $0xbd0] sm:$0xff]
        %v2925 = vld [vmem:[%s365 + $0xbd8] sm:$0xff]
        %v2926 = vld [vmem:[%s365 + $0xbe0] sm:$0xff]
        %v2927 = vld [vmem:[%s365 + $0xbe8] sm:$0xff]
        %v2928 = vld [vmem:[%s365 + $0xbf0] sm:$0xff]
        %v2929 = vld [vmem:[%s365 + $0xbf8] sm:$0xff]
        %v2930 = vld [vmem:[%s374 + $0x18] sm:$0xff]
        %v2931 = vld [vmem:[%s374 + $0x20] sm:$0xff]
        %v2932 = vld [vmem:[%s374 + $0x28] sm:$0xff]
        %v3125 = vunpack.c.l.b16 %v2738
        %v3126 = vunpack.c.h.b16 %v2738
        %v3127 = vunpack.c.l.b16 %v2739
        %v3128 = vunpack.c.h.b16 %v2739
        %v3129 = vunpack.c.l.b16 %v2740
        %v3130 = vunpack.c.h.b16 %v2740
        %v3131 = vunpack.c.l.b16 %v2741
        %v3132 = vunpack.c.h.b16 %v2741
        %v3133 = vunpack.c.l.b16 %v2742
        %v3134 = vunpack.c.h.b16 %v2742
        %v3135 = vunpack.c.l.b16 %v2743
        %v3136 = vunpack.c.h.b16 %v2743
        %v3137 = vunpack.c.l.b16 %v2744
        %v3138 = vunpack.c.h.b16 %v2744
        %v3139 = vunpack.c.l.b16 %v2745
        %v3140 = vunpack.c.h.b16 %v2745
        %v3141 = vunpack.c.l.b16 %v2746
        %v3142 = vunpack.c.h.b16 %v2746
        %v3143 = vunpack.c.l.b16 %v2747
        %v3144 = vunpack.c.h.b16 %v2747
        %v3145 = vunpack.c.l.b16 %v2748
        %v3146 = vunpack.c.h.b16 %v2748
        %v3147 = vunpack.c.l.b16 %v2749
        %v3148 = vunpack.c.h.b16 %v2749
        %v3149 = vunpack.c.l.b16 %v2750
        %v3150 = vunpack.c.h.b16 %v2750
        %v3151 = vunpack.c.l.b16 %v2751
        %v3152 = vunpack.c.h.b16 %v2751
        %v3153 = vunpack.c.l.b16 %v2752
        %v3154 = vunpack.c.h.b16 %v2752
        %v3155 = vunpack.c.l.b16 %v2753
        %v3156 = vunpack.c.h.b16 %v2753
        %v3157 = vunpack.c.l.b16 %v2754
        %v3158 = vunpack.c.h.b16 %v2754
        %v3159 = vunpack.c.l.b16 %v2755
        %v3160 = vunpack.c.h.b16 %v2755
        %v3161 = vunpack.c.l.b16 %v2756
        %v3162 = vunpack.c.h.b16 %v2756
        %v3163 = vunpack.c.l.b16 %v2757
        %v3164 = vunpack.c.h.b16 %v2757
        %v3165 = vunpack.c.l.b16 %v2758
        %v3166 = vunpack.c.h.b16 %v2758
        %v3167 = vunpack.c.l.b16 %v2759
        %v3168 = vunpack.c.h.b16 %v2759
        %v3169 = vunpack.c.l.b16 %v2760
        %v3170 = vunpack.c.h.b16 %v2760
        %v3171 = vunpack.c.l.b16 %v2761
        %v3172 = vunpack.c.h.b16 %v2761
        %v3173 = vunpack.c.l.b16 %v2762
        %v3174 = vunpack.c.h.b16 %v2762
        %v3175 = vunpack.c.l.b16 %v2763
        %v3176 = vunpack.c.h.b16 %v2763
        %v3177 = vunpack.c.l.b16 %v2764
        %v3178 = vunpack.c.h.b16 %v2764
        %v3179 = vunpack.c.l.b16 %v2765
        %v3180 = vunpack.c.h.b16 %v2765
        %v3181 = vunpack.c.l.b16 %v2766
        %v3182 = vunpack.c.h.b16 %v2766
        %v3183 = vunpack.c.l.b16 %v2767
        %v3184 = vunpack.c.h.b16 %v2767
        %v3185 = vunpack.c.l.b16 %v2768
        %v3186 = vunpack.c.h.b16 %v2768
        %v3187 = vunpack.c.l.b16 %v2769
        %v3188 = vunpack.c.h.b16 %v2769
        %v3189 = vunpack.c.l.b16 %v2770
        %v3190 = vunpack.c.h.b16 %v2770
        %v3191 = vunpack.c.l.b16 %v2771
        %v3192 = vunpack.c.h.b16 %v2771
        %v3193 = vunpack.c.l.b16 %v2772
        %v3194 = vunpack.c.h.b16 %v2772
        %v3195 = vunpack.c.l.b16 %v2773
        %v3196 = vunpack.c.h.b16 %v2773
        %v3197 = vunpack.c.l.b16 %v2774
        %v3198 = vunpack.c.h.b16 %v2774
        %v3199 = vunpack.c.l.b16 %v2775
        %v3200 = vunpack.c.h.b16 %v2775
        %v3201 = vunpack.c.l.b16 %v2776
        %v3202 = vunpack.c.h.b16 %v2776
        %v3203 = vunpack.c.l.b16 %v2777
        %v3204 = vunpack.c.h.b16 %v2777
        %v3205 = vunpack.c.l.b16 %v2778
        %v3206 = vunpack.c.h.b16 %v2778
        %v3207 = vunpack.c.l.b16 %v2779
        %v3208 = vunpack.c.h.b16 %v2779
        %v3209 = vunpack.c.l.b16 %v2780
        %v3210 = vunpack.c.h.b16 %v2780
        %v3211 = vunpack.c.l.b16 %v2781
        %v3212 = vunpack.c.h.b16 %v2781
        %v3213 = vunpack.c.l.b16 %v2782
        %v3214 = vunpack.c.h.b16 %v2782
        %v3215 = vunpack.c.l.b16 %v2783
        %v3216 = vunpack.c.h.b16 %v2783
        %v3217 = vunpack.c.l.b16 %v2784
        %v3218 = vunpack.c.h.b16 %v2784
        %v3219 = vunpack.c.l.b16 %v2785
        %v3220 = vunpack.c.h.b16 %v2785
        %v3221 = vunpack.c.l.b16 %v2786
        %v3222 = vunpack.c.h.b16 %v2786
        %v3223 = vunpack.c.l.b16 %v2787
        %v3224 = vunpack.c.h.b16 %v2787
        %v3225 = vunpack.c.l.b16 %v2788
        %v3226 = vunpack.c.h.b16 %v2788
        %v3227 = vunpack.c.l.b16 %v2789
        %v3228 = vunpack.c.h.b16 %v2789
        %v3229 = vunpack.c.l.b16 %v2790
        %v3230 = vunpack.c.h.b16 %v2790
        %v3231 = vunpack.c.l.b16 %v2791
        %v3232 = vunpack.c.h.b16 %v2791
        %v3233 = vunpack.c.l.b16 %v2792
        %v3234 = vunpack.c.h.b16 %v2792
        %v3235 = vunpack.c.l.b16 %v2793
        %v3236 = vunpack.c.h.b16 %v2793
        %v3237 = vunpack.c.l.b16 %v2794
        %v3238 = vunpack.c.h.b16 %v2794
        %v3239 = vunpack.c.l.b16 %v2795
        %v3240 = vunpack.c.h.b16 %v2795
        %v3241 = vunpack.c.l.b16 %v2796
        %v3242 = vunpack.c.h.b16 %v2796
        %v3243 = vunpack.c.l.b16 %v2797
        %v3244 = vunpack.c.h.b16 %v2797
        %v3245 = vunpack.c.l.b16 %v2798
        %v3246 = vunpack.c.h.b16 %v2798
        %v3247 = vunpack.c.l.b16 %v2799
        %v3248 = vunpack.c.h.b16 %v2799
        %v3249 = vunpack.c.l.b16 %v2800
        %v3250 = vunpack.c.h.b16 %v2800
        %v3251 = vunpack.c.l.b16 %v2801
        %v3252 = vunpack.c.h.b16 %v2801
        %v3253 = vunpack.c.l.b16 %v2802
        %v3254 = vunpack.c.h.b16 %v2802
        %v3255 = vunpack.c.l.b16 %v2803
        %v3256 = vunpack.c.h.b16 %v2803
        %v3257 = vunpack.c.l.b16 %v2804
        %v3258 = vunpack.c.h.b16 %v2804
        %v3259 = vunpack.c.l.b16 %v2805
        %v3260 = vunpack.c.h.b16 %v2805
        %v3261 = vunpack.c.l.b16 %v2806
        %v3262 = vunpack.c.h.b16 %v2806
        %v3263 = vunpack.c.l.b16 %v2807
        %v3264 = vunpack.c.h.b16 %v2807
        %v3265 = vunpack.c.l.b16 %v2808
        %v3266 = vunpack.c.h.b16 %v2808
        %v3267 = vunpack.c.l.b16 %v2809
        %v3268 = vunpack.c.h.b16 %v2809
        %v3269 = vunpack.c.l.b16 %v2810
        %v3270 = vunpack.c.h.b16 %v2810
        %v3271 = vunpack.c.l.b16 %v2811
        %v3272 = vunpack.c.h.b16 %v2811
        %v3273 = vunpack.c.l.b16 %v2812
        %v3274 = vunpack.c.h.b16 %v2812
        %v3275 = vunpack.c.l.b16 %v2813
        %v3276 = vunpack.c.h.b16 %v2813
        %v3277 = vunpack.c.l.b16 %v2814
        %v3278 = vunpack.c.h.b16 %v2814
        %v3279 = vunpack.c.l.b16 %v2815
        %v3280 = vunpack.c.h.b16 %v2815
        %v3281 = vunpack.c.l.b16 %v2816
        %v3282 = vunpack.c.h.b16 %v2816
        %v3283 = vunpack.c.l.b16 %v2817
        %v3284 = vunpack.c.h.b16 %v2817
        %v3285 = vunpack.c.l.b16 %v2818
        %v3286 = vunpack.c.h.b16 %v2818
        %v3287 = vunpack.c.l.b16 %v2819
        %v3288 = vunpack.c.h.b16 %v2819
        %v3289 = vunpack.c.l.b16 %v2820
        %v3290 = vunpack.c.h.b16 %v2820
        %v3291 = vunpack.c.l.b16 %v2821
        %v3292 = vunpack.c.h.b16 %v2821
        %v3293 = vunpack.c.l.b16 %v2822
        %v3294 = vunpack.c.h.b16 %v2822
        %v3295 = vunpack.c.l.b16 %v2823
        %v3296 = vunpack.c.h.b16 %v2823
        %v3297 = vunpack.c.l.b16 %v2824
        %v3298 = vunpack.c.h.b16 %v2824
        %v3299 = vunpack.c.l.b16 %v2825
        %v3300 = vunpack.c.h.b16 %v2825
        %v3301 = vunpack.c.l.b16 %v2826
        %v3302 = vunpack.c.h.b16 %v2826
        %v3303 = vunpack.c.l.b16 %v2827
        %v3304 = vunpack.c.h.b16 %v2827
        %v3305 = vunpack.c.l.b16 %v2828
        %v3306 = vunpack.c.h.b16 %v2828
        %v3307 = vunpack.c.l.b16 %v2829
        %v3308 = vunpack.c.h.b16 %v2829
        %v3309 = vunpack.c.l.b16 %v2830
        %v3310 = vunpack.c.h.b16 %v2830
        %v3311 = vunpack.c.l.b16 %v2831
        %v3312 = vunpack.c.h.b16 %v2831
        %v3313 = vunpack.c.l.b16 %v2832
        %v3314 = vunpack.c.h.b16 %v2832
        %v3315 = vunpack.c.l.b16 %v2833
        %v3316 = vunpack.c.h.b16 %v2833
        %v3317 = vunpack.c.l.b16 %v2834
        %v3318 = vunpack.c.h.b16 %v2834
        %v3319 = vunpack.c.l.b16 %v2835
        %v3320 = vunpack.c.h.b16 %v2835
        %v3321 = vunpack.c.l.b16 %v2836
        %v3322 = vunpack.c.h.b16 %v2836
        %v3323 = vunpack.c.l.b16 %v2837
        %v3324 = vunpack.c.h.b16 %v2837
        %v3325 = vunpack.c.l.b16 %v2838
        %v3326 = vunpack.c.h.b16 %v2838
        %v3327 = vunpack.c.l.b16 %v2839
        %v3328 = vunpack.c.h.b16 %v2839
        %v3329 = vunpack.c.l.b16 %v2840
        %v3330 = vunpack.c.h.b16 %v2840
        %v3331 = vunpack.c.l.b16 %v2841
        %v3332 = vunpack.c.h.b16 %v2841
        %v3333 = vunpack.c.l.b16 %v2842
        %v3334 = vunpack.c.h.b16 %v2842
        %v3335 = vunpack.c.l.b16 %v2843
        %v3336 = vunpack.c.h.b16 %v2843
        %v3337 = vunpack.c.l.b16 %v2844
        %v3338 = vunpack.c.h.b16 %v2844
        %v3339 = vunpack.c.l.b16 %v2845
        %v3340 = vunpack.c.h.b16 %v2845
        %v3341 = vunpack.c.l.b16 %v2846
        %v3342 = vunpack.c.h.b16 %v2846
        %v3343 = vunpack.c.l.b16 %v2847
        %v3344 = vunpack.c.h.b16 %v2847
        %v3345 = vunpack.c.l.b16 %v2848
        %v3346 = vunpack.c.h.b16 %v2848
        %v3347 = vunpack.c.l.b16 %v2849
        %v3348 = vunpack.c.h.b16 %v2849
        %v3349 = vunpack.c.l.b16 %v2850
        %v3350 = vunpack.c.h.b16 %v2850
        %v3351 = vunpack.c.l.b16 %v2851
        %v3352 = vunpack.c.h.b16 %v2851
        %v3353 = vunpack.c.l.b16 %v2852
        %v3354 = vunpack.c.h.b16 %v2852
        %v3355 = vunpack.c.l.b16 %v2853
        %v3356 = vunpack.c.h.b16 %v2853
        %v3357 = vunpack.c.l.b16 %v2854
        %v3358 = vunpack.c.h.b16 %v2854
        %v3359 = vunpack.c.l.b16 %v2855
        %v3360 = vunpack.c.h.b16 %v2855
        %v3361 = vunpack.c.l.b16 %v2856
        %v3362 = vunpack.c.h.b16 %v2856
        %v3363 = vunpack.c.l.b16 %v2857
        %v3364 = vunpack.c.h.b16 %v2857
        %v3365 = vunpack.c.l.b16 %v2858
        %v3366 = vunpack.c.h.b16 %v2858
        %v3367 = vunpack.c.l.b16 %v2859
        %v3368 = vunpack.c.h.b16 %v2859
        %v3369 = vunpack.c.l.b16 %v2860
        %v3370 = vunpack.c.h.b16 %v2860
        %v3371 = vunpack.c.l.b16 %v2861
        %v3372 = vunpack.c.h.b16 %v2861
        %v3373 = vunpack.c.l.b16 %v2862
        %v3374 = vunpack.c.h.b16 %v2862
        %v3375 = vunpack.c.l.b16 %v2863
        %v3376 = vunpack.c.h.b16 %v2863
        %v3377 = vunpack.c.l.b16 %v2864
        %v3378 = vunpack.c.h.b16 %v2864
        %v3379 = vunpack.c.l.b16 %v2865
        %v3380 = vunpack.c.h.b16 %v2865
        %v3381 = vunpack.c.l.b16 %v2866
        %v3382 = vunpack.c.h.b16 %v2866
        %v3383 = vunpack.c.l.b16 %v2867
        %v3384 = vunpack.c.h.b16 %v2867
        %v3385 = vunpack.c.l.b16 %v2868
        %v3386 = vunpack.c.h.b16 %v2868
        %v3387 = vunpack.c.l.b16 %v2869
        %v3388 = vunpack.c.h.b16 %v2869
        %v3389 = vunpack.c.l.b16 %v2870
        %v3390 = vunpack.c.h.b16 %v2870
        %v3391 = vunpack.c.l.b16 %v2871
        %v3392 = vunpack.c.h.b16 %v2871
        %v3393 = vunpack.c.l.b16 %v2872
        %v3394 = vunpack.c.h.b16 %v2872
        %v3395 = vunpack.c.l.b16 %v2873
        %v3396 = vunpack.c.h.b16 %v2873
        %v3397 = vunpack.c.l.b16 %v2874
        %v3398 = vunpack.c.h.b16 %v2874
        %v3399 = vunpack.c.l.b16 %v2875
        %v3400 = vunpack.c.h.b16 %v2875
        %v3401 = vunpack.c.l.b16 %v2876
        %v3402 = vunpack.c.h.b16 %v2876
        %v3403 = vunpack.c.l.b16 %v2877
        %v3404 = vunpack.c.h.b16 %v2877
        %v3405 = vunpack.c.l.b16 %v2878
        %v3406 = vunpack.c.h.b16 %v2878
        %v3407 = vunpack.c.l.b16 %v2879
        %v3408 = vunpack.c.h.b16 %v2879
        %v3409 = vunpack.c.l.b16 %v2880
        %v3410 = vunpack.c.h.b16 %v2880
        %v3411 = vunpack.c.l.b16 %v2881
        %v3412 = vunpack.c.h.b16 %v2881
        %v3413 = vunpack.c.l.b16 %v2882
        %v3414 = vunpack.c.h.b16 %v2882
        %v3415 = vunpack.c.l.b16 %v2883
        %v3416 = vunpack.c.h.b16 %v2883
        %v3417 = vunpack.c.l.b16 %v2884
        %v3418 = vunpack.c.h.b16 %v2884
        %v3419 = vunpack.c.l.b16 %v2885
        %v3420 = vunpack.c.h.b16 %v2885
        %v3421 = vunpack.c.l.b16 %v2886
        %v3422 = vunpack.c.h.b16 %v2886
        %v3423 = vunpack.c.l.b16 %v2887
        %v3424 = vunpack.c.h.b16 %v2887
        %v3425 = vunpack.c.l.b16 %v2888
        %v3426 = vunpack.c.h.b16 %v2888
        %v3427 = vunpack.c.l.b16 %v2889
        %v3428 = vunpack.c.h.b16 %v2889
        %v3429 = vunpack.c.l.b16 %v2890
        %v3430 = vunpack.c.h.b16 %v2890
        %v3431 = vunpack.c.l.b16 %v2891
        %v3432 = vunpack.c.h.b16 %v2891
        %v3433 = vunpack.c.l.b16 %v2892
        %v3434 = vunpack.c.h.b16 %v2892
        %v3435 = vunpack.c.l.b16 %v2893
        %v3436 = vunpack.c.h.b16 %v2893
        %v3437 = vunpack.c.l.b16 %v2894
        %v3438 = vunpack.c.h.b16 %v2894
        %v3439 = vunpack.c.l.b16 %v2895
        %v3440 = vunpack.c.h.b16 %v2895
        %v3441 = vunpack.c.l.b16 %v2896
        %v3442 = vunpack.c.h.b16 %v2896
        %v3443 = vunpack.c.l.b16 %v2897
        %v3444 = vunpack.c.h.b16 %v2897
        %v3445 = vunpack.c.l.b16 %v2898
        %v3446 = vunpack.c.h.b16 %v2898
        %v3447 = vunpack.c.l.b16 %v2899
        %v3448 = vunpack.c.h.b16 %v2899
        %v3449 = vunpack.c.l.b16 %v2900
        %v3450 = vunpack.c.h.b16 %v2900
        %v3451 = vunpack.c.l.b16 %v2901
        %v3452 = vunpack.c.h.b16 %v2901
        %v3453 = vunpack.c.l.b16 %v2902
        %v3454 = vunpack.c.h.b16 %v2902
        %v3455 = vunpack.c.l.b16 %v2903
        %v3456 = vunpack.c.h.b16 %v2903
        %v3457 = vunpack.c.l.b16 %v2904
        %v3458 = vunpack.c.h.b16 %v2904
        %v3459 = vunpack.c.l.b16 %v2905
        %v3460 = vunpack.c.h.b16 %v2905
        %v3461 = vunpack.c.l.b16 %v2906
        %v3462 = vunpack.c.h.b16 %v2906
        %v3463 = vunpack.c.l.b16 %v2907
        %v3464 = vunpack.c.h.b16 %v2907
        %v3465 = vunpack.c.l.b16 %v2908
        %v3466 = vunpack.c.h.b16 %v2908
        %v3467 = vunpack.c.l.b16 %v2909
        %v3468 = vunpack.c.h.b16 %v2909
        %v3469 = vunpack.c.l.b16 %v2910
        %v3470 = vunpack.c.h.b16 %v2910
        %v3471 = vunpack.c.l.b16 %v2911
        %v3472 = vunpack.c.h.b16 %v2911
        %v3473 = vunpack.c.l.b16 %v2912
        %v3474 = vunpack.c.h.b16 %v2912
        %v3475 = vunpack.c.l.b16 %v2913
        %v3476 = vunpack.c.h.b16 %v2913
        %v3477 = vunpack.c.l.b16 %v2914
        %v3478 = vunpack.c.h.b16 %v2914
        %v3479 = vunpack.c.l.b16 %v2915
        %v3480 = vunpack.c.h.b16 %v2915
        %v3481 = vunpack.c.l.b16 %v2916
        %v3482 = vunpack.c.h.b16 %v2916
        %v3483 = vunpack.c.l.b16 %v2917
        %v3484 = vunpack.c.h.b16 %v2917
        %v3485 = vunpack.c.l.b16 %v2918
        %v3486 = vunpack.c.h.b16 %v2918
        %v3487 = vunpack.c.l.b16 %v2919
        %v3488 = vunpack.c.h.b16 %v2919
        %v3489 = vunpack.c.l.b16 %v2920
        %v3490 = vunpack.c.h.b16 %v2920
        %v3491 = vunpack.c.l.b16 %v2921
        %v3492 = vunpack.c.h.b16 %v2921
        %v3493 = vunpack.c.l.b16 %v2922
        %v3494 = vunpack.c.h.b16 %v2922
        %v3495 = vunpack.c.l.b16 %v2923
        %v3496 = vunpack.c.h.b16 %v2923
        %v3497 = vunpack.c.l.b16 %v2924
        %v3498 = vunpack.c.h.b16 %v2924
        %v3499 = vunpack.c.l.b16 %v2925
        %v3500 = vunpack.c.h.b16 %v2925
        %v3501 = vunpack.c.l.b16 %v2926
        %v3502 = vunpack.c.h.b16 %v2926
        %v3503 = vunpack.c.l.b16 %v2927
        %v3504 = vunpack.c.h.b16 %v2927
        %v3505 = vunpack.c.l.b16 %v2928
        %v3506 = vunpack.c.h.b16 %v2928
        %v3507 = vunpack.c.l.b16 %v2929
        %v3508 = vunpack.c.h.b16 %v2929
        %v3509 = vpack.c.b16 %v3149, %v3125
        %v3510 = vpack.c.b16 %v3150, %v3126
        %v3511 = vpack.c.b16 %v3151, %v3127
        %v3512 = vpack.c.b16 %v3152, %v3128
        %v3513 = vpack.c.b16 %v3153, %v3129
        %v3514 = vpack.c.b16 %v3154, %v3130
        %v3515 = vpack.c.b16 %v3155, %v3131
        %v3516 = vpack.c.b16 %v3156, %v3132
        %v3517 = vpack.c.b16 %v3157, %v3133
        %v3518 = vpack.c.b16 %v3158, %v3134
        %v3519 = vpack.c.b16 %v3159, %v3135
        %v3520 = vpack.c.b16 %v3160, %v3136
        %v3521 = vpack.c.b16 %v3161, %v3137
        %v3522 = vpack.c.b16 %v3162, %v3138
        %v3523 = vpack.c.b16 %v3163, %v3139
        %v3524 = vpack.c.b16 %v3164, %v3140
        %v3525 = vpack.c.b16 %v3165, %v3141
        %v3526 = vpack.c.b16 %v3166, %v3142
        %v3527 = vpack.c.b16 %v3167, %v3143
        %v3528 = vpack.c.b16 %v3168, %v3144
        %v3529 = vpack.c.b16 %v3169, %v3145
        %v3530 = vpack.c.b16 %v3170, %v3146
        %v3531 = vpack.c.b16 %v3171, %v3147
        %v3532 = vpack.c.b16 %v3172, %v3148
        %v3533 = vpack.c.b16 %v3197, %v3173
        %v3534 = vpack.c.b16 %v3198, %v3174
        %v3535 = vpack.c.b16 %v3199, %v3175
        %v3536 = vpack.c.b16 %v3200, %v3176
        %v3537 = vpack.c.b16 %v3201, %v3177
        %v3538 = vpack.c.b16 %v3202, %v3178
        %v3539 = vpack.c.b16 %v3203, %v3179
        %v3540 = vpack.c.b16 %v3204, %v3180
        %v3541 = vpack.c.b16 %v3205, %v3181
        %v3542 = vpack.c.b16 %v3206, %v3182
        %v3543 = vpack.c.b16 %v3207, %v3183
        %v3544 = vpack.c.b16 %v3208, %v3184
        %v3545 = vpack.c.b16 %v3209, %v3185
        %v3546 = vpack.c.b16 %v3210, %v3186
        %v3547 = vpack.c.b16 %v3211, %v3187
        %v3548 = vpack.c.b16 %v3212, %v3188
        %v3549 = vpack.c.b16 %v3213, %v3189
        %v3550 = vpack.c.b16 %v3214, %v3190
        %v3551 = vpack.c.b16 %v3215, %v3191
        %v3552 = vpack.c.b16 %v3216, %v3192
        %v3553 = vpack.c.b16 %v3217, %v3193
        %v3554 = vpack.c.b16 %v3218, %v3194
        %v3555 = vpack.c.b16 %v3219, %v3195
        %v3556 = vpack.c.b16 %v3220, %v3196
        %v3557 = vpack.c.b16 %v3245, %v3221
        %v3558 = vpack.c.b16 %v3246, %v3222
        %v3559 = vpack.c.b16 %v3247, %v3223
        %v3560 = vpack.c.b16 %v3248, %v3224
        %v3561 = vpack.c.b16 %v3249, %v3225
        %v3562 = vpack.c.b16 %v3250, %v3226
        %v3563 = vpack.c.b16 %v3251, %v3227
        %v3564 = vpack.c.b16 %v3252, %v3228
        %v3565 = vpack.c.b16 %v3253, %v3229
        %v3566 = vpack.c.b16 %v3254, %v3230
        %v3567 = vpack.c.b16 %v3255, %v3231
        %v3568 = vpack.c.b16 %v3256, %v3232
        %v3569 = vpack.c.b16 %v3257, %v3233
        %v3570 = vpack.c.b16 %v3258, %v3234
        %v3571 = vpack.c.b16 %v3259, %v3235
        %v3572 = vpack.c.b16 %v3260, %v3236
        %v3573 = vpack.c.b16 %v3261, %v3237
        %v3574 = vpack.c.b16 %v3262, %v3238
        %v3575 = vpack.c.b16 %v3263, %v3239
        %v3576 = vpack.c.b16 %v3264, %v3240
        %v3577 = vpack.c.b16 %v3265, %v3241
        %v3578 = vpack.c.b16 %v3266, %v3242
        %v3579 = vpack.c.b16 %v3267, %v3243
        %v3580 = vpack.c.b16 %v3268, %v3244
        %v3581 = vpack.c.b16 %v3293, %v3269
        %v3582 = vpack.c.b16 %v3294, %v3270
        %v3583 = vpack.c.b16 %v3295, %v3271
        %v3584 = vpack.c.b16 %v3296, %v3272
        %v3585 = vpack.c.b16 %v3297, %v3273
        %v3586 = vpack.c.b16 %v3298, %v3274
        %v3587 = vpack.c.b16 %v3299, %v3275
        %v3588 = vpack.c.b16 %v3300, %v3276
        %v3589 = vpack.c.b16 %v3301, %v3277
        %v3590 = vpack.c.b16 %v3302, %v3278
        %v3591 = vpack.c.b16 %v3303, %v3279
        %v3592 = vpack.c.b16 %v3304, %v3280
        %v3593 = vpack.c.b16 %v3305, %v3281
        %v3594 = vpack.c.b16 %v3306, %v3282
        %v3595 = vpack.c.b16 %v3307, %v3283
        %v3596 = vpack.c.b16 %v3308, %v3284
        %v3597 = vpack.c.b16 %v3309, %v3285
        %v3598 = vpack.c.b16 %v3310, %v3286
        %v3599 = vpack.c.b16 %v3311, %v3287
        %v3600 = vpack.c.b16 %v3312, %v3288
        %v3601 = vpack.c.b16 %v3313, %v3289
        %v3602 = vpack.c.b16 %v3314, %v3290
        %v3603 = vpack.c.b16 %v3315, %v3291
        %v3604 = vpack.c.b16 %v3316, %v3292
        %v3605 = vpack.c.b16 %v3341, %v3317
        %v3606 = vpack.c.b16 %v3342, %v3318
        %v3607 = vpack.c.b16 %v3343, %v3319
        %v3608 = vpack.c.b16 %v3344, %v3320
        %v3609 = vpack.c.b16 %v3345, %v3321
        %v3610 = vpack.c.b16 %v3346, %v3322
        %v3611 = vpack.c.b16 %v3347, %v3323
        %v3612 = vpack.c.b16 %v3348, %v3324
        %v3613 = vpack.c.b16 %v3349, %v3325
        %v3614 = vpack.c.b16 %v3350, %v3326
        %v3615 = vpack.c.b16 %v3351, %v3327
        %v3616 = vpack.c.b16 %v3352, %v3328
        %v3617 = vpack.c.b16 %v3353, %v3329
        %v3618 = vpack.c.b16 %v3354, %v3330
        %v3619 = vpack.c.b16 %v3355, %v3331
        %v3620 = vpack.c.b16 %v3356, %v3332
        %v3621 = vpack.c.b16 %v3357, %v3333
        %v3622 = vpack.c.b16 %v3358, %v3334
        %v3623 = vpack.c.b16 %v3359, %v3335
        %v3624 = vpack.c.b16 %v3360, %v3336
        %v3625 = vpack.c.b16 %v3361, %v3337
        %v3626 = vpack.c.b16 %v3362, %v3338
        %v3627 = vpack.c.b16 %v3363, %v3339
        %v3628 = vpack.c.b16 %v3364, %v3340
        %v3629 = vpack.c.b16 %v3389, %v3365
        %v3630 = vpack.c.b16 %v3390, %v3366
        %v3631 = vpack.c.b16 %v3391, %v3367
        %v3632 = vpack.c.b16 %v3392, %v3368
        %v3633 = vpack.c.b16 %v3393, %v3369
        %v3634 = vpack.c.b16 %v3394, %v3370
        %v3635 = vpack.c.b16 %v3395, %v3371
        %v3636 = vpack.c.b16 %v3396, %v3372
        %v3637 = vpack.c.b16 %v3397, %v3373
        %v3638 = vpack.c.b16 %v3398, %v3374
        %v3639 = vpack.c.b16 %v3399, %v3375
        %v3640 = vpack.c.b16 %v3400, %v3376
        %v3641 = vpack.c.b16 %v3401, %v3377
        %v3642 = vpack.c.b16 %v3402, %v3378
        %v3643 = vpack.c.b16 %v3403, %v3379
        %v3644 = vpack.c.b16 %v3404, %v3380
        %v3645 = vpack.c.b16 %v3405, %v3381
        %v3646 = vpack.c.b16 %v3406, %v3382
        %v3647 = vpack.c.b16 %v3407, %v3383
        %v3648 = vpack.c.b16 %v3408, %v3384
        %v3649 = vpack.c.b16 %v3409, %v3385
        %v3650 = vpack.c.b16 %v3410, %v3386
        %v3651 = vpack.c.b16 %v3411, %v3387
        %v3652 = vpack.c.b16 %v3412, %v3388
        %v3653 = vpack.c.b16 %v3437, %v3413
        %v3654 = vpack.c.b16 %v3438, %v3414
        %v3655 = vpack.c.b16 %v3439, %v3415
        %v3656 = vpack.c.b16 %v3440, %v3416
        %v3657 = vpack.c.b16 %v3441, %v3417
        %v3658 = vpack.c.b16 %v3442, %v3418
        %v3659 = vpack.c.b16 %v3443, %v3419
        %v3660 = vpack.c.b16 %v3444, %v3420
        %v3661 = vpack.c.b16 %v3445, %v3421
        %v3662 = vpack.c.b16 %v3446, %v3422
        %v3663 = vpack.c.b16 %v3447, %v3423
        %v3664 = vpack.c.b16 %v3448, %v3424
        %v3665 = vpack.c.b16 %v3449, %v3425
        %v3666 = vpack.c.b16 %v3450, %v3426
        %v3667 = vpack.c.b16 %v3451, %v3427
        %v3668 = vpack.c.b16 %v3452, %v3428
        %v3669 = vpack.c.b16 %v3453, %v3429
        %v3670 = vpack.c.b16 %v3454, %v3430
        %v3671 = vpack.c.b16 %v3455, %v3431
        %v3672 = vpack.c.b16 %v3456, %v3432
        %v3673 = vpack.c.b16 %v3457, %v3433
        %v3674 = vpack.c.b16 %v3458, %v3434
        %v3675 = vpack.c.b16 %v3459, %v3435
        %v3676 = vpack.c.b16 %v3460, %v3436
        %v3677 = vpack.c.b16 %v3485, %v3461
        %v3678 = vpack.c.b16 %v3486, %v3462
        %v3679 = vpack.c.b16 %v3487, %v3463
        %v3680 = vpack.c.b16 %v3488, %v3464
        %v3681 = vpack.c.b16 %v3489, %v3465
        %v3682 = vpack.c.b16 %v3490, %v3466
        %v3683 = vpack.c.b16 %v3491, %v3467
        %v3684 = vpack.c.b16 %v3492, %v3468
        %v3685 = vpack.c.b16 %v3493, %v3469
        %v3686 = vpack.c.b16 %v3494, %v3470
        %v3687 = vpack.c.b16 %v3495, %v3471
        %v3688 = vpack.c.b16 %v3496, %v3472
        %v3689 = vpack.c.b16 %v3497, %v3473
        %v3690 = vpack.c.b16 %v3498, %v3474
        %v3691 = vpack.c.b16 %v3499, %v3475
        %v3692 = vpack.c.b16 %v3500, %v3476
        %v3693 = vpack.c.b16 %v3501, %v3477
        %v3694 = vpack.c.b16 %v3502, %v3478
        %v3695 = vpack.c.b16 %v3503, %v3479
        %v3696 = vpack.c.b16 %v3504, %v3480
        %v3697 = vpack.c.b16 %v3505, %v3481
        %v3698 = vpack.c.b16 %v3506, %v3482
        %v3699 = vpack.c.b16 %v3507, %v3483
        %v3700 = vpack.c.b16 %v3508, %v3484
        %v3896 = vlaneseq
        %v3897 = vshrl.u32 %v3896, 7
        %v3898 = vsub.s32 0, %v3897
        %v3899 = vrot.slane %v2930, %v3898
        %v3900 = vlaneseq
        %v3901 = vshrl.u32 %v3900, 7
        %v3902 = vsub.s32 1, %v3901
        %v3903 = vrot.slane %v2930, %v3902
        %v3904 = vlaneseq
        %v3905 = vshrl.u32 %v3904, 7
        %v3906 = vsub.s32 2, %v3905
        %v3907 = vrot.slane %v2930, %v3906
        %v3908 = vlaneseq
        %v3909 = vshrl.u32 %v3908, 7
        %v3910 = vsub.s32 3, %v3909
        %v3911 = vrot.slane %v2930, %v3910
        %v3912 = vlaneseq
        %v3913 = vshrl.u32 %v3912, 7
        %v3914 = vsub.s32 4, %v3913
        %v3915 = vrot.slane %v2930, %v3914
        %v3916 = vlaneseq
        %v3917 = vshrl.u32 %v3916, 7
        %v3918 = vsub.s32 5, %v3917
        %v3919 = vrot.slane %v2930, %v3918
        %v3920 = vlaneseq
        %v3921 = vshrl.u32 %v3920, 7
        %v3922 = vsub.s32 6, %v3921
        %v3923 = vrot.slane %v2930, %v3922
        %v3924 = vlaneseq
        %v3925 = vshrl.u32 %v3924, 7
        %v3926 = vsub.s32 7, %v3925
        %v3927 = vrot.slane %v2930, %v3926
        %v3928 = vlaneseq
        %v3929 = vshrl.u32 %v3928, 7
        %v3930 = vsub.s32 0, %v3929
        %v3931 = vrot.slane %v2931, %v3930
        %v3932 = vlaneseq
        %v3933 = vshrl.u32 %v3932, 7
        %v3934 = vsub.s32 1, %v3933
        %v3935 = vrot.slane %v2931, %v3934
        %v3936 = vlaneseq
        %v3937 = vshrl.u32 %v3936, 7
        %v3938 = vsub.s32 2, %v3937
        %v3939 = vrot.slane %v2931, %v3938
        %v3940 = vlaneseq
        %v3941 = vshrl.u32 %v3940, 7
        %v3942 = vsub.s32 3, %v3941
        %v3943 = vrot.slane %v2931, %v3942
        %v3944 = vlaneseq
        %v3945 = vshrl.u32 %v3944, 7
        %v3946 = vsub.s32 4, %v3945
        %v3947 = vrot.slane %v2931, %v3946
        %v3948 = vlaneseq
        %v3949 = vshrl.u32 %v3948, 7
        %v3950 = vsub.s32 5, %v3949
        %v3951 = vrot.slane %v2931, %v3950
        %v3952 = vlaneseq
        %v3953 = vshrl.u32 %v3952, 7
        %v3954 = vsub.s32 6, %v3953
        %v3955 = vrot.slane %v2931, %v3954
        %v3956 = vlaneseq
        %v3957 = vshrl.u32 %v3956, 7
        %v3958 = vsub.s32 7, %v3957
        %v3959 = vrot.slane %v2931, %v3958
        %v3960 = vlaneseq
        %v3961 = vshrl.u32 %v3960, 7
        %v3962 = vsub.s32 0, %v3961
        %v3963 = vrot.slane %v2932, %v3962
        %v3964 = vlaneseq
        %v3965 = vshrl.u32 %v3964, 7
        %v3966 = vsub.s32 1, %v3965
        %v3967 = vrot.slane %v2932, %v3966
        %v3968 = vlaneseq
        %v3969 = vshrl.u32 %v3968, 7
        %v3970 = vsub.s32 2, %v3969
        %v3971 = vrot.slane %v2932, %v3970
        %v3972 = vlaneseq
        %v3973 = vshrl.u32 %v3972, 7
        %v3974 = vsub.s32 3, %v3973
        %v3975 = vrot.slane %v2932, %v3974
        %v3976 = vlaneseq
        %v3977 = vshrl.u32 %v3976, 7
        %v3978 = vsub.s32 4, %v3977
        %v3979 = vrot.slane %v2932, %v3978
        %v3980 = vlaneseq
        %v3981 = vshrl.u32 %v3980, 7
        %v3982 = vsub.s32 5, %v3981
        %v3983 = vrot.slane %v2932, %v3982
        %v3984 = vlaneseq
        %v3985 = vshrl.u32 %v3984, 7
        %v3986 = vsub.s32 6, %v3985
        %v3987 = vrot.slane %v2932, %v3986
        %v3988 = vlaneseq
        %v3989 = vshrl.u32 %v3988, 7
        %v3990 = vsub.s32 7, %v3989
        %v3991 = vrot.slane %v2932, %v3990
        %4016 = vmatprep.subr.bf16.mxu0 %v3510
        %4017 = vmatpush1.bf16.msra.mxu0 %v3509
        %4018 = vmatprep.subr.bf16.mxu0 %v3534
        %4019 = vmatpush1.bf16.msra.mxu0 %v3533
        %4020 = vmatprep.subr.bf16.mxu0 %v3558
        %4021 = vmatpush1.bf16.msra.mxu0 %v3557
        %4022 = vmatprep.subr.bf16.mxu0 %v3582
        %4023 = vmatpush1.bf16.msra.mxu0 %v3581
        %4024 = vmatprep.subr.bf16.mxu0 %v3606
        %4025 = vmatpush1.bf16.msra.mxu0 %v3605
        %4026 = vmatprep.subr.bf16.mxu0 %v3630
        %4027 = vmatpush1.bf16.msra.mxu0 %v3629
        %4028 = vmatprep.subr.bf16.mxu0 %v3654
        %4029 = vmatpush1.bf16.msra.mxu0 %v3653
        %4030 = vmatprep.subr.bf16.mxu0 %v3678
        %4031 = vmatpush1.bf16.msra.mxu0 %v3677
        %4032 = vmatprep.subr.bf16.mxu0 0
        %4033 = vmatpush1.bf16.msra.mxu0 0
        %4034 = vmatprep.subr.bf16.mxu0 0
        %4035 = vmatpush1.bf16.msra.mxu0 0
        %4036 = vmatprep.subr.bf16.mxu0 0
        %4037 = vmatpush1.bf16.msra.mxu0 0
        %4038 = vmatprep.subr.bf16.mxu0 0
        %4039 = vmatpush1.bf16.msra.mxu0 0
        %4040 = vmatprep.subr.bf16.mxu0 0
        %4041 = vmatpush1.bf16.msra.mxu0 0
        %4042 = vmatprep.subr.bf16.mxu0 0
        %4043 = vmatpush1.bf16.msra.mxu0 0
        %4044 = vmatprep.subr.bf16.mxu0 0
        %4045 = vmatpush1.bf16.msra.mxu0 0
        %4046 = vmatprep.subr.bf16.mxu0 0
        %4047 = vmatpush1.bf16.msra.mxu0 0
        %4048 = vmatprep.mubr.bf16.mxu0 0
        %4049 = vmatmul.mubr.bf16.gmra.mrb[0].mxu0 %v766
        %v4050 = vpop.f32.mrb[0].mxu0
        %v4051 = vadd.f32 %v3899, %v4050
        %v4052 = vpop.f32.mrb[0].mxu0
        %v4053 = vadd.f32 %v3903, %v4052
        %v4054 = vpop.f32.mrb[0].mxu0
        %v4055 = vpop.f32.mrb[0].mxu0
        %4056 = vdwg.mxu0
        %4057 = vmatprep.subr.bf16.mxu0 %v3512
        %4058 = vmatpush1.bf16.msra.mxu0 %v3511
        %4059 = vmatprep.subr.bf16.mxu0 %v3536
        %4060 = vmatpush1.bf16.msra.mxu0 %v3535
        %4061 = vmatprep.subr.bf16.mxu0 %v3560
        %4062 = vmatpush1.bf16.msra.mxu0 %v3559
        %4063 = vmatprep.subr.bf16.mxu0 %v3584
        %4064 = vmatpush1.bf16.msra.mxu0 %v3583
        %4065 = vmatprep.subr.bf16.mxu0 %v3608
        %4066 = vmatpush1.bf16.msra.mxu0 %v3607
        %4067 = vmatprep.subr.bf16.mxu0 %v3632
        %4068 = vmatpush1.bf16.msra.mxu0 %v3631
        %4069 = vmatprep.subr.bf16.mxu0 %v3656
        %4070 = vmatpush1.bf16.msra.mxu0 %v3655
        %4071 = vmatprep.subr.bf16.mxu0 %v3680
        %4072 = vmatpush1.bf16.msra.mxu0 %v3679
        %4073 = vmatprep.subr.bf16.mxu0 0
        %4074 = vmatpush1.bf16.msra.mxu0 0
        %4075 = vmatprep.subr.bf16.mxu0 0
        %4076 = vmatpush1.bf16.msra.mxu0 0
        %4077 = vmatprep.subr.bf16.mxu0 0
        %4078 = vmatpush1.bf16.msra.mxu0 0
        %4079 = vmatprep.subr.bf16.mxu0 0
        %4080 = vmatpush1.bf16.msra.mxu0 0
        %4081 = vmatprep.subr.bf16.mxu0 0
        %4082 = vmatpush1.bf16.msra.mxu0 0
        %4083 = vmatprep.subr.bf16.mxu0 0
        %4084 = vmatpush1.bf16.msra.mxu0 0
        %4085 = vmatprep.subr.bf16.mxu0 0
        %4086 = vmatpush1.bf16.msra.mxu0 0
        %4087 = vmatprep.subr.bf16.mxu0 0
        %4088 = vmatpush1.bf16.msra.mxu0 0
        %4089 = vmatprep.mubr.bf16.mxu0 0
        %4090 = vmatmul.mubr.bf16.gmra.mrb[0].mxu0 %v766
        %v4091 = vpop.f32.mrb[0].mxu0
        %v4092 = vadd.f32 %v3907, %v4091
        %v4093 = vpop.f32.mrb[0].mxu0
        %v4094 = vadd.f32 %v3911, %v4093
        %v4095 = vpop.f32.mrb[0].mxu0
        %v4096 = vpop.f32.mrb[0].mxu0
        %4097 = vdwg.mxu0
        %4098 = vmatprep.subr.bf16.mxu0 %v3514
        %4099 = vmatpush1.bf16.msra.mxu0 %v3513
        %4100 = vmatprep.subr.bf16.mxu0 %v3538
        %4101 = vmatpush1.bf16.msra.mxu0 %v3537
        %4102 = vmatprep.subr.bf16.mxu0 %v3562
        %4103 = vmatpush1.bf16.msra.mxu0 %v3561
        %4104 = vmatprep.subr.bf16.mxu0 %v3586
        %4105 = vmatpush1.bf16.msra.mxu0 %v3585
        %4106 = vmatprep.subr.bf16.mxu0 %v3610
        %4107 = vmatpush1.bf16.msra.mxu0 %v3609
        %4108 = vmatprep.subr.bf16.mxu0 %v3634
        %4109 = vmatpush1.bf16.msra.mxu0 %v3633
        %4110 = vmatprep.subr.bf16.mxu0 %v3658
        %4111 = vmatpush1.bf16.msra.mxu0 %v3657
        %4112 = vmatprep.subr.bf16.mxu0 %v3682
        %4113 = vmatpush1.bf16.msra.mxu0 %v3681
        %4114 = vmatprep.subr.bf16.mxu0 0
        %4115 = vmatpush1.bf16.msra.mxu0 0
        %4116 = vmatprep.subr.bf16.mxu0 0
        %4117 = vmatpush1.bf16.msra.mxu0 0
        %4118 = vmatprep.subr.bf16.mxu0 0
        %4119 = vmatpush1.bf16.msra.mxu0 0
        %4120 = vmatprep.subr.bf16.mxu0 0
        %4121 = vmatpush1.bf16.msra.mxu0 0
        %4122 = vmatprep.subr.bf16.mxu0 0
        %4123 = vmatpush1.bf16.msra.mxu0 0
        %4124 = vmatprep.subr.bf16.mxu0 0
        %4125 = vmatpush1.bf16.msra.mxu0 0
        %4126 = vmatprep.subr.bf16.mxu0 0
        %4127 = vmatpush1.bf16.msra.mxu0 0
        %4128 = vmatprep.subr.bf16.mxu0 0
        %4129 = vmatpush1.bf16.msra.mxu0 0
        %4130 = vmatprep.mubr.bf16.mxu0 0
        %4131 = vmatmul.mubr.bf16.gmra.mrb[0].mxu0 %v766
        %v4132 = vpop.f32.mrb[0].mxu0
        %v4133 = vadd.f32 %v3915, %v4132
        %v4134 = vpop.f32.mrb[0].mxu0
        %v4135 = vadd.f32 %v3919, %v4134
        %v4136 = vpop.f32.mrb[0].mxu0
        %v4137 = vpop.f32.mrb[0].mxu0
        %4138 = vdwg.mxu0
        %4139 = vmatprep.subr.bf16.mxu0 %v3516
        %4140 = vmatpush1.bf16.msra.mxu0 %v3515
        %4141 = vmatprep.subr.bf16.mxu0 %v3540
        %4142 = vmatpush1.bf16.msra.mxu0 %v3539
        %4143 = vmatprep.subr.bf16.mxu0 %v3564
        %4144 = vmatpush1.bf16.msra.mxu0 %v3563
        %4145 = vmatprep.subr.bf16.mxu0 %v3588
        %4146 = vmatpush1.bf16.msra.mxu0 %v3587
        %4147 = vmatprep.subr.bf16.mxu0 %v3612
        %4148 = vmatpush1.bf16.msra.mxu0 %v3611
        %4149 = vmatprep.subr.bf16.mxu0 %v3636
        %4150 = vmatpush1.bf16.msra.mxu0 %v3635
        %4151 = vmatprep.subr.bf16.mxu0 %v3660
        %4152 = vmatpush1.bf16.msra.mxu0 %v3659
        %4153 = vmatprep.subr.bf16.mxu0 %v3684
        %4154 = vmatpush1.bf16.msra.mxu0 %v3683
        %4155 = vmatprep.subr.bf16.mxu0 0
        %4156 = vmatpush1.bf16.msra.mxu0 0
        %4157 = vmatprep.subr.bf16.mxu0 0
        %4158 = vmatpush1.bf16.msra.mxu0 0
        %4159 = vmatprep.subr.bf16.mxu0 0
        %4160 = vmatpush1.bf16.msra.mxu0 0
        %4161 = vmatprep.subr.bf16.mxu0 0
        %4162 = vmatpush1.bf16.msra.mxu0 0
        %4163 = vmatprep.subr.bf16.mxu0 0
        %4164 = vmatpush1.bf16.msra.mxu0 0
        %4165 = vmatprep.subr.bf16.mxu0 0
        %4166 = vmatpush1.bf16.msra.mxu0 0
        %4167 = vmatprep.subr.bf16.mxu0 0
        %4168 = vmatpush1.bf16.msra.mxu0 0
        %4169 = vmatprep.subr.bf16.mxu0 0
        %4170 = vmatpush1.bf16.msra.mxu0 0
        %4171 = vmatprep.mubr.bf16.mxu0 0
        %4172 = vmatmul.mubr.bf16.gmra.mrb[0].mxu0 %v766
        %v4173 = vpop.f32.mrb[0].mxu0
        %v4174 = vadd.f32 %v3923, %v4173
        %v4175 = vpop.f32.mrb[0].mxu0
        %v4176 = vadd.f32 %v3927, %v4175
        %v4177 = vpop.f32.mrb[0].mxu0
        %v4178 = vpop.f32.mrb[0].mxu0
        %4179 = vdwg.mxu0
        %4180 = vmatprep.subr.bf16.mxu0 %v3518
        %4181 = vmatpush1.bf16.msra.mxu0 %v3517
        %4182 = vmatprep.subr.bf16.mxu0 %v3542
        %4183 = vmatpush1.bf16.msra.mxu0 %v3541
        %4184 = vmatprep.subr.bf16.mxu0 %v3566
        %4185 = vmatpush1.bf16.msra.mxu0 %v3565
        %4186 = vmatprep.subr.bf16.mxu0 %v3590
        %4187 = vmatpush1.bf16.msra.mxu0 %v3589
        %4188 = vmatprep.subr.bf16.mxu0 %v3614
        %4189 = vmatpush1.bf16.msra.mxu0 %v3613
        %4190 = vmatprep.subr.bf16.mxu0 %v3638
        %4191 = vmatpush1.bf16.msra.mxu0 %v3637
        %4192 = vmatprep.subr.bf16.mxu0 %v3662
        %4193 = vmatpush1.bf16.msra.mxu0 %v3661
        %4194 = vmatprep.subr.bf16.mxu0 %v3686
        %4195 = vmatpush1.bf16.msra.mxu0 %v3685
        %4196 = vmatprep.subr.bf16.mxu0 0
        %4197 = vmatpush1.bf16.msra.mxu0 0
        %4198 = vmatprep.subr.bf16.mxu0 0
        %4199 = vmatpush1.bf16.msra.mxu0 0
        %4200 = vmatprep.subr.bf16.mxu0 0
        %4201 = vmatpush1.bf16.msra.mxu0 0
        %4202 = vmatprep.subr.bf16.mxu0 0
        %4203 = vmatpush1.bf16.msra.mxu0 0
        %4204 = vmatprep.subr.bf16.mxu0 0
        %4205 = vmatpush1.bf16.msra.mxu0 0
        %4206 = vmatprep.subr.bf16.mxu0 0
        %4207 = vmatpush1.bf16.msra.mxu0 0
        %4208 = vmatprep.subr.bf16.mxu0 0
        %4209 = vmatpush1.bf16.msra.mxu0 0
        %4210 = vmatprep.subr.bf16.mxu0 0
        %4211 = vmatpush1.bf16.msra.mxu0 0
        %4212 = vmatprep.mubr.bf16.mxu0 0
        %4213 = vmatmul.mubr.bf16.gmra.mrb[0].mxu0 %v766
        %v4214 = vpop.f32.mrb[0].mxu0
        %v4215 = vadd.f32 %v3931, %v4214
        %v4216 = vpop.f32.mrb[0].mxu0
        %v4217 = vadd.f32 %v3935, %v4216
        %v4218 = vpop.f32.mrb[0].mxu0
        %v4219 = vpop.f32.mrb[0].mxu0
        %4220 = vdwg.mxu0
        %4221 = vmatprep.subr.bf16.mxu0 %v3520
        %4222 = vmatpush1.bf16.msra.mxu0 %v3519
        %4223 = vmatprep.subr.bf16.mxu0 %v3544
        %4224 = vmatpush1.bf16.msra.mxu0 %v3543
        %4225 = vmatprep.subr.bf16.mxu0 %v3568
        %4226 = vmatpush1.bf16.msra.mxu0 %v3567
        %4227 = vmatprep.subr.bf16.mxu0 %v3592
        %4228 = vmatpush1.bf16.msra.mxu0 %v3591
        %4229 = vmatprep.subr.bf16.mxu0 %v3616
        %4230 = vmatpush1.bf16.msra.mxu0 %v3615
        %4231 = vmatprep.subr.bf16.mxu0 %v3640
        %4232 = vmatpush1.bf16.msra.mxu0 %v3639
        %4233 = vmatprep.subr.bf16.mxu0 %v3664
        %4234 = vmatpush1.bf16.msra.mxu0 %v3663
        %4235 = vmatprep.subr.bf16.mxu0 %v3688
        %4236 = vmatpush1.bf16.msra.mxu0 %v3687
        %4237 = vmatprep.subr.bf16.mxu0 0
        %4238 = vmatpush1.bf16.msra.mxu0 0
        %4239 = vmatprep.subr.bf16.mxu0 0
        %4240 = vmatpush1.bf16.msra.mxu0 0
        %4241 = vmatprep.subr.bf16.mxu0 0
        %4242 = vmatpush1.bf16.msra.mxu0 0
        %4243 = vmatprep.subr.bf16.mxu0 0
        %4244 = vmatpush1.bf16.msra.mxu0 0
        %4245 = vmatprep.subr.bf16.mxu0 0
        %4246 = vmatpush1.bf16.msra.mxu0 0
        %4247 = vmatprep.subr.bf16.mxu0 0
        %4248 = vmatpush1.bf16.msra.mxu0 0
        %4249 = vmatprep.subr.bf16.mxu0 0
        %4250 = vmatpush1.bf16.msra.mxu0 0
        %4251 = vmatprep.subr.bf16.mxu0 0
        %4252 = vmatpush1.bf16.msra.mxu0 0
        %4253 = vmatprep.mubr.bf16.mxu0 0
        %4254 = vmatmul.mubr.bf16.gmra.mrb[0].mxu0 %v766
        %v4255 = vpop.f32.mrb[0].mxu0
        %v4256 = vadd.f32 %v3939, %v4255
        %v4257 = vpop.f32.mrb[0].mxu0
        %v4258 = vadd.f32 %v3943, %v4257
        %v4259 = vpop.f32.mrb[0].mxu0
        %v4260 = vpop.f32.mrb[0].mxu0
        %4261 = vdwg.mxu0
        %4262 = vmatprep.subr.bf16.mxu0 %v3522
        %4263 = vmatpush1.bf16.msra.mxu0 %v3521
        %4264 = vmatprep.subr.bf16.mxu0 %v3546
        %4265 = vmatpush1.bf16.msra.mxu0 %v3545
        %4266 = vmatprep.subr.bf16.mxu0 %v3570
        %4267 = vmatpush1.bf16.msra.mxu0 %v3569
        %4268 = vmatprep.subr.bf16.mxu0 %v3594
        %4269 = vmatpush1.bf16.msra.mxu0 %v3593
        %4270 = vmatprep.subr.bf16.mxu0 %v3618
        %4271 = vmatpush1.bf16.msra.mxu0 %v3617
        %4272 = vmatprep.subr.bf16.mxu0 %v3642
        %4273 = vmatpush1.bf16.msra.mxu0 %v3641
        %4274 = vmatprep.subr.bf16.mxu0 %v3666
        %4275 = vmatpush1.bf16.msra.mxu0 %v3665
        %4276 = vmatprep.subr.bf16.mxu0 %v3690
        %4277 = vmatpush1.bf16.msra.mxu0 %v3689
        %4278 = vmatprep.subr.bf16.mxu0 0
        %4279 = vmatpush1.bf16.msra.mxu0 0
        %4280 = vmatprep.subr.bf16.mxu0 0
        %4281 = vmatpush1.bf16.msra.mxu0 0
        %4282 = vmatprep.subr.bf16.mxu0 0
        %4283 = vmatpush1.bf16.msra.mxu0 0
        %4284 = vmatprep.subr.bf16.mxu0 0
        %4285 = vmatpush1.bf16.msra.mxu0 0
        %4286 = vmatprep.subr.bf16.mxu0 0
        %4287 = vmatpush1.bf16.msra.mxu0 0
        %4288 = vmatprep.subr.bf16.mxu0 0
        %4289 = vmatpush1.bf16.msra.mxu0 0
        %4290 = vmatprep.subr.bf16.mxu0 0
        %4291 = vmatpush1.bf16.msra.mxu0 0
        %4292 = vmatprep.subr.bf16.mxu0 0
        %4293 = vmatpush1.bf16.msra.mxu0 0
        %4294 = vmatprep.mubr.bf16.mxu0 0
        %4295 = vmatmul.mubr.bf16.gmra.mrb[0].mxu0 %v766
        %v4296 = vpop.f32.mrb[0].mxu0
        %v4297 = vadd.f32 %v3947, %v4296
        %v4298 = vpop.f32.mrb[0].mxu0
        %v4299 = vadd.f32 %v3951, %v4298
        %v4300 = vpop.f32.mrb[0].mxu0
        %v4301 = vpop.f32.mrb[0].mxu0
        %4302 = vdwg.mxu0
        %4303 = vmatprep.subr.bf16.mxu0 %v3524
        %4304 = vmatpush1.bf16.msra.mxu0 %v3523
        %4305 = vmatprep.subr.bf16.mxu0 %v3548
        %4306 = vmatpush1.bf16.msra.mxu0 %v3547
        %4307 = vmatprep.subr.bf16.mxu0 %v3572
        %4308 = vmatpush1.bf16.msra.mxu0 %v3571
        %4309 = vmatprep.subr.bf16.mxu0 %v3596
        %4310 = vmatpush1.bf16.msra.mxu0 %v3595
        %4311 = vmatprep.subr.bf16.mxu0 %v3620
        %4312 = vmatpush1.bf16.msra.mxu0 %v3619
        %4313 = vmatprep.subr.bf16.mxu0 %v3644
        %4314 = vmatpush1.bf16.msra.mxu0 %v3643
        %4315 = vmatprep.subr.bf16.mxu0 %v3668
        %4316 = vmatpush1.bf16.msra.mxu0 %v3667
        %4317 = vmatprep.subr.bf16.mxu0 %v3692
        %4318 = vmatpush1.bf16.msra.mxu0 %v3691
        %4319 = vmatprep.subr.bf16.mxu0 0
        %4320 = vmatpush1.bf16.msra.mxu0 0
        %4321 = vmatprep.subr.bf16.mxu0 0
        %4322 = vmatpush1.bf16.msra.mxu0 0
        %4323 = vmatprep.subr.bf16.mxu0 0
        %4324 = vmatpush1.bf16.msra.mxu0 0
        %4325 = vmatprep.subr.bf16.mxu0 0
        %4326 = vmatpush1.bf16.msra.mxu0 0
        %4327 = vmatprep.subr.bf16.mxu0 0
        %4328 = vmatpush1.bf16.msra.mxu0 0
        %4329 = vmatprep.subr.bf16.mxu0 0
        %4330 = vmatpush1.bf16.msra.mxu0 0
        %4331 = vmatprep.subr.bf16.mxu0 0
        %4332 = vmatpush1.bf16.msra.mxu0 0
        %4333 = vmatprep.subr.bf16.mxu0 0
        %4334 = vmatpush1.bf16.msra.mxu0 0
        %4335 = vmatprep.mubr.bf16.mxu0 0
        %4336 = vmatmul.mubr.bf16.gmra.mrb[0].mxu0 %v766
        %v4337 = vpop.f32.mrb[0].mxu0
        %v4338 = vadd.f32 %v3955, %v4337
        %v4339 = vpop.f32.mrb[0].mxu0
        %v4340 = vadd.f32 %v3959, %v4339
        %v4341 = vpop.f32.mrb[0].mxu0
        %v4342 = vpop.f32.mrb[0].mxu0
        %4343 = vdwg.mxu0
        %4344 = vmatprep.subr.bf16.mxu0 %v3526
        %4345 = vmatpush1.bf16.msra.mxu0 %v3525
        %4346 = vmatprep.subr.bf16.mxu0 %v3550
        %4347 = vmatpush1.bf16.msra.mxu0 %v3549
        %4348 = vmatprep.subr.bf16.mxu0 %v3574
        %4349 = vmatpush1.bf16.msra.mxu0 %v3573
        %4350 = vmatprep.subr.bf16.mxu0 %v3598
        %4351 = vmatpush1.bf16.msra.mxu0 %v3597
        %4352 = vmatprep.subr.bf16.mxu0 %v3622
        %4353 = vmatpush1.bf16.msra.mxu0 %v3621
        %4354 = vmatprep.subr.bf16.mxu0 %v3646
        %4355 = vmatpush1.bf16.msra.mxu0 %v3645
        %4356 = vmatprep.subr.bf16.mxu0 %v3670
        %4357 = vmatpush1.bf16.msra.mxu0 %v3669
        %4358 = vmatprep.subr.bf16.mxu0 %v3694
        %4359 = vmatpush1.bf16.msra.mxu0 %v3693
        %4360 = vmatprep.subr.bf16.mxu0 0
        %4361 = vmatpush1.bf16.msra.mxu0 0
        %4362 = vmatprep.subr.bf16.mxu0 0
        %4363 = vmatpush1.bf16.msra.mxu0 0
        %4364 = vmatprep.subr.bf16.mxu0 0
        %4365 = vmatpush1.bf16.msra.mxu0 0
        %4366 = vmatprep.subr.bf16.mxu0 0
        %4367 = vmatpush1.bf16.msra.mxu0 0
        %4368 = vmatprep.subr.bf16.mxu0 0
        %4369 = vmatpush1.bf16.msra.mxu0 0
        %4370 = vmatprep.subr.bf16.mxu0 0
        %4371 = vmatpush1.bf16.msra.mxu0 0
        %4372 = vmatprep.subr.bf16.mxu0 0
        %4373 = vmatpush1.bf16.msra.mxu0 0
        %4374 = vmatprep.subr.bf16.mxu0 0
        %4375 = vmatpush1.bf16.msra.mxu0 0
        %4376 = vmatprep.mubr.bf16.mxu0 0
        %4377 = vmatmul.mubr.bf16.gmra.mrb[0].mxu0 %v766
        %v4378 = vpop.f32.mrb[0].mxu0
        %v4379 = vadd.f32 %v3963, %v4378
        %v4380 = vpop.f32.mrb[0].mxu0
        %v4381 = vadd.f32 %v3967, %v4380
        %v4382 = vpop.f32.mrb[0].mxu0
        %v4383 = vpop.f32.mrb[0].mxu0
        %4384 = vdwg.mxu0
        %4385 = vmatprep.subr.bf16.mxu0 %v3528
        %4386 = vmatpush1.bf16.msra.mxu0 %v3527
        %4387 = vmatprep.subr.bf16.mxu0 %v3552
        %4388 = vmatpush1.bf16.msra.mxu0 %v3551
        %4389 = vmatprep.subr.bf16.mxu0 %v3576
        %4390 = vmatpush1.bf16.msra.mxu0 %v3575
        %4391 = vmatprep.subr.bf16.mxu0 %v3600
        %4392 = vmatpush1.bf16.msra.mxu0 %v3599
        %4393 = vmatprep.subr.bf16.mxu0 %v3624
        %4394 = vmatpush1.bf16.msra.mxu0 %v3623
        %4395 = vmatprep.subr.bf16.mxu0 %v3648
        %4396 = vmatpush1.bf16.msra.mxu0 %v3647
        %4397 = vmatprep.subr.bf16.mxu0 %v3672
        %4398 = vmatpush1.bf16.msra.mxu0 %v3671
        %4399 = vmatprep.subr.bf16.mxu0 %v3696
        %4400 = vmatpush1.bf16.msra.mxu0 %v3695
        %4401 = vmatprep.subr.bf16.mxu0 0
        %4402 = vmatpush1.bf16.msra.mxu0 0
        %4403 = vmatprep.subr.bf16.mxu0 0
        %4404 = vmatpush1.bf16.msra.mxu0 0
        %4405 = vmatprep.subr.bf16.mxu0 0
        %4406 = vmatpush1.bf16.msra.mxu0 0
        %4407 = vmatprep.subr.bf16.mxu0 0
        %4408 = vmatpush1.bf16.msra.mxu0 0
        %4409 = vmatprep.subr.bf16.mxu0 0
        %4410 = vmatpush1.bf16.msra.mxu0 0
        %4411 = vmatprep.subr.bf16.mxu0 0
        %4412 = vmatpush1.bf16.msra.mxu0 0
        %4413 = vmatprep.subr.bf16.mxu0 0
        %4414 = vmatpush1.bf16.msra.mxu0 0
        %4415 = vmatprep.subr.bf16.mxu0 0
        %4416 = vmatpush1.bf16.msra.mxu0 0
        %4417 = vmatprep.mubr.bf16.mxu0 0
        %4418 = vmatmul.mubr.bf16.gmra.mrb[0].mxu0 %v766
        %v4419 = vpop.f32.mrb[0].mxu0
        %v4420 = vadd.f32 %v3971, %v4419
        %v4421 = vpop.f32.mrb[0].mxu0
        %v4422 = vadd.f32 %v3975, %v4421
        %v4423 = vpop.f32.mrb[0].mxu0
        %v4424 = vpop.f32.mrb[0].mxu0
        %4425 = vdwg.mxu0
        %4426 = vmatprep.subr.bf16.mxu0 %v3530
        %4427 = vmatpush1.bf16.msra.mxu0 %v3529
        %4428 = vmatprep.subr.bf16.mxu0 %v3554
        %4429 = vmatpush1.bf16.msra.mxu0 %v3553
        %4430 = vmatprep.subr.bf16.mxu0 %v3578
        %4431 = vmatpush1.bf16.msra.mxu0 %v3577
        %4432 = vmatprep.subr.bf16.mxu0 %v3602
        %4433 = vmatpush1.bf16.msra.mxu0 %v3601
        %4434 = vmatprep.subr.bf16.mxu0 %v3626
        %4435 = vmatpush1.bf16.msra.mxu0 %v3625
        %4436 = vmatprep.subr.bf16.mxu0 %v3650
        %4437 = vmatpush1.bf16.msra.mxu0 %v3649
        %4438 = vmatprep.subr.bf16.mxu0 %v3674
        %4439 = vmatpush1.bf16.msra.mxu0 %v3673
        %4440 = vmatprep.subr.bf16.mxu0 %v3698
        %4441 = vmatpush1.bf16.msra.mxu0 %v3697
        %4442 = vmatprep.subr.bf16.mxu0 0
        %4443 = vmatpush1.bf16.msra.mxu0 0
        %4444 = vmatprep.subr.bf16.mxu0 0
        %4445 = vmatpush1.bf16.msra.mxu0 0
        %4446 = vmatprep.subr.bf16.mxu0 0
        %4447 = vmatpush1.bf16.msra.mxu0 0
        %4448 = vmatprep.subr.bf16.mxu0 0
        %4449 = vmatpush1.bf16.msra.mxu0 0
        %4450 = vmatprep.subr.bf16.mxu0 0
        %4451 = vmatpush1.bf16.msra.mxu0 0
        %4452 = vmatprep.subr.bf16.mxu0 0
        %4453 = vmatpush1.bf16.msra.mxu0 0
        %4454 = vmatprep.subr.bf16.mxu0 0
        %4455 = vmatpush1.bf16.msra.mxu0 0
        %4456 = vmatprep.subr.bf16.mxu0 0
        %4457 = vmatpush1.bf16.msra.mxu0 0
        %4458 = vmatprep.mubr.bf16.mxu0 0
        %4459 = vmatmul.mubr.bf16.gmra.mrb[0].mxu0 %v766
        %v4460 = vpop.f32.mrb[0].mxu0
        %v4461 = vadd.f32 %v3979, %v4460
        %v4462 = vpop.f32.mrb[0].mxu0
        %v4463 = vadd.f32 %v3983, %v4462
        %v4464 = vpop.f32.mrb[0].mxu0
        %v4465 = vpop.f32.mrb[0].mxu0
        %4466 = vdwg.mxu0
        %4467 = vmatprep.subr.bf16.mxu0 %v3532
        %4468 = vmatpush1.bf16.msra.mxu0 %v3531
        %4469 = vmatprep.subr.bf16.mxu0 %v3556
        %4470 = vmatpush1.bf16.msra.mxu0 %v3555
        %4471 = vmatprep.subr.bf16.mxu0 %v3580
        %4472 = vmatpush1.bf16.msra.mxu0 %v3579
        %4473 = vmatprep.subr.bf16.mxu0 %v3604
        %4474 = vmatpush1.bf16.msra.mxu0 %v3603
        %4475 = vmatprep.subr.bf16.mxu0 %v3628
        %4476 = vmatpush1.bf16.msra.mxu0 %v3627
        %4477 = vmatprep.subr.bf16.mxu0 %v3652
        %4478 = vmatpush1.bf16.msra.mxu0 %v3651
        %4479 = vmatprep.subr.bf16.mxu0 %v3676
        %4480 = vmatpush1.bf16.msra.mxu0 %v3675
        %4481 = vmatprep.subr.bf16.mxu0 %v3700
        %4482 = vmatpush1.bf16.msra.mxu0 %v3699
        %4483 = vmatprep.subr.bf16.mxu0 0
        %4484 = vmatpush1.bf16.msra.mxu0 0
        %4485 = vmatprep.subr.bf16.mxu0 0
        %4486 = vmatpush1.bf16.msra.mxu0 0
        %4487 = vmatprep.subr.bf16.mxu0 0
        %4488 = vmatpush1.bf16.msra.mxu0 0
        %4489 = vmatprep.subr.bf16.mxu0 0
        %4490 = vmatpush1.bf16.msra.mxu0 0
        %4491 = vmatprep.subr.bf16.mxu0 0
        %4492 = vmatpush1.bf16.msra.mxu0 0
        %4493 = vmatprep.subr.bf16.mxu0 0
        %4494 = vmatpush1.bf16.msra.mxu0 0
        %4495 = vmatprep.subr.bf16.mxu0 0
        %4496 = vmatpush1.bf16.msra.mxu0 0
        %4497 = vmatprep.subr.bf16.mxu0 0
        %4498 = vmatpush1.bf16.msra.mxu0 0
        %4499 = vmatprep.mubr.bf16.mxu0 0
        %4500 = vmatmul.mubr.bf16.gmra.mrb[0].mxu0 %v766
        %v4501 = vpop.f32.mrb[0].mxu0
        %v4502 = vadd.f32 %v3987, %v4501
        %v4503 = vpop.f32.mrb[0].mxu0
        %v4504 = vadd.f32 %v3991, %v4503
        %v4505 = vpop.f32.mrb[0].mxu0
        %v4506 = vpop.f32.mrb[0].mxu0
        %4507 = vdwg.mxu0
        %v4508 = vtanh.pop %v4051
        %v4509 = vtanh.pop %v4053
        %v4510 = vtanh.pop %v4092
        %v4511 = vtanh.pop %v4094
        %v4512 = vtanh.pop %v4133
        %v4513 = vtanh.pop %v4135
        %v4514 = vtanh.pop %v4174
        %v4515 = vtanh.pop %v4176
        %v4516 = vtanh.pop %v4215
        %v4517 = vtanh.pop %v4217
        %v4518 = vtanh.pop %v4256
        %v4519 = vtanh.pop %v4258
        %v4520 = vtanh.pop %v4297
        %v4521 = vtanh.pop %v4299
        %v4522 = vtanh.pop %v4338
        %v4523 = vtanh.pop %v4340
        %v4524 = vtanh.pop %v4379
        %v4525 = vtanh.pop %v4381
        %v4526 = vtanh.pop %v4420
        %v4527 = vtanh.pop %v4422
        %v4528 = vtanh.pop %v4461
        %v4529 = vtanh.pop %v4463
        %v4530 = vtanh.pop %v4502
        %v4531 = vtanh.pop %v4504
        %v4556 = vcombine.low %v4508, %v4509
        %v4557 = vcombine.low %v4510, %v4511
        %v4558 = vcombine.low %v4512, %v4513
        %v4559 = vcombine.low %v4514, %v4515
        %v4561 = vunpack.c.l.s4 1966171168
        %v4562 = vunpack.c.0.s8 %v4561
        %v4563 = vlaneseq
        %v4564 = vshrl.u32 %v4563, 7
        %v4565 = vsub.s32 %v4562, %v4564
        %v4566 = vrot.slane %v4556, %v4565
        %v4568 = vunpack.c.l.s4 1966171168
        %v4569 = vunpack.c.0.s8 %v4568
        %v4570 = vlaneseq
        %v4571 = vshrl.u32 %v4570, 7
        %v4572 = vsub.s32 %v4569, %v4571
        %v4573 = vrot.slane %v4557, %v4572
        %v4575 = vunpack.c.l.s4 1966171168
        %v4576 = vunpack.c.0.s8 %v4575
        %v4577 = vlaneseq
        %v4578 = vshrl.u32 %v4577, 7
        %v4579 = vsub.s32 %v4576, %v4578
        %v4580 = vrot.slane %v4558, %v4579
        %v4582 = vunpack.c.l.s4 1966171168
        %v4583 = vunpack.c.0.s8 %v4582
        %v4584 = vlaneseq
        %v4585 = vshrl.u32 %v4584, 7
        %v4586 = vsub.s32 %v4583, %v4585
        %v4587 = vrot.slane %v4559, %v4586
        %v4588 = vcombine.low %v4566, %v4573
        %v4589 = vcombine.low %v4580, %v4587
        %v4591 = vunpack.c.l.s4 1966171168
        %v4592 = vunpack.c.0.s8 %v4591
        %v4593 = vlaneseq
        %v4594 = vshrl.u32 %v4593, 7
        %v4595 = vsub.s32 %v4592, %v4594
        %v4596 = vrot.slane %v4588, %v4595
        %v4598 = vunpack.c.l.s4 1966171168
        %v4599 = vunpack.c.0.s8 %v4598
        %v4600 = vlaneseq
        %v4601 = vshrl.u32 %v4600, 7
        %v4602 = vsub.s32 %v4599, %v4601
        %v4603 = vrot.slane %v4589, %v4602
        %v4604 = vcombine.low %v4596, %v4603
        %v4605 = vcombine.low %v4516, %v4517
        %v4606 = vcombine.low %v4518, %v4519
        %v4607 = vcombine.low %v4520, %v4521
        %v4608 = vcombine.low %v4522, %v4523
        %v4610 = vunpack.c.l.s4 1966171168
        %v4611 = vunpack.c.0.s8 %v4610
        %v4612 = vlaneseq
        %v4613 = vshrl.u32 %v4612, 7
        %v4614 = vsub.s32 %v4611, %v4613
        %v4615 = vrot.slane %v4605, %v4614
        %v4617 = vunpack.c.l.s4 1966171168
        %v4618 = vunpack.c.0.s8 %v4617
        %v4619 = vlaneseq
        %v4620 = vshrl.u32 %v4619, 7
        %v4621 = vsub.s32 %v4618, %v4620
        %v4622 = vrot.slane %v4606, %v4621
        %v4624 = vunpack.c.l.s4 1966171168
        %v4625 = vunpack.c.0.s8 %v4624
        %v4626 = vlaneseq
        %v4627 = vshrl.u32 %v4626, 7
        %v4628 = vsub.s32 %v4625, %v4627
        %v4629 = vrot.slane %v4607, %v4628
        %v4631 = vunpack.c.l.s4 1966171168
        %v4632 = vunpack.c.0.s8 %v4631
        %v4633 = vlaneseq
        %v4634 = vshrl.u32 %v4633, 7
        %v4635 = vsub.s32 %v4632, %v4634
        %v4636 = vrot.slane %v4608, %v4635
        %v4637 = vcombine.low %v4615, %v4622
        %v4638 = vcombine.low %v4629, %v4636
        %v4640 = vunpack.c.l.s4 1966171168
        %v4641 = vunpack.c.0.s8 %v4640
        %v4642 = vlaneseq
        %v4643 = vshrl.u32 %v4642, 7
        %v4644 = vsub.s32 %v4641, %v4643
        %v4645 = vrot.slane %v4637, %v4644
        %v4647 = vunpack.c.l.s4 1966171168
        %v4648 = vunpack.c.0.s8 %v4647
        %v4649 = vlaneseq
        %v4650 = vshrl.u32 %v4649, 7
        %v4651 = vsub.s32 %v4648, %v4650
        %v4652 = vrot.slane %v4638, %v4651
        %v4653 = vcombine.low %v4645, %v4652
        %v4654 = vcombine.low %v4524, %v4525
        %v4655 = vcombine.low %v4526, %v4527
        %v4656 = vcombine.low %v4528, %v4529
        %v4657 = vcombine.low %v4530, %v4531
        %v4659 = vunpack.c.l.s4 1966171168
        %v4660 = vunpack.c.0.s8 %v4659
        %v4661 = vlaneseq
        %v4662 = vshrl.u32 %v4661, 7
        %v4663 = vsub.s32 %v4660, %v4662
        %v4664 = vrot.slane %v4654, %v4663
        %v4666 = vunpack.c.l.s4 1966171168
        %v4667 = vunpack.c.0.s8 %v4666
        %v4668 = vlaneseq
        %v4669 = vshrl.u32 %v4668, 7
        %v4670 = vsub.s32 %v4667, %v4669
        %v4671 = vrot.slane %v4655, %v4670
        %v4673 = vunpack.c.l.s4 1966171168
        %v4674 = vunpack.c.0.s8 %v4673
        %v4675 = vlaneseq
        %v4676 = vshrl.u32 %v4675, 7
        %v4677 = vsub.s32 %v4674, %v4676
        %v4678 = vrot.slane %v4656, %v4677
        %v4680 = vunpack.c.l.s4 1966171168
        %v4681 = vunpack.c.0.s8 %v4680
        %v4682 = vlaneseq
        %v4683 = vshrl.u32 %v4682, 7
        %v4684 = vsub.s32 %v4681, %v4683
        %v4685 = vrot.slane %v4657, %v4684
        %v4686 = vcombine.low %v4664, %v4671
        %v4687 = vcombine.low %v4678, %v4685
        %v4689 = vunpack.c.l.s4 1966171168
        %v4690 = vunpack.c.0.s8 %v4689
        %v4691 = vlaneseq
        %v4692 = vshrl.u32 %v4691, 7
        %v4693 = vsub.s32 %v4690, %v4692
        %v4694 = vrot.slane %v4686, %v4693
        %v4696 = vunpack.c.l.s4 1966171168
        %v4697 = vunpack.c.0.s8 %v4696
        %v4698 = vlaneseq
        %v4699 = vshrl.u32 %v4698, 7
        %v4700 = vsub.s32 %v4697, %v4699
        %v4701 = vrot.slane %v4687, %v4700
        %v4702 = vcombine.low %v4694, %v4701
        %4706 = vst [vmem:[%s415 + $0x18] sm:$0xff] %v4604
        %4707 = vst [vmem:[%s415 + $0x20] sm:$0xff] %v4653
        %4708 = vst [vmem:[%s415 + $0x28] sm:$0xff] %v4702
        %s4709 = smul.u32 48, %s26
        %p4710 = scmp.lt.s32.totalorder %s4709, 95
        %s4711 = scalar_select %p4710, %s4709, 95
        %s4712 = scalar_lea.vmem %s8, %s4711
        // Predicated region
        $region77: #{trigger_hyper_forward.1} parent=47 // pred_check
          %p4713 = pneg %p208
        $region78: #{trigger_hyper_forward.1} parent=47 // pred_check_branch
          %4715 = sbr.rel (%p4713) target = $region80
        $region79: #{trigger_hyper_forward.1} parent=47 // pred_region
          %s4716 = smul.u32 48, %s26
        $region80: #{trigger_hyper_forward.1} parent=47 // pred_fallthru
          _
      $region48: #{trigger_hyper_forward.1} parent=5 // pred_fallthru
        _
      %p4717 = scmp.le.s32.totalorder 2, %s21
      // Predicated region
      $region81: #{trigger_hyper_forward.1} parent=5 // pred_check
        %p4718 = pneg %p4717
      $region82: #{trigger_hyper_forward.1} parent=5 // pred_check_branch
        %4720 = sbr.rel (%p4718) target = $region84
      $region83: #{trigger_hyper_forward.1} parent=5 // pred_region
        %s4721 = ssub.s32 %s21, 2
        // Predicated region
        $region85: #{trigger_hyper_forward.1} parent=83 // pred_check
          %p4722 = pneg %p214
        $region86: #{trigger_hyper_forward.1} parent=83 // pred_check_branch
          %4724 = sbr.rel (%p4722) target = $region88
        $region87: #{trigger_hyper_forward.1} parent=83 // pred_region
          %s4725 = smul.u32 48, %s27
          %p4726 = scmp.lt.s32.totalorder %s4725, 95
          %s4727 = scalar_select %p4726, %s4725, 95
          %s4728 = scalar_lea.vmem %s8, %s4727
        $region88: #{trigger_hyper_forward.1} parent=83 // pred_fallthru
          _
      $region84: #{trigger_hyper_forward.1} parent=5 // pred_fallthru
        _
    $region6: #{trigger_hyper_forward.1} parent=1 // loop_footer
      %s25 = sadd.s32 1, %s21
    $region7: #{trigger_hyper_forward.1} parent=1 // loop_footer_branch
      %20 = sbr.rel target = $region3
    $region8: #{trigger_hyper_forward.1} parent=1 // loop_exit
      _
    %4729 = vsyncpa [#allocation5], 1
    %s4730 = scalar_lea.sflag [#allocation5], 1
    %4731 = vsyncpa %s4730, 1
    %4732 = vsyncpa [#allocation7], 1
    %4733 = vsyncpa [#allocation10], 1
    %4734 = vsyncpa [#allocation13], 1
    %s4735 = scalar_lea.sflag [#allocation13], 1
    %4736 = vsyncpa %s4735, 1

</llo_original>
